<compile_context>
chip_gen: v7x
topology: tpu7x:2x2x1
jax: 0.10.0
libtpu: 0.0.40
codegen_flags: <defaults>
</compile_context>

<pallas_src>
import math

import jax
import jax.numpy as jnp
import numpy as np
from jax import lax
from jax.experimental import pallas as pl
from jax.experimental.pallas import tpu as pltpu

# Small, module-consistent shapes
BATCH = 2
SEQ = 8
EMB = 32
HEADS = 4
DH = EMB // HEADS
FFN = 64
EPS = 1e-5


def encoder_layer_kernel(
    xh_ref,            # (N, S, DH)   head-major input, n = b*H + h holds x[b, :, h*DH:(h+1)*DH]
    xf_ref,            # (B*S, E)     flat input (residual / FFN path)
    wqkv_ref,          # (N, DH, 3*DH) fused per-(batch,head) Q|K|V weights
    bqkv_ref,          # (N, 1, 3*DH)
    wo_ref,            # (N, DH, E)   per-head row block of W_o^T
    bo_ref,            # (1, E)
    g1_ref, be1_ref,   # (1, E)       LayerNorm 1
    w1_ref, b1_ref,    # (E, FFN), (1, FFN)
    w2_ref, b2_ref,    # (FFN, E), (1, E)
    g2_ref, be2_ref,   # (1, E)       LayerNorm 2
    o_ref,             # (B*S, E)
):
    f32 = jnp.float32
    N, S, Dh = xh_ref.shape
    BS, E = xf_ref.shape
    B = BS // S
    H = N // B

    xh = xh_ref[...].astype(f32)
    x = xf_ref[...].astype(f32)

    # --- fused Q/K/V projection: one batched MXU einsum over all (batch, head) pairs ---
    qkv = jnp.einsum("nsd,nde->nse", xh, wqkv_ref[...],
                     preferred_element_type=f32) + bqkv_ref[...]
    q = qkv[:, :, 0:Dh]
    k = qkv[:, :, Dh:2 * Dh]
    v = qkv[:, :, 2 * Dh:3 * Dh]

    # --- scaled dot-product attention, all (batch, head) pairs in one slab ---
    s = jnp.einsum("nqd,nkd->nqk", q, k, preferred_element_type=f32)
    s = s * (1.0 / math.sqrt(Dh))
    m = jnp.max(s, axis=-1, keepdims=True)
    p = jnp.exp(s - m)
    denom = jnp.sum(p, axis=-1, keepdims=True)
    r = pl.reciprocal(denom, approx=True)      # EUP seed (frees VALU slots)
    r = r * (2.0 - denom * r)                  # one Newton step -> f32-accurate reciprocal
    ctx = jnp.einsum("nqk,nkd->nqd", p * r, v, preferred_element_type=f32)   # (N, S, DH)

    # --- output projection: per-head (DH, E) blocks of W_o^T, summed over heads ---
    attn_parts = jnp.einsum("nsd,nde->nse", ctx, wo_ref[...],
                            preferred_element_type=f32)                      # (N, S, E)
    per_batch = []
    for b in range(B):
        acc = attn_parts[b * H]
        for h in range(1, H):
            acc = acc + attn_parts[b * H + h]
        per_batch.append(acc)
    attn = jnp.concatenate(per_batch, axis=0) + bo_ref[...]                  # (B*S, E)

    # dropout1: identity (eval mode)
    # --- Add & LayerNorm 1 (EUP rsqrt + Newton polish instead of VALU divide) ---
    y = attn + x
    mu = jnp.mean(y, axis=-1, keepdims=True)
    var = jnp.mean((y - mu) ** 2, axis=-1, keepdims=True) + EPS
    inv = lax.rsqrt(var)
    inv = inv * (1.5 - 0.5 * var * inv * inv)
    y = g1_ref[...] * ((y - mu) * inv) + be1_ref[...]

    # --- FeedForward: batch*seq folded into one (B*S, E) matmul M dimension ---
    h1 = jnp.dot(y, w1_ref[...], preferred_element_type=f32) + b1_ref[...]
    h1 = jnp.maximum(h1, 0.0)
    f = jnp.dot(h1, w2_ref[...], preferred_element_type=f32) + b2_ref[...]

    # dropout2: identity (eval mode)
    # --- Add & LayerNorm 2 ---
    z = f + y
    mu = jnp.mean(z, axis=-1, keepdims=True)
    var = jnp.mean((z - mu) ** 2, axis=-1, keepdims=True) + EPS
    inv = lax.rsqrt(var)
    inv = inv * (1.5 - 0.5 * var * inv * inv)
    z = g2_ref[...] * ((z - mu) * inv) + be2_ref[...]

    o_ref[...] = z.astype(o_ref.dtype)


def encoder_layer(x, p):
    """x: (B, S, E) float32. p: raw (PyTorch-convention) params from init_params."""
    B, S, E = x.shape
    H = p["Wq"].shape[0]
    Dh = E // H
    N = B * H

    # --- wrapper-side layout plumbing (plain XLA, outside the kernel) ---
    x_flat = x.reshape(B * S, E)
    x_heads = x.reshape(B, S, H, Dh).transpose(0, 2, 1, 3).reshape(N, S, Dh)

    # Fused per-head Q|K|V weight (PyTorch Linear: y = x @ W.T + b)
    w_qkv = jnp.concatenate(
        [jnp.swapaxes(p["Wq"], 1, 2),
         jnp.swapaxes(p["Wk"], 1, 2),
         jnp.swapaxes(p["Wv"], 1, 2)], axis=-1)                 # (H, Dh, 3*Dh)
    b_qkv = jnp.concatenate([p["bq"], p["bk"], p["bv"]], axis=-1)[:, None, :]  # (H, 1, 3*Dh)
    w_o = jnp.transpose(p["Wo"]).reshape(H, Dh, E)              # row block h of W_o^T

    # Tile per-head weights over batch so the einsum batch dim is N = B*H
    w_qkv = jnp.tile(w_qkv, (B, 1, 1))
    b_qkv = jnp.tile(b_qkv, (B, 1, 1))
    w_o = jnp.tile(w_o, (B, 1, 1))

    args = (
        x_heads, x_flat,
        w_qkv, b_qkv, w_o, p["bo"].reshape(1, E),
        p["g1"].reshape(1, E), p["be1"].reshape(1, E),
        jnp.transpose(p["W1"]), p["b1"].reshape(1, -1),
        jnp.transpose(p["W2"]), p["b2"].reshape(1, E),
        p["g2"].reshape(1, E), p["be2"].reshape(1, E),
    )

    vmem = pl.BlockSpec(memory_space=pltpu.MemorySpace.VMEM)
    out_flat = pl.pallas_call(
        encoder_layer_kernel,
        out_shape=jax.ShapeDtypeStruct((B * S, E), x.dtype),
        in_specs=[vmem] * len(args),
        out_specs=pl.BlockSpec(memory_space=pltpu.MemorySpace.VMEM),
    )(*args)
    return out_flat.reshape(B, S, E)


def init_params(key):
    """Deterministic params in raw PyTorch conventions (W is (out, in), y = x @ W.T + b)."""
    ks = jax.random.split(key, 6)

    def lin(k, out_dim, in_dim, prefix=()):
        bound = 1.0 / math.sqrt(in_dim)
        kw, kb = jax.random.split(k)
        W = jax.random.uniform(kw, prefix + (out_dim, in_dim), jnp.float32, -bound, bound)
        b = jax.random.uniform(kb, prefix + (out_dim,), jnp.float32, -bound, bound)
        return W, b

    Wq, bq = lin(ks[0], DH, DH, (HEADS,))
    Wk, bk = lin(ks[1], DH, DH, (HEADS,))
    Wv, bv = lin(ks[2], DH, DH, (HEADS,))
    Wo, bo = lin(ks[3], EMB, EMB)
    W1, b1 = lin(ks[4], FFN, EMB)
    W2, b2 = lin(ks[5], EMB, FFN)

    return dict(
        Wq=Wq, bq=bq, Wk=Wk, bk=bk, Wv=Wv, bv=bv,
        Wo=Wo, bo=bo, W1=W1, b1=b1, W2=W2, b2=b2,
        g1=jnp.ones((EMB,), jnp.float32), be1=jnp.zeros((EMB,), jnp.float32),
        g2=jnp.ones((EMB,), jnp.float32), be2=jnp.zeros((EMB,), jnp.float32),
    )


def reference(x, p):
    """Pure-JAX reference replicating the PyTorch EncoderLayer (eval mode)."""
    B, S, E = x.shape

    def ln(t, g, b):
        mu = t.mean(-1, keepdims=True)
        var = ((t - mu) ** 2).mean(-1, keepdims=True)
        return g * (t - mu) / jnp.sqrt(var + EPS) + b

    hq, hk, hv = [], [], []
    for h in range(HEADS):
        xs = x[..., h * DH:(h + 1) * DH]
        hq.append(xs @ p["Wq"][h].T + p["bq"][h])
        hk.append(xs @ p["Wk"][h].T + p["bk"][h])
        hv.append(xs @ p["Wv"][h].T + p["bv"][h])
    q = jnp.concatenate(hq, -1).reshape(B, S, HEADS, DH).transpose(0, 2, 1, 3)
    k = jnp.concatenate(hk, -1).reshape(B, S, HEADS, DH).transpose(0, 2, 1, 3)
    v = jnp.concatenate(hv, -1).reshape(B, S, HEADS, DH).transpose(0, 2, 1, 3)
    s = jnp.einsum("bhqd,bhkd->bhqk", q, k) / math.sqrt(DH)
    a = jax.nn.softmax(s, axis=-1)
    vals = jnp.einsum("bhqk,bhkd->bhqd", a, v).transpose(0, 2, 1, 3).reshape(B, S, E)
    attn = vals @ p["Wo"].T + p["bo"]

    y = ln(attn + x, p["g1"], p["be1"])
    f = jnp.maximum(y @ p["W1"].T + p["b1"], 0.0) @ p["W2"].T + p["b2"]
    return ln(f + y, p["g2"], p["be2"])


if __name__ == "__main__":
    key = jax.random.PRNGKey(0)
    kx, kp = jax.random.split(key)
    x = jax.random.normal(kx, (BATCH, SEQ, EMB), jnp.float32)
    params = init_params(kp)

    run = jax.jit(encoder_layer)
    out = jax.block_until_ready(run(x, params))

    ref = reference(x, params)
    np.testing.assert_allclose(np.asarray(out), np.asarray(ref), atol=1e-3, rtol=1e-3)
    print("KERNEL_OK")
</pallas_src>

<mosaic_0001>
module attributes {stable_mosaic.version = 11 : i64} {
  func.func @encoder_layer_kernel(%arg0: memref<8x8x8xf32, #tpu.memory_space<vmem>>, %arg1: memref<16x32xf32, #tpu.memory_space<vmem>>, %arg2: memref<8x8x24xf32, #tpu.memory_space<vmem>>, %arg3: memref<8x1x24xf32, #tpu.memory_space<vmem>>, %arg4: memref<8x8x32xf32, #tpu.memory_space<vmem>>, %arg5: memref<1x32xf32, #tpu.memory_space<vmem>>, %arg6: memref<1x32xf32, #tpu.memory_space<vmem>>, %arg7: memref<1x32xf32, #tpu.memory_space<vmem>>, %arg8: memref<32x64xf32, #tpu.memory_space<vmem>>, %arg9: memref<1x64xf32, #tpu.memory_space<vmem>>, %arg10: memref<64x32xf32, #tpu.memory_space<vmem>>, %arg11: memref<1x32xf32, #tpu.memory_space<vmem>>, %arg12: memref<1x32xf32, #tpu.memory_space<vmem>>, %arg13: memref<1x32xf32, #tpu.memory_space<vmem>>, %arg14: memref<16x32xf32, #tpu.memory_space<vmem>>) attributes {dimension_semantics = [], scalar_prefetch = 0 : i64, scratch_operands = 0 : i64, tpu.core_type = #tpu.core_type<tc>} {
    %c0 = arith.constant 0 : index
    %c0_0 = arith.constant 0 : index
    %c0_1 = arith.constant 0 : index
    %0 = vector.load %arg0[%c0, %c0_0, %c0_1] : memref<8x8x8xf32, #tpu.memory_space<vmem>>, vector<8x8x8xf32>
    %c0_2 = arith.constant 0 : index
    %c0_3 = arith.constant 0 : index
    %1 = vector.load %arg1[%c0_2, %c0_3] : memref<16x32xf32, #tpu.memory_space<vmem>>, vector<16x32xf32>
    %c0_4 = arith.constant 0 : index
    %c0_5 = arith.constant 0 : index
    %c0_6 = arith.constant 0 : index
    %2 = vector.load %arg2[%c0_4, %c0_5, %c0_6] : memref<8x8x24xf32, #tpu.memory_space<vmem>>, vector<8x8x24xf32>
    "tpu.trace_start"() <{level = 10 : i32, message = "nsd,nde->nse"}> : () -> ()
    %cst = arith.constant dense<0.000000e+00> : vector<8x8x24xf32>
    %3 = tpu.matmul %0, %2, %cst {dimension_numbers = #tpu.dot_dimension_numbers<[2], [1], [1], [2], [0, 0, 0, 1, 1, 2], [0], [0]>} : vector<8x8x8xf32>, vector<8x8x24xf32>, vector<8x8x24xf32> -> vector<8x8x24xf32>
    "tpu.trace_stop"() : () -> ()
    %c0_7 = arith.constant 0 : index
    %c0_8 = arith.constant 0 : index
    %c0_9 = arith.constant 0 : index
    %4 = vector.load %arg3[%c0_7, %c0_8, %c0_9] : memref<8x1x24xf32, #tpu.memory_space<vmem>>, vector<8x1x24xf32>
    %5 = vector.broadcast %4 : vector<8x1x24xf32> to vector<8x8x24xf32>
    %6 = arith.addf %3, %5 : vector<8x8x24xf32>
    %7 = vector.extract_strided_slice %6 {offsets = [0, 0, 0], sizes = [8, 8, 8], strides = [1, 1, 1]} : vector<8x8x24xf32> to vector<8x8x8xf32>
    %8 = vector.extract_strided_slice %6 {offsets = [0, 0, 8], sizes = [8, 8, 8], strides = [1, 1, 1]} : vector<8x8x24xf32> to vector<8x8x8xf32>
    %9 = vector.extract_strided_slice %6 {offsets = [0, 0, 16], sizes = [8, 8, 8], strides = [1, 1, 1]} : vector<8x8x24xf32> to vector<8x8x8xf32>
    "tpu.trace_start"() <{level = 10 : i32, message = "nqd,nkd->nqk"}> : () -> ()
    %cst_10 = arith.constant dense<0.000000e+00> : vector<8x8x8xf32>
    %10 = tpu.matmul %7, %8, %cst_10 {dimension_numbers = #tpu.dot_dimension_numbers<[2], [2], [1], [1], [0, 0, 0, 1, 1, 1], [0], [0]>} : vector<8x8x8xf32>, vector<8x8x8xf32>, vector<8x8x8xf32> -> vector<8x8x8xf32>
    "tpu.trace_stop"() : () -> ()
    %cst_11 = arith.constant 0.353553385 : f32
    %11 = vector.broadcast %cst_11 : f32 to vector<8x8x8xf32>
    %12 = arith.mulf %10, %11 : vector<8x8x8xf32>
    %cst_12 = arith.constant dense<0xFF800000> : vector<8x8xf32>
    %13 = vector.multi_reduction <maximumf>, %12, %cst_12 [2] : vector<8x8x8xf32> to vector<8x8xf32>
    %14 = vector.shape_cast %13 : vector<8x8xf32> to vector<8x8x1xf32>
    %15 = vector.broadcast %14 : vector<8x8x1xf32> to vector<8x8x8xf32>
    %16 = arith.subf %12, %15 : vector<8x8x8xf32>
    %17 = math.exp %16 : vector<8x8x8xf32>
    %cst_13 = arith.constant dense<0.000000e+00> : vector<8x8xf32>
    %18 = vector.multi_reduction <add>, %17, %cst_13 [2] : vector<8x8x8xf32> to vector<8x8xf32>
    %19 = vector.shape_cast %18 : vector<8x8xf32> to vector<8x8x1xf32>
    %20 = tpu.reciprocal %19 {approx = true} : vector<8x8x1xf32> -> vector<8x8x1xf32>
    %21 = arith.mulf %19, %20 : vector<8x8x1xf32>
    %cst_14 = arith.constant 2.000000e+00 : f32
    %22 = vector.broadcast %cst_14 : f32 to vector<8x8x1xf32>
    %23 = arith.subf %22, %21 : vector<8x8x1xf32>
    %24 = arith.mulf %20, %23 : vector<8x8x1xf32>
    %25 = vector.broadcast %24 : vector<8x8x1xf32> to vector<8x8x8xf32>
    %26 = arith.mulf %17, %25 : vector<8x8x8xf32>
    "tpu.trace_start"() <{level = 10 : i32, message = "nqk,nkd->nqd"}> : () -> ()
    %cst_15 = arith.constant dense<0.000000e+00> : vector<8x8x8xf32>
    %27 = tpu.matmul %26, %9, %cst_15 {dimension_numbers = #tpu.dot_dimension_numbers<[2], [1], [1], [2], [0, 0, 0, 1, 1, 2], [0], [0]>} : vector<8x8x8xf32>, vector<8x8x8xf32>, vector<8x8x8xf32> -> vector<8x8x8xf32>
    "tpu.trace_stop"() : () -> ()
    %c0_16 = arith.constant 0 : index
    %c0_17 = arith.constant 0 : index
    %c0_18 = arith.constant 0 : index
    %28 = vector.load %arg4[%c0_16, %c0_17, %c0_18] : memref<8x8x32xf32, #tpu.memory_space<vmem>>, vector<8x8x32xf32>
    "tpu.trace_start"() <{level = 10 : i32, message = "nsd,nde->nse"}> : () -> ()
    %cst_19 = arith.constant dense<0.000000e+00> : vector<8x8x32xf32>
    %29 = tpu.matmul %27, %28, %cst_19 {dimension_numbers = #tpu.dot_dimension_numbers<[2], [1], [1], [2], [0, 0, 0, 1, 1, 2], [0], [0]>} : vector<8x8x8xf32>, vector<8x8x32xf32>, vector<8x8x32xf32> -> vector<8x8x32xf32>
    "tpu.trace_stop"() : () -> ()
    %30 = vector.extract_strided_slice %29 {offsets = [0, 0, 0], sizes = [1, 8, 32], strides = [1, 1, 1]} : vector<8x8x32xf32> to vector<1x8x32xf32>
    %31 = vector.shape_cast %30 : vector<1x8x32xf32> to vector<8x32xf32>
    %32 = vector.extract_strided_slice %29 {offsets = [1, 0, 0], sizes = [1, 8, 32], strides = [1, 1, 1]} : vector<8x8x32xf32> to vector<1x8x32xf32>
    %33 = vector.shape_cast %32 : vector<1x8x32xf32> to vector<8x32xf32>
    %34 = arith.addf %31, %33 : vector<8x32xf32>
    %35 = vector.extract_strided_slice %29 {offsets = [2, 0, 0], sizes = [1, 8, 32], strides = [1, 1, 1]} : vector<8x8x32xf32> to vector<1x8x32xf32>
    %36 = vector.shape_cast %35 : vector<1x8x32xf32> to vector<8x32xf32>
    %37 = arith.addf %34, %36 : vector<8x32xf32>
    %38 = vector.extract_strided_slice %29 {offsets = [3, 0, 0], sizes = [1, 8, 32], strides = [1, 1, 1]} : vector<8x8x32xf32> to vector<1x8x32xf32>
    %39 = vector.shape_cast %38 : vector<1x8x32xf32> to vector<8x32xf32>
    %40 = arith.addf %37, %39 : vector<8x32xf32>
    %41 = vector.extract_strided_slice %29 {offsets = [4, 0, 0], sizes = [1, 8, 32], strides = [1, 1, 1]} : vector<8x8x32xf32> to vector<1x8x32xf32>
    %42 = vector.shape_cast %41 : vector<1x8x32xf32> to vector<8x32xf32>
    %43 = vector.extract_strided_slice %29 {offsets = [5, 0, 0], sizes = [1, 8, 32], strides = [1, 1, 1]} : vector<8x8x32xf32> to vector<1x8x32xf32>
    %44 = vector.shape_cast %43 : vector<1x8x32xf32> to vector<8x32xf32>
    %45 = arith.addf %42, %44 : vector<8x32xf32>
    %46 = vector.extract_strided_slice %29 {offsets = [6, 0, 0], sizes = [1, 8, 32], strides = [1, 1, 1]} : vector<8x8x32xf32> to vector<1x8x32xf32>
    %47 = vector.shape_cast %46 : vector<1x8x32xf32> to vector<8x32xf32>
    %48 = arith.addf %45, %47 : vector<8x32xf32>
    %49 = vector.extract_strided_slice %29 {offsets = [7, 0, 0], sizes = [1, 8, 32], strides = [1, 1, 1]} : vector<8x8x32xf32> to vector<1x8x32xf32>
    %50 = vector.shape_cast %49 : vector<1x8x32xf32> to vector<8x32xf32>
    %51 = arith.addf %48, %50 : vector<8x32xf32>
    %52 = tpu.concatenate %40, %51 in 0 : vector<8x32xf32>, vector<8x32xf32> -> vector<16x32xf32>
    %c0_20 = arith.constant 0 : index
    %c0_21 = arith.constant 0 : index
    %53 = vector.load %arg5[%c0_20, %c0_21] : memref<1x32xf32, #tpu.memory_space<vmem>>, vector<1x32xf32>
    %54 = vector.broadcast %53 : vector<1x32xf32> to vector<16x32xf32>
    %55 = arith.addf %52, %54 : vector<16x32xf32>
    %56 = arith.addf %55, %1 : vector<16x32xf32>
    %cst_22 = arith.constant dense<0.000000e+00> : vector<16xf32>
    %57 = vector.multi_reduction <add>, %56, %cst_22 [1] : vector<16x32xf32> to vector<16xf32>
    %58 = vector.shape_cast %57 : vector<16xf32> to vector<16x1xf32>
    %cst_23 = arith.constant 3.200000e+01 : f32
    %59 = vector.broadcast %cst_23 : f32 to vector<16x1xf32>
    %60 = arith.divf %58, %59 : vector<16x1xf32>
    %61 = vector.broadcast %60 : vector<16x1xf32> to vector<16x32xf32>
    %62 = arith.subf %56, %61 : vector<16x32xf32>
    %63 = arith.mulf %62, %62 : vector<16x32xf32>
    %cst_24 = arith.constant dense<0.000000e+00> : vector<16xf32>
    %64 = vector.multi_reduction <add>, %63, %cst_24 [1] : vector<16x32xf32> to vector<16xf32>
    %65 = vector.shape_cast %64 : vector<16xf32> to vector<16x1xf32>
    %cst_25 = arith.constant 3.200000e+01 : f32
    %66 = vector.broadcast %cst_25 : f32 to vector<16x1xf32>
    %67 = arith.divf %65, %66 : vector<16x1xf32>
    %cst_26 = arith.constant 9.99999974E-6 : f32
    %68 = vector.broadcast %cst_26 : f32 to vector<16x1xf32>
    %69 = arith.addf %67, %68 : vector<16x1xf32>
    %70 = math.rsqrt %69 : vector<16x1xf32>
    %cst_27 = arith.constant 5.000000e-01 : f32
    %71 = vector.broadcast %cst_27 : f32 to vector<16x1xf32>
    %72 = arith.mulf %71, %69 : vector<16x1xf32>
    %73 = arith.mulf %72, %70 : vector<16x1xf32>
    %74 = arith.mulf %73, %70 : vector<16x1xf32>
    %cst_28 = arith.constant 1.500000e+00 : f32
    %75 = vector.broadcast %cst_28 : f32 to vector<16x1xf32>
    %76 = arith.subf %75, %74 : vector<16x1xf32>
    %77 = arith.mulf %70, %76 : vector<16x1xf32>
    %c0_29 = arith.constant 0 : index
    %c0_30 = arith.constant 0 : index
    %78 = vector.load %arg6[%c0_29, %c0_30] : memref<1x32xf32, #tpu.memory_space<vmem>>, vector<1x32xf32>
    %79 = vector.broadcast %60 : vector<16x1xf32> to vector<16x32xf32>
    %80 = arith.subf %56, %79 : vector<16x32xf32>
    %81 = vector.broadcast %77 : vector<16x1xf32> to vector<16x32xf32>
    %82 = arith.mulf %80, %81 : vector<16x32xf32>
    %83 = vector.broadcast %78 : vector<1x32xf32> to vector<16x32xf32>
    %84 = arith.mulf %83, %82 : vector<16x32xf32>
    %c0_31 = arith.constant 0 : index
    %c0_32 = arith.constant 0 : index
    %85 = vector.load %arg7[%c0_31, %c0_32] : memref<1x32xf32, #tpu.memory_space<vmem>>, vector<1x32xf32>
    %86 = vector.broadcast %85 : vector<1x32xf32> to vector<16x32xf32>
    %87 = arith.addf %84, %86 : vector<16x32xf32>
    %c0_33 = arith.constant 0 : index
    %c0_34 = arith.constant 0 : index
    %88 = vector.load %arg8[%c0_33, %c0_34] : memref<32x64xf32, #tpu.memory_space<vmem>>, vector<32x64xf32>
    %cst_35 = arith.constant dense<0.000000e+00> : vector<16x64xf32>
    %89 = tpu.matmul %87, %88, %cst_35 {dimension_numbers = #tpu.dot_dimension_numbers<[1], [0], [0], [1], [0, 0, 1, 1], [], []>} : vector<16x32xf32>, vector<32x64xf32>, vector<16x64xf32> -> vector<16x64xf32>
    %c0_36 = arith.constant 0 : index
    %c0_37 = arith.constant 0 : index
    %90 = vector.load %arg9[%c0_36, %c0_37] : memref<1x64xf32, #tpu.memory_space<vmem>>, vector<1x64xf32>
    %91 = vector.broadcast %90 : vector<1x64xf32> to vector<16x64xf32>
    %92 = arith.addf %89, %91 : vector<16x64xf32>
    %cst_38 = arith.constant 0.000000e+00 : f32
    %93 = vector.broadcast %cst_38 : f32 to vector<16x64xf32>
    %94 = arith.maximumf %92, %93 : vector<16x64xf32>
    %c0_39 = arith.constant 0 : index
    %c0_40 = arith.constant 0 : index
    %95 = vector.load %arg10[%c0_39, %c0_40] : memref<64x32xf32, #tpu.memory_space<vmem>>, vector<64x32xf32>
    %cst_41 = arith.constant dense<0.000000e+00> : vector<16x32xf32>
    %96 = tpu.matmul %94, %95, %cst_41 {dimension_numbers = #tpu.dot_dimension_numbers<[1], [0], [0], [1], [0, 0, 1, 1], [], []>} : vector<16x64xf32>, vector<64x32xf32>, vector<16x32xf32> -> vector<16x32xf32>
    %c0_42 = arith.constant 0 : index
    %c0_43 = arith.constant 0 : index
    %97 = vector.load %arg11[%c0_42, %c0_43] : memref<1x32xf32, #tpu.memory_space<vmem>>, vector<1x32xf32>
    %98 = vector.broadcast %97 : vector<1x32xf32> to vector<16x32xf32>
    %99 = arith.addf %96, %98 : vector<16x32xf32>
    %100 = arith.addf %99, %87 : vector<16x32xf32>
    %cst_44 = arith.constant dense<0.000000e+00> : vector<16xf32>
    %101 = vector.multi_reduction <add>, %100, %cst_44 [1] : vector<16x32xf32> to vector<16xf32>
    %102 = vector.shape_cast %101 : vector<16xf32> to vector<16x1xf32>
    %cst_45 = arith.constant 3.200000e+01 : f32
    %103 = vector.broadcast %cst_45 : f32 to vector<16x1xf32>
    %104 = arith.divf %102, %103 : vector<16x1xf32>
    %105 = vector.broadcast %104 : vector<16x1xf32> to vector<16x32xf32>
    %106 = arith.subf %100, %105 : vector<16x32xf32>
    %107 = arith.mulf %106, %106 : vector<16x32xf32>
    %cst_46 = arith.constant dense<0.000000e+00> : vector<16xf32>
    %108 = vector.multi_reduction <add>, %107, %cst_46 [1] : vector<16x32xf32> to vector<16xf32>
    %109 = vector.shape_cast %108 : vector<16xf32> to vector<16x1xf32>
    %cst_47 = arith.constant 3.200000e+01 : f32
    %110 = vector.broadcast %cst_47 : f32 to vector<16x1xf32>
    %111 = arith.divf %109, %110 : vector<16x1xf32>
    %cst_48 = arith.constant 9.99999974E-6 : f32
    %112 = vector.broadcast %cst_48 : f32 to vector<16x1xf32>
    %113 = arith.addf %111, %112 : vector<16x1xf32>
    %114 = math.rsqrt %113 : vector<16x1xf32>
    %cst_49 = arith.constant 5.000000e-01 : f32
    %115 = vector.broadcast %cst_49 : f32 to vector<16x1xf32>
    %116 = arith.mulf %115, %113 : vector<16x1xf32>
    %117 = arith.mulf %116, %114 : vector<16x1xf32>
    %118 = arith.mulf %117, %114 : vector<16x1xf32>
    %cst_50 = arith.constant 1.500000e+00 : f32
    %119 = vector.broadcast %cst_50 : f32 to vector<16x1xf32>
    %120 = arith.subf %119, %118 : vector<16x1xf32>
    %121 = arith.mulf %114, %120 : vector<16x1xf32>
    %c0_51 = arith.constant 0 : index
    %c0_52 = arith.constant 0 : index
    %122 = vector.load %arg12[%c0_51, %c0_52] : memref<1x32xf32, #tpu.memory_space<vmem>>, vector<1x32xf32>
    %123 = vector.broadcast %104 : vector<16x1xf32> to vector<16x32xf32>
    %124 = arith.subf %100, %123 : vector<16x32xf32>
    %125 = vector.broadcast %121 : vector<16x1xf32> to vector<16x32xf32>
    %126 = arith.mulf %124, %125 : vector<16x32xf32>
    %127 = vector.broadcast %122 : vector<1x32xf32> to vector<16x32xf32>
    %128 = arith.mulf %127, %126 : vector<16x32xf32>
    %c0_53 = arith.constant 0 : index
    %c0_54 = arith.constant 0 : index
    %129 = vector.load %arg13[%c0_53, %c0_54] : memref<1x32xf32, #tpu.memory_space<vmem>>, vector<1x32xf32>
    %130 = vector.broadcast %129 : vector<1x32xf32> to vector<16x32xf32>
    %131 = arith.addf %128, %130 : vector<16x32xf32>
    %c0_55 = arith.constant 0 : index
    %c0_56 = arith.constant 0 : index
    %132 = vector.load %arg14[%c0_55, %c0_56] : memref<16x32xf32, #tpu.memory_space<vmem>>, vector<16x32xf32>
    tpu.vector_store %arg14[%c0_55, %c0_56], %131 {strides = array<i32>} : memref<16x32xf32, #tpu.memory_space<vmem>>, vector<16x32xf32>,
    return
  }
}

</mosaic_0001>

<llo_original>
// kernel: encoder_layer.1
$region0: #{encoder_layer.1}
  #allocation0 [shape = 'u32[]', space=smem, size = 0x4, offset = 0x4, fixed_abs, tag = 'smem constant byte address 0x4 - core index']
  #allocation1 [shape = 'u32[144,128]{1,0:T(1,128)}', space=vmem, size = 0x12000, scoped, tag = 'internal scratch']
  %s0 = inlined_call_operand.vmem [shape: f32[8,8,8], index: 0, kind: input, shape index: {}]
  %s1 = inlined_call_operand.vmem [shape: f32[16,32], index: 1, kind: input, shape index: {}]
  %s2 = inlined_call_operand.vmem [shape: f32[8,8,24], index: 2, kind: input, shape index: {}]
  %s3 = inlined_call_operand.vmem [shape: f32[8,1,24], index: 3, kind: input, shape index: {}]
  %s4 = inlined_call_operand.vmem [shape: f32[8,8,32], index: 4, kind: input, shape index: {}]
  %s5 = inlined_call_operand.vmem [shape: f32[1,32], index: 5, kind: input, shape index: {}]
  %s6 = inlined_call_operand.vmem [shape: f32[1,32], index: 6, kind: input, shape index: {}]
  %s7 = inlined_call_operand.vmem [shape: f32[1,32], index: 7, kind: input, shape index: {}]
  %s8 = inlined_call_operand.vmem [shape: f32[32,64], index: 8, kind: input, shape index: {}]
  %s9 = inlined_call_operand.vmem [shape: f32[1,64], index: 9, kind: input, shape index: {}]
  %s10 = inlined_call_operand.vmem [shape: f32[64,32], index: 10, kind: input, shape index: {}]
  %s11 = inlined_call_operand.vmem [shape: f32[1,32], index: 11, kind: input, shape index: {}]
  %s12 = inlined_call_operand.vmem [shape: f32[1,32], index: 12, kind: input, shape index: {}]
  %s13 = inlined_call_operand.vmem [shape: f32[1,32], index: 13, kind: input, shape index: {}]
  %s14 = inlined_call_operand.hbm [shape: f32[16,32], index: 14, kind: output, shape index: {}]
  %s15 = sld [smem:[#allocation0]]
  $region66: #{encoder_layer.1} parent=0
    _
  %s17 = ssub.s32 1, %s15
  %s18 = scalar_select 0, %s17, %s15
  $region1: #{encoder_layer.1} parent=0
    #allocation2 [shape = 'u8[8192]{0}', space=vmem, size = 0x2000, scoped, tag = 'output window, operand 0, single buffered']
    #allocation3 [shape = 's32[1]{0}', space=sflag, size = 0x4, scoped, tag = 'scoped memory for encoder_layer.1']
    %19 = vsyncpa [#allocation3], 0
    // Predicated region
    $region2: #{encoder_layer.1} parent=1 // pred_check
      _
    $region3: #{encoder_layer.1} parent=1 // pred_check_branch
      %21 = sbr.rel (0) target = $region5
    $region4: #{encoder_layer.1} parent=1 // pred_region
      _
    $region5: #{encoder_layer.1} parent=1 // pred_fallthru
      _
    // Predicated region
    $region6: #{encoder_layer.1} parent=1 // pred_check
      _
    $region7: #{encoder_layer.1} parent=1 // pred_check_branch
      %23 = sbr.rel (0) target = $region9
    $region8: #{encoder_layer.1} parent=1 // pred_region
      _
    $region9: #{encoder_layer.1} parent=1 // pred_fallthru
      _
    // Predicated region
    $region10: #{encoder_layer.1} parent=1 // pred_check
      _
    $region11: #{encoder_layer.1} parent=1 // pred_check_branch
      %25 = sbr.rel (0) target = $region13
    $region12: #{encoder_layer.1} parent=1 // pred_region
      _
    $region13: #{encoder_layer.1} parent=1 // pred_fallthru
      _
    // Predicated region
    $region14: #{encoder_layer.1} parent=1 // pred_check
      _
    $region15: #{encoder_layer.1} parent=1 // pred_check_branch
      %27 = sbr.rel (0) target = $region17
    $region16: #{encoder_layer.1} parent=1 // pred_region
      _
    $region17: #{encoder_layer.1} parent=1 // pred_fallthru
      _
    // Predicated region
    $region18: #{encoder_layer.1} parent=1 // pred_check
      _
    $region19: #{encoder_layer.1} parent=1 // pred_check_branch
      %29 = sbr.rel (0) target = $region21
    $region20: #{encoder_layer.1} parent=1 // pred_region
      _
    $region21: #{encoder_layer.1} parent=1 // pred_fallthru
      _
    // Predicated region
    $region22: #{encoder_layer.1} parent=1 // pred_check
      _
    $region23: #{encoder_layer.1} parent=1 // pred_check_branch
      %31 = sbr.rel (0) target = $region25
    $region24: #{encoder_layer.1} parent=1 // pred_region
      _
    $region25: #{encoder_layer.1} parent=1 // pred_fallthru
      _
    // Predicated region
    $region26: #{encoder_layer.1} parent=1 // pred_check
      _
    $region27: #{encoder_layer.1} parent=1 // pred_check_branch
      %33 = sbr.rel (0) target = $region29
    $region28: #{encoder_layer.1} parent=1 // pred_region
      _
    $region29: #{encoder_layer.1} parent=1 // pred_fallthru
      _
    // Predicated region
    $region30: #{encoder_layer.1} parent=1 // pred_check
      _
    $region31: #{encoder_layer.1} parent=1 // pred_check_branch
      %35 = sbr.rel (0) target = $region33
    $region32: #{encoder_layer.1} parent=1 // pred_region
      _
    $region33: #{encoder_layer.1} parent=1 // pred_fallthru
      _
    // Predicated region
    $region34: #{encoder_layer.1} parent=1 // pred_check
      _
    $region35: #{encoder_layer.1} parent=1 // pred_check_branch
      %37 = sbr.rel (0) target = $region37
    $region36: #{encoder_layer.1} parent=1 // pred_region
      _
    $region37: #{encoder_layer.1} parent=1 // pred_fallthru
      _
    // Predicated region
    $region38: #{encoder_layer.1} parent=1 // pred_check
      _
    $region39: #{encoder_layer.1} parent=1 // pred_check_branch
      %39 = sbr.rel (0) target = $region41
    $region40: #{encoder_layer.1} parent=1 // pred_region
      _
    $region41: #{encoder_layer.1} parent=1 // pred_fallthru
      _
    // Predicated region
    $region42: #{encoder_layer.1} parent=1 // pred_check
      _
    $region43: #{encoder_layer.1} parent=1 // pred_check_branch
      %41 = sbr.rel (0) target = $region45
    $region44: #{encoder_layer.1} parent=1 // pred_region
      _
    $region45: #{encoder_layer.1} parent=1 // pred_fallthru
      _
    // Predicated region
    $region46: #{encoder_layer.1} parent=1 // pred_check
      _
    $region47: #{encoder_layer.1} parent=1 // pred_check_branch
      %43 = sbr.rel (0) target = $region49
    $region48: #{encoder_layer.1} parent=1 // pred_region
      _
    $region49: #{encoder_layer.1} parent=1 // pred_fallthru
      _
    // Predicated region
    $region50: #{encoder_layer.1} parent=1 // pred_check
      _
    $region51: #{encoder_layer.1} parent=1 // pred_check_branch
      %45 = sbr.rel (0) target = $region53
    $region52: #{encoder_layer.1} parent=1 // pred_region
      _
    $region53: #{encoder_layer.1} parent=1 // pred_fallthru
      _
    // Predicated region
    $region54: #{encoder_layer.1} parent=1 // pred_check
      _
    $region55: #{encoder_layer.1} parent=1 // pred_check_branch
      %47 = sbr.rel (0) target = $region57
    $region56: #{encoder_layer.1} parent=1 // pred_region
      _
    $region57: #{encoder_layer.1} parent=1 // pred_fallthru
      _
    %v48 = vld [vmem:[%s0] sm:$0xff]
    %v49 = vld [vmem:[%s0 + $0x8] sm:$0xff]
    %v50 = vld [vmem:[%s0 + $0x10] sm:$0xff]
    %v51 = vld [vmem:[%s0 + $0x18] sm:$0xff]
    %v52 = vld [vmem:[%s0 + $0x20] sm:$0xff]
    %v53 = vld [vmem:[%s0 + $0x28] sm:$0xff]
    %v54 = vld [vmem:[%s0 + $0x30] sm:$0xff]
    %v55 = vld [vmem:[%s0 + $0x38] sm:$0xff]
    %v56 = vld [vmem:[%s1] sm:$0xff]
    %v57 = vld [vmem:[%s1 + $0x8] sm:$0xff]
    %v58 = vld [vmem:[%s2] sm:$0xff]
    %v59 = vld [vmem:[%s2 + $0x8] sm:$0xff]
    %v60 = vld [vmem:[%s2 + $0x10] sm:$0xff]
    %v61 = vld [vmem:[%s2 + $0x18] sm:$0xff]
    %v62 = vld [vmem:[%s2 + $0x20] sm:$0xff]
    %v63 = vld [vmem:[%s2 + $0x28] sm:$0xff]
    %v64 = vld [vmem:[%s2 + $0x30] sm:$0xff]
    %v65 = vld [vmem:[%s2 + $0x38] sm:$0xff]
    %v66 = vld [vmem:[%s3] sm:$0x1]
    %v67 = vld [vmem:[%s3 + $0x1] sm:$0x1]
    %v68 = vld [vmem:[%s3 + $0x2] sm:$0x1]
    %v69 = vld [vmem:[%s3 + $0x3] sm:$0x1]
    %v70 = vld [vmem:[%s3 + $0x4] sm:$0x1]
    %v71 = vld [vmem:[%s3 + $0x5] sm:$0x1]
    %v72 = vld [vmem:[%s3 + $0x6] sm:$0x1]
    %v73 = vld [vmem:[%s3 + $0x7] sm:$0x1]
    %v82 = vlaneseq
    %v83 = vshrl.u32 %v82, 7
    %v84 = vsub.s32 0, %v83
    %v85 = vrot.slane %v66, %v84
    %v86 = vlaneseq
    %v87 = vshrl.u32 %v86, 7
    %v88 = vsub.s32 0, %v87
    %v89 = vrot.slane %v67, %v88
    %v90 = vlaneseq
    %v91 = vshrl.u32 %v90, 7
    %v92 = vsub.s32 0, %v91
    %v93 = vrot.slane %v68, %v92
    %v94 = vlaneseq
    %v95 = vshrl.u32 %v94, 7
    %v96 = vsub.s32 0, %v95
    %v97 = vrot.slane %v69, %v96
    %v98 = vlaneseq
    %v99 = vshrl.u32 %v98, 7
    %v100 = vsub.s32 0, %v99
    %v101 = vrot.slane %v70, %v100
    %v102 = vlaneseq
    %v103 = vshrl.u32 %v102, 7
    %v104 = vsub.s32 0, %v103
    %v105 = vrot.slane %v71, %v104
    %v106 = vlaneseq
    %v107 = vshrl.u32 %v106, 7
    %v108 = vsub.s32 0, %v107
    %v109 = vrot.slane %v72, %v108
    %v110 = vlaneseq
    %v111 = vshrl.u32 %v110, 7
    %v112 = vsub.s32 0, %v111
    %v113 = vrot.slane %v73, %v112
    %vm122 = vcmask 64512
    %v124 = vsel %vm122, %v48, 0
    %126 = vmatprep.subr.mxu0 0.0
    %127 = vmatpush1.msra.mxu0 %v58
    %128 = vmatprep.subr.mxu0 0.0
    %129 = vmatpush1.msra.mxu0 0.0
    %130 = vmatprep.subr.mxu0 0.0
    %131 = vmatpush1.msra.mxu0 0.0
    %132 = vmatprep.subr.mxu0 0.0
    %133 = vmatpush1.msra.mxu0 0.0
    %134 = vmatprep.subr.mxu0 0.0
    %135 = vmatpush1.msra.mxu0 0.0
    %136 = vmatprep.subr.mxu0 0.0
    %137 = vmatpush1.msra.mxu0 0.0
    %138 = vmatprep.subr.mxu0 0.0
    %139 = vmatpush1.msra.mxu0 0.0
    %140 = vmatprep.subr.mxu0 0.0
    %141 = vmatpush1.msra.mxu0 0.0
    %142 = vmatprep.subr.mxu0 0.0
    %143 = vmatpush1.msra.mxu0 0.0
    %144 = vmatprep.subr.mxu0 0.0
    %145 = vmatpush1.msra.mxu0 0.0
    %146 = vmatprep.subr.mxu0 0.0
    %147 = vmatpush1.msra.mxu0 0.0
    %148 = vmatprep.subr.mxu0 0.0
    %149 = vmatpush1.msra.mxu0 0.0
    %150 = vmatprep.subr.mxu0 0.0
    %151 = vmatpush1.msra.mxu0 0.0
    %152 = vmatprep.subr.mxu0 0.0
    %153 = vmatpush1.msra.mxu0 0.0
    %154 = vmatprep.subr.mxu0 0.0
    %155 = vmatpush1.msra.mxu0 0.0
    %156 = vmatprep.subr.mxu0 0.0
    %157 = vmatpush1.msra.mxu0 0.0
    %158 = vmatprep.subr.mxu0 0.0
    %159 = vmatpush1.msra.mxu0 0.0
    %160 = vmatprep.subr.mxu0 0.0
    %161 = vmatpush1.msra.mxu0 0.0
    %162 = vmatprep.subr.mxu0 0.0
    %163 = vmatpush1.msra.mxu0 0.0
    %164 = vmatprep.subr.mxu0 0.0
    %165 = vmatpush1.msra.mxu0 0.0
    %166 = vmatprep.subr.mxu0 0.0
    %167 = vmatpush1.msra.mxu0 0.0
    %168 = vmatprep.subr.mxu0 0.0
    %169 = vmatpush1.msra.mxu0 0.0
    %170 = vmatprep.subr.mxu0 0.0
    %171 = vmatpush1.msra.mxu0 0.0
    %172 = vmatprep.subr.mxu0 0.0
    %173 = vmatpush1.msra.mxu0 0.0
    %174 = vmatprep.subr.mxu0 0.0
    %175 = vmatpush1.msra.mxu0 0.0
    %176 = vmatprep.subr.mxu0 0.0
    %177 = vmatpush1.msra.mxu0 0.0
    %178 = vmatprep.subr.mxu0 0.0
    %179 = vmatpush1.msra.mxu0 0.0
    %180 = vmatprep.subr.mxu0 0.0
    %181 = vmatpush1.msra.mxu0 0.0
    %182 = vmatprep.subr.mxu0 0.0
    %183 = vmatpush1.msra.mxu0 0.0
    %184 = vmatprep.subr.mxu0 0.0
    %185 = vmatpush1.msra.mxu0 0.0
    %186 = vmatprep.subr.mxu0 0.0
    %187 = vmatpush1.msra.mxu0 0.0
    %188 = vmatprep.subr.mxu0 0.0
    %189 = vmatpush1.msra.mxu0 0.0
    %190 = vmatprep.mubr.f32.mxu0 0.0
    %191 = vmatmul.mubr.f32.gmra.mrb[0].mxu0 %v124
    %v192 = vpop.f32.mrb[0].mxu0
    %v193 = vadd.f32 %v85, %v192
    %v194 = vpop.f32.mrb[0].mxu0
    %195 = vdwg.mxu0
    %v197 = vsel %vm122, %v49, 0
    %199 = vmatprep.subr.mxu0 0.0
    %200 = vmatpush1.msra.mxu0 %v59
    %201 = vmatprep.subr.mxu0 0.0
    %202 = vmatpush1.msra.mxu0 0.0
    %203 = vmatprep.subr.mxu0 0.0
    %204 = vmatpush1.msra.mxu0 0.0
    %205 = vmatprep.subr.mxu0 0.0
    %206 = vmatpush1.msra.mxu0 0.0
    %207 = vmatprep.subr.mxu0 0.0
    %208 = vmatpush1.msra.mxu0 0.0
    %209 = vmatprep.subr.mxu0 0.0
    %210 = vmatpush1.msra.mxu0 0.0
    %211 = vmatprep.subr.mxu0 0.0
    %212 = vmatpush1.msra.mxu0 0.0
    %213 = vmatprep.subr.mxu0 0.0
    %214 = vmatpush1.msra.mxu0 0.0
    %215 = vmatprep.subr.mxu0 0.0
    %216 = vmatpush1.msra.mxu0 0.0
    %217 = vmatprep.subr.mxu0 0.0
    %218 = vmatpush1.msra.mxu0 0.0
    %219 = vmatprep.subr.mxu0 0.0
    %220 = vmatpush1.msra.mxu0 0.0
    %221 = vmatprep.subr.mxu0 0.0
    %222 = vmatpush1.msra.mxu0 0.0
    %223 = vmatprep.subr.mxu0 0.0
    %224 = vmatpush1.msra.mxu0 0.0
    %225 = vmatprep.subr.mxu0 0.0
    %226 = vmatpush1.msra.mxu0 0.0
    %227 = vmatprep.subr.mxu0 0.0
    %228 = vmatpush1.msra.mxu0 0.0
    %229 = vmatprep.subr.mxu0 0.0
    %230 = vmatpush1.msra.mxu0 0.0
    %231 = vmatprep.subr.mxu0 0.0
    %232 = vmatpush1.msra.mxu0 0.0
    %233 = vmatprep.subr.mxu0 0.0
    %234 = vmatpush1.msra.mxu0 0.0
    %235 = vmatprep.subr.mxu0 0.0
    %236 = vmatpush1.msra.mxu0 0.0
    %237 = vmatprep.subr.mxu0 0.0
    %238 = vmatpush1.msra.mxu0 0.0
    %239 = vmatprep.subr.mxu0 0.0
    %240 = vmatpush1.msra.mxu0 0.0
    %241 = vmatprep.subr.mxu0 0.0
    %242 = vmatpush1.msra.mxu0 0.0
    %243 = vmatprep.subr.mxu0 0.0
    %244 = vmatpush1.msra.mxu0 0.0
    %245 = vmatprep.subr.mxu0 0.0
    %246 = vmatpush1.msra.mxu0 0.0
    %247 = vmatprep.subr.mxu0 0.0
    %248 = vmatpush1.msra.mxu0 0.0
    %249 = vmatprep.subr.mxu0 0.0
    %250 = vmatpush1.msra.mxu0 0.0
    %251 = vmatprep.subr.mxu0 0.0
    %252 = vmatpush1.msra.mxu0 0.0
    %253 = vmatprep.subr.mxu0 0.0
    %254 = vmatpush1.msra.mxu0 0.0
    %255 = vmatprep.subr.mxu0 0.0
    %256 = vmatpush1.msra.mxu0 0.0
    %257 = vmatprep.subr.mxu0 0.0
    %258 = vmatpush1.msra.mxu0 0.0
    %259 = vmatprep.subr.mxu0 0.0
    %260 = vmatpush1.msra.mxu0 0.0
    %261 = vmatprep.subr.mxu0 0.0
    %262 = vmatpush1.msra.mxu0 0.0
    %263 = vmatprep.mubr.f32.mxu0 0.0
    %264 = vmatmul.mubr.f32.gmra.mrb[0].mxu0 %v197
    %v265 = vpop.f32.mrb[0].mxu0
    %v266 = vadd.f32 %v89, %v265
    %v267 = vpop.f32.mrb[0].mxu0
    %268 = vdwg.mxu0
    %v270 = vsel %vm122, %v50, 0
    %272 = vmatprep.subr.mxu0 0.0
    %273 = vmatpush1.msra.mxu0 %v60
    %274 = vmatprep.subr.mxu0 0.0
    %275 = vmatpush1.msra.mxu0 0.0
    %276 = vmatprep.subr.mxu0 0.0
    %277 = vmatpush1.msra.mxu0 0.0
    %278 = vmatprep.subr.mxu0 0.0
    %279 = vmatpush1.msra.mxu0 0.0
    %280 = vmatprep.subr.mxu0 0.0
    %281 = vmatpush1.msra.mxu0 0.0
    %282 = vmatprep.subr.mxu0 0.0
    %283 = vmatpush1.msra.mxu0 0.0
    %284 = vmatprep.subr.mxu0 0.0
    %285 = vmatpush1.msra.mxu0 0.0
    %286 = vmatprep.subr.mxu0 0.0
    %287 = vmatpush1.msra.mxu0 0.0
    %288 = vmatprep.subr.mxu0 0.0
    %289 = vmatpush1.msra.mxu0 0.0
    %290 = vmatprep.subr.mxu0 0.0
    %291 = vmatpush1.msra.mxu0 0.0
    %292 = vmatprep.subr.mxu0 0.0
    %293 = vmatpush1.msra.mxu0 0.0
    %294 = vmatprep.subr.mxu0 0.0
    %295 = vmatpush1.msra.mxu0 0.0
    %296 = vmatprep.subr.mxu0 0.0
    %297 = vmatpush1.msra.mxu0 0.0
    %298 = vmatprep.subr.mxu0 0.0
    %299 = vmatpush1.msra.mxu0 0.0
    %300 = vmatprep.subr.mxu0 0.0
    %301 = vmatpush1.msra.mxu0 0.0
    %302 = vmatprep.subr.mxu0 0.0
    %303 = vmatpush1.msra.mxu0 0.0
    %304 = vmatprep.subr.mxu0 0.0
    %305 = vmatpush1.msra.mxu0 0.0
    %306 = vmatprep.subr.mxu0 0.0
    %307 = vmatpush1.msra.mxu0 0.0
    %308 = vmatprep.subr.mxu0 0.0
    %309 = vmatpush1.msra.mxu0 0.0
    %310 = vmatprep.subr.mxu0 0.0
    %311 = vmatpush1.msra.mxu0 0.0
    %312 = vmatprep.subr.mxu0 0.0
    %313 = vmatpush1.msra.mxu0 0.0
    %314 = vmatprep.subr.mxu0 0.0
    %315 = vmatpush1.msra.mxu0 0.0
    %316 = vmatprep.subr.mxu0 0.0
    %317 = vmatpush1.msra.mxu0 0.0
    %318 = vmatprep.subr.mxu0 0.0
    %319 = vmatpush1.msra.mxu0 0.0
    %320 = vmatprep.subr.mxu0 0.0
    %321 = vmatpush1.msra.mxu0 0.0
    %322 = vmatprep.subr.mxu0 0.0
    %323 = vmatpush1.msra.mxu0 0.0
    %324 = vmatprep.subr.mxu0 0.0
    %325 = vmatpush1.msra.mxu0 0.0
    %326 = vmatprep.subr.mxu0 0.0
    %327 = vmatpush1.msra.mxu0 0.0
    %328 = vmatprep.subr.mxu0 0.0
    %329 = vmatpush1.msra.mxu0 0.0
    %330 = vmatprep.subr.mxu0 0.0
    %331 = vmatpush1.msra.mxu0 0.0
    %332 = vmatprep.subr.mxu0 0.0
    %333 = vmatpush1.msra.mxu0 0.0
    %334 = vmatprep.subr.mxu0 0.0
    %335 = vmatpush1.msra.mxu0 0.0
    %336 = vmatprep.mubr.f32.mxu0 0.0
    %337 = vmatmul.mubr.f32.gmra.mrb[0].mxu0 %v270
    %v338 = vpop.f32.mrb[0].mxu0
    %v339 = vadd.f32 %v93, %v338
    %v340 = vpop.f32.mrb[0].mxu0
    %341 = vdwg.mxu0
    %v343 = vsel %vm122, %v51, 0
    %345 = vmatprep.subr.mxu0 0.0
    %346 = vmatpush1.msra.mxu0 %v61
    %347 = vmatprep.subr.mxu0 0.0
    %348 = vmatpush1.msra.mxu0 0.0
    %349 = vmatprep.subr.mxu0 0.0
    %350 = vmatpush1.msra.mxu0 0.0
    %351 = vmatprep.subr.mxu0 0.0
    %352 = vmatpush1.msra.mxu0 0.0
    %353 = vmatprep.subr.mxu0 0.0
    %354 = vmatpush1.msra.mxu0 0.0
    %355 = vmatprep.subr.mxu0 0.0
    %356 = vmatpush1.msra.mxu0 0.0
    %357 = vmatprep.subr.mxu0 0.0
    %358 = vmatpush1.msra.mxu0 0.0
    %359 = vmatprep.subr.mxu0 0.0
    %360 = vmatpush1.msra.mxu0 0.0
    %361 = vmatprep.subr.mxu0 0.0
    %362 = vmatpush1.msra.mxu0 0.0
    %363 = vmatprep.subr.mxu0 0.0
    %364 = vmatpush1.msra.mxu0 0.0
    %365 = vmatprep.subr.mxu0 0.0
    %366 = vmatpush1.msra.mxu0 0.0
    %367 = vmatprep.subr.mxu0 0.0
    %368 = vmatpush1.msra.mxu0 0.0
    %369 = vmatprep.subr.mxu0 0.0
    %370 = vmatpush1.msra.mxu0 0.0
    %371 = vmatprep.subr.mxu0 0.0
    %372 = vmatpush1.msra.mxu0 0.0
    %373 = vmatprep.subr.mxu0 0.0
    %374 = vmatpush1.msra.mxu0 0.0
    %375 = vmatprep.subr.mxu0 0.0
    %376 = vmatpush1.msra.mxu0 0.0
    %377 = vmatprep.subr.mxu0 0.0
    %378 = vmatpush1.msra.mxu0 0.0
    %379 = vmatprep.subr.mxu0 0.0
    %380 = vmatpush1.msra.mxu0 0.0
    %381 = vmatprep.subr.mxu0 0.0
    %382 = vmatpush1.msra.mxu0 0.0
    %383 = vmatprep.subr.mxu0 0.0
    %384 = vmatpush1.msra.mxu0 0.0
    %385 = vmatprep.subr.mxu0 0.0
    %386 = vmatpush1.msra.mxu0 0.0
    %387 = vmatprep.subr.mxu0 0.0
    %388 = vmatpush1.msra.mxu0 0.0
    %389 = vmatprep.subr.mxu0 0.0
    %390 = vmatpush1.msra.mxu0 0.0
    %391 = vmatprep.subr.mxu0 0.0
    %392 = vmatpush1.msra.mxu0 0.0
    %393 = vmatprep.subr.mxu0 0.0
    %394 = vmatpush1.msra.mxu0 0.0
    %395 = vmatprep.subr.mxu0 0.0
    %396 = vmatpush1.msra.mxu0 0.0
    %397 = vmatprep.subr.mxu0 0.0
    %398 = vmatpush1.msra.mxu0 0.0
    %399 = vmatprep.subr.mxu0 0.0
    %400 = vmatpush1.msra.mxu0 0.0
    %401 = vmatprep.subr.mxu0 0.0
    %402 = vmatpush1.msra.mxu0 0.0
    %403 = vmatprep.subr.mxu0 0.0
    %404 = vmatpush1.msra.mxu0 0.0
    %405 = vmatprep.subr.mxu0 0.0
    %406 = vmatpush1.msra.mxu0 0.0
    %407 = vmatprep.subr.mxu0 0.0
    %408 = vmatpush1.msra.mxu0 0.0
    %409 = vmatprep.mubr.f32.mxu0 0.0
    %410 = vmatmul.mubr.f32.gmra.mrb[0].mxu0 %v343
    %v411 = vpop.f32.mrb[0].mxu0
    %v412 = vadd.f32 %v97, %v411
    %v413 = vpop.f32.mrb[0].mxu0
    %414 = vdwg.mxu0
    %v416 = vsel %vm122, %v52, 0
    %418 = vmatprep.subr.mxu0 0.0
    %419 = vmatpush1.msra.mxu0 %v62
    %420 = vmatprep.subr.mxu0 0.0
    %421 = vmatpush1.msra.mxu0 0.0
    %422 = vmatprep.subr.mxu0 0.0
    %423 = vmatpush1.msra.mxu0 0.0
    %424 = vmatprep.subr.mxu0 0.0
    %425 = vmatpush1.msra.mxu0 0.0
    %426 = vmatprep.subr.mxu0 0.0
    %427 = vmatpush1.msra.mxu0 0.0
    %428 = vmatprep.subr.mxu0 0.0
    %429 = vmatpush1.msra.mxu0 0.0
    %430 = vmatprep.subr.mxu0 0.0
    %431 = vmatpush1.msra.mxu0 0.0
    %432 = vmatprep.subr.mxu0 0.0
    %433 = vmatpush1.msra.mxu0 0.0
    %434 = vmatprep.subr.mxu0 0.0
    %435 = vmatpush1.msra.mxu0 0.0
    %436 = vmatprep.subr.mxu0 0.0
    %437 = vmatpush1.msra.mxu0 0.0
    %438 = vmatprep.subr.mxu0 0.0
    %439 = vmatpush1.msra.mxu0 0.0
    %440 = vmatprep.subr.mxu0 0.0
    %441 = vmatpush1.msra.mxu0 0.0
    %442 = vmatprep.subr.mxu0 0.0
    %443 = vmatpush1.msra.mxu0 0.0
    %444 = vmatprep.subr.mxu0 0.0
    %445 = vmatpush1.msra.mxu0 0.0
    %446 = vmatprep.subr.mxu0 0.0
    %447 = vmatpush1.msra.mxu0 0.0
    %448 = vmatprep.subr.mxu0 0.0
    %449 = vmatpush1.msra.mxu0 0.0
    %450 = vmatprep.subr.mxu0 0.0
    %451 = vmatpush1.msra.mxu0 0.0
    %452 = vmatprep.subr.mxu0 0.0
    %453 = vmatpush1.msra.mxu0 0.0
    %454 = vmatprep.subr.mxu0 0.0
    %455 = vmatpush1.msra.mxu0 0.0
    %456 = vmatprep.subr.mxu0 0.0
    %457 = vmatpush1.msra.mxu0 0.0
    %458 = vmatprep.subr.mxu0 0.0
    %459 = vmatpush1.msra.mxu0 0.0
    %460 = vmatprep.subr.mxu0 0.0
    %461 = vmatpush1.msra.mxu0 0.0
    %462 = vmatprep.subr.mxu0 0.0
    %463 = vmatpush1.msra.mxu0 0.0
    %464 = vmatprep.subr.mxu0 0.0
    %465 = vmatpush1.msra.mxu0 0.0
    %466 = vmatprep.subr.mxu0 0.0
    %467 = vmatpush1.msra.mxu0 0.0
    %468 = vmatprep.subr.mxu0 0.0
    %469 = vmatpush1.msra.mxu0 0.0
    %470 = vmatprep.subr.mxu0 0.0
    %471 = vmatpush1.msra.mxu0 0.0
    %472 = vmatprep.subr.mxu0 0.0
    %473 = vmatpush1.msra.mxu0 0.0
    %474 = vmatprep.subr.mxu0 0.0
    %475 = vmatpush1.msra.mxu0 0.0
    %476 = vmatprep.subr.mxu0 0.0
    %477 = vmatpush1.msra.mxu0 0.0
    %478 = vmatprep.subr.mxu0 0.0
    %479 = vmatpush1.msra.mxu0 0.0
    %480 = vmatprep.subr.mxu0 0.0
    %481 = vmatpush1.msra.mxu0 0.0
    %482 = vmatprep.mubr.f32.mxu0 0.0
    %483 = vmatmul.mubr.f32.gmra.mrb[0].mxu0 %v416
    %v484 = vpop.f32.mrb[0].mxu0
    %v485 = vadd.f32 %v101, %v484
    %v486 = vpop.f32.mrb[0].mxu0
    %487 = vdwg.mxu0
    %v489 = vsel %vm122, %v53, 0
    %491 = vmatprep.subr.mxu0 0.0
    %492 = vmatpush1.msra.mxu0 %v63
    %493 = vmatprep.subr.mxu0 0.0
    %494 = vmatpush1.msra.mxu0 0.0
    %495 = vmatprep.subr.mxu0 0.0
    %496 = vmatpush1.msra.mxu0 0.0
    %497 = vmatprep.subr.mxu0 0.0
    %498 = vmatpush1.msra.mxu0 0.0
    %499 = vmatprep.subr.mxu0 0.0
    %500 = vmatpush1.msra.mxu0 0.0
    %501 = vmatprep.subr.mxu0 0.0
    %502 = vmatpush1.msra.mxu0 0.0
    %503 = vmatprep.subr.mxu0 0.0
    %504 = vmatpush1.msra.mxu0 0.0
    %505 = vmatprep.subr.mxu0 0.0
    %506 = vmatpush1.msra.mxu0 0.0
    %507 = vmatprep.subr.mxu0 0.0
    %508 = vmatpush1.msra.mxu0 0.0
    %509 = vmatprep.subr.mxu0 0.0
    %510 = vmatpush1.msra.mxu0 0.0
    %511 = vmatprep.subr.mxu0 0.0
    %512 = vmatpush1.msra.mxu0 0.0
    %513 = vmatprep.subr.mxu0 0.0
    %514 = vmatpush1.msra.mxu0 0.0
    %515 = vmatprep.subr.mxu0 0.0
    %516 = vmatpush1.msra.mxu0 0.0
    %517 = vmatprep.subr.mxu0 0.0
    %518 = vmatpush1.msra.mxu0 0.0
    %519 = vmatprep.subr.mxu0 0.0
    %520 = vmatpush1.msra.mxu0 0.0
    %521 = vmatprep.subr.mxu0 0.0
    %522 = vmatpush1.msra.mxu0 0.0
    %523 = vmatprep.subr.mxu0 0.0
    %524 = vmatpush1.msra.mxu0 0.0
    %525 = vmatprep.subr.mxu0 0.0
    %526 = vmatpush1.msra.mxu0 0.0
    %527 = vmatprep.subr.mxu0 0.0
    %528 = vmatpush1.msra.mxu0 0.0
    %529 = vmatprep.subr.mxu0 0.0
    %530 = vmatpush1.msra.mxu0 0.0
    %531 = vmatprep.subr.mxu0 0.0
    %532 = vmatpush1.msra.mxu0 0.0
    %533 = vmatprep.subr.mxu0 0.0
    %534 = vmatpush1.msra.mxu0 0.0
    %535 = vmatprep.subr.mxu0 0.0
    %536 = vmatpush1.msra.mxu0 0.0
    %537 = vmatprep.subr.mxu0 0.0
    %538 = vmatpush1.msra.mxu0 0.0
    %539 = vmatprep.subr.mxu0 0.0
    %540 = vmatpush1.msra.mxu0 0.0
    %541 = vmatprep.subr.mxu0 0.0
    %542 = vmatpush1.msra.mxu0 0.0
    %543 = vmatprep.subr.mxu0 0.0
    %544 = vmatpush1.msra.mxu0 0.0
    %545 = vmatprep.subr.mxu0 0.0
    %546 = vmatpush1.msra.mxu0 0.0
    %547 = vmatprep.subr.mxu0 0.0
    %548 = vmatpush1.msra.mxu0 0.0
    %549 = vmatprep.subr.mxu0 0.0
    %550 = vmatpush1.msra.mxu0 0.0
    %551 = vmatprep.subr.mxu0 0.0
    %552 = vmatpush1.msra.mxu0 0.0
    %553 = vmatprep.subr.mxu0 0.0
    %554 = vmatpush1.msra.mxu0 0.0
    %555 = vmatprep.mubr.f32.mxu0 0.0
    %556 = vmatmul.mubr.f32.gmra.mrb[0].mxu0 %v489
    %v557 = vpop.f32.mrb[0].mxu0
    %v558 = vadd.f32 %v105, %v557
    %v559 = vpop.f32.mrb[0].mxu0
    %560 = vdwg.mxu0
    %v562 = vsel %vm122, %v54, 0
    %564 = vmatprep.subr.mxu0 0.0
    %565 = vmatpush1.msra.mxu0 %v64
    %566 = vmatprep.subr.mxu0 0.0
    %567 = vmatpush1.msra.mxu0 0.0
    %568 = vmatprep.subr.mxu0 0.0
    %569 = vmatpush1.msra.mxu0 0.0
    %570 = vmatprep.subr.mxu0 0.0
    %571 = vmatpush1.msra.mxu0 0.0
    %572 = vmatprep.subr.mxu0 0.0
    %573 = vmatpush1.msra.mxu0 0.0
    %574 = vmatprep.subr.mxu0 0.0
    %575 = vmatpush1.msra.mxu0 0.0
    %576 = vmatprep.subr.mxu0 0.0
    %577 = vmatpush1.msra.mxu0 0.0
    %578 = vmatprep.subr.mxu0 0.0
    %579 = vmatpush1.msra.mxu0 0.0
    %580 = vmatprep.subr.mxu0 0.0
    %581 = vmatpush1.msra.mxu0 0.0
    %582 = vmatprep.subr.mxu0 0.0
    %583 = vmatpush1.msra.mxu0 0.0
    %584 = vmatprep.subr.mxu0 0.0
    %585 = vmatpush1.msra.mxu0 0.0
    %586 = vmatprep.subr.mxu0 0.0
    %587 = vmatpush1.msra.mxu0 0.0
    %588 = vmatprep.subr.mxu0 0.0
    %589 = vmatpush1.msra.mxu0 0.0
    %590 = vmatprep.subr.mxu0 0.0
    %591 = vmatpush1.msra.mxu0 0.0
    %592 = vmatprep.subr.mxu0 0.0
    %593 = vmatpush1.msra.mxu0 0.0
    %594 = vmatprep.subr.mxu0 0.0
    %595 = vmatpush1.msra.mxu0 0.0
    %596 = vmatprep.subr.mxu0 0.0
    %597 = vmatpush1.msra.mxu0 0.0
    %598 = vmatprep.subr.mxu0 0.0
    %599 = vmatpush1.msra.mxu0 0.0
    %600 = vmatprep.subr.mxu0 0.0
    %601 = vmatpush1.msra.mxu0 0.0
    %602 = vmatprep.subr.mxu0 0.0
    %603 = vmatpush1.msra.mxu0 0.0
    %604 = vmatprep.subr.mxu0 0.0
    %605 = vmatpush1.msra.mxu0 0.0
    %606 = vmatprep.subr.mxu0 0.0
    %607 = vmatpush1.msra.mxu0 0.0
    %608 = vmatprep.subr.mxu0 0.0
    %609 = vmatpush1.msra.mxu0 0.0
    %610 = vmatprep.subr.mxu0 0.0
    %611 = vmatpush1.msra.mxu0 0.0
    %612 = vmatprep.subr.mxu0 0.0
    %613 = vmatpush1.msra.mxu0 0.0
    %614 = vmatprep.subr.mxu0 0.0
    %615 = vmatpush1.msra.mxu0 0.0
    %616 = vmatprep.subr.mxu0 0.0
    %617 = vmatpush1.msra.mxu0 0.0
    %618 = vmatprep.subr.mxu0 0.0
    %619 = vmatpush1.msra.mxu0 0.0
    %620 = vmatprep.subr.mxu0 0.0
    %621 = vmatpush1.msra.mxu0 0.0
    %622 = vmatprep.subr.mxu0 0.0
    %623 = vmatpush1.msra.mxu0 0.0
    %624 = vmatprep.subr.mxu0 0.0
    %625 = vmatpush1.msra.mxu0 0.0
    %626 = vmatprep.subr.mxu0 0.0
    %627 = vmatpush1.msra.mxu0 0.0
    %628 = vmatprep.mubr.f32.mxu0 0.0
    %629 = vmatmul.mubr.f32.gmra.mrb[0].mxu0 %v562
    %v630 = vpop.f32.mrb[0].mxu0
    %v631 = vadd.f32 %v109, %v630
    %v632 = vpop.f32.mrb[0].mxu0
    %633 = vdwg.mxu0
    %v635 = vsel %vm122, %v55, 0
    %637 = vmatprep.subr.mxu0 0.0
    %638 = vmatpush1.msra.mxu0 %v65
    %639 = vmatprep.subr.mxu0 0.0
    %640 = vmatpush1.msra.mxu0 0.0
    %641 = vmatprep.subr.mxu0 0.0
    %642 = vmatpush1.msra.mxu0 0.0
    %643 = vmatprep.subr.mxu0 0.0
    %644 = vmatpush1.msra.mxu0 0.0
    %645 = vmatprep.subr.mxu0 0.0
    %646 = vmatpush1.msra.mxu0 0.0
    %647 = vmatprep.subr.mxu0 0.0
    %648 = vmatpush1.msra.mxu0 0.0
    %649 = vmatprep.subr.mxu0 0.0
    %650 = vmatpush1.msra.mxu0 0.0
    %651 = vmatprep.subr.mxu0 0.0
    %652 = vmatpush1.msra.mxu0 0.0
    %653 = vmatprep.subr.mxu0 0.0
    %654 = vmatpush1.msra.mxu0 0.0
    %655 = vmatprep.subr.mxu0 0.0
    %656 = vmatpush1.msra.mxu0 0.0
    %657 = vmatprep.subr.mxu0 0.0
    %658 = vmatpush1.msra.mxu0 0.0
    %659 = vmatprep.subr.mxu0 0.0
    %660 = vmatpush1.msra.mxu0 0.0
    %661 = vmatprep.subr.mxu0 0.0
    %662 = vmatpush1.msra.mxu0 0.0
    %663 = vmatprep.subr.mxu0 0.0
    %664 = vmatpush1.msra.mxu0 0.0
    %665 = vmatprep.subr.mxu0 0.0
    %666 = vmatpush1.msra.mxu0 0.0
    %667 = vmatprep.subr.mxu0 0.0
    %668 = vmatpush1.msra.mxu0 0.0
    %669 = vmatprep.subr.mxu0 0.0
    %670 = vmatpush1.msra.mxu0 0.0
    %671 = vmatprep.subr.mxu0 0.0
    %672 = vmatpush1.msra.mxu0 0.0
    %673 = vmatprep.subr.mxu0 0.0
    %674 = vmatpush1.msra.mxu0 0.0
    %675 = vmatprep.subr.mxu0 0.0
    %676 = vmatpush1.msra.mxu0 0.0
    %677 = vmatprep.subr.mxu0 0.0
    %678 = vmatpush1.msra.mxu0 0.0
    %679 = vmatprep.subr.mxu0 0.0
    %680 = vmatpush1.msra.mxu0 0.0
    %681 = vmatprep.subr.mxu0 0.0
    %682 = vmatpush1.msra.mxu0 0.0
    %683 = vmatprep.subr.mxu0 0.0
    %684 = vmatpush1.msra.mxu0 0.0
    %685 = vmatprep.subr.mxu0 0.0
    %686 = vmatpush1.msra.mxu0 0.0
    %687 = vmatprep.subr.mxu0 0.0
    %688 = vmatpush1.msra.mxu0 0.0
    %689 = vmatprep.subr.mxu0 0.0
    %690 = vmatpush1.msra.mxu0 0.0
    %691 = vmatprep.subr.mxu0 0.0
    %692 = vmatpush1.msra.mxu0 0.0
    %693 = vmatprep.subr.mxu0 0.0
    %694 = vmatpush1.msra.mxu0 0.0
    %695 = vmatprep.subr.mxu0 0.0
    %696 = vmatpush1.msra.mxu0 0.0
    %697 = vmatprep.subr.mxu0 0.0
    %698 = vmatpush1.msra.mxu0 0.0
    %699 = vmatprep.subr.mxu0 0.0
    %700 = vmatpush1.msra.mxu0 0.0
    %701 = vmatprep.mubr.f32.mxu0 0.0
    %702 = vmatmul.mubr.f32.gmra.mrb[0].mxu0 %v635
    %v703 = vpop.f32.mrb[0].mxu0
    %v704 = vadd.f32 %v113, %v703
    %v705 = vpop.f32.mrb[0].mxu0
    %706 = vdwg.mxu0
    %708 = vrot.lane.b32.xlu0 %v193, 120
    %v709 = vpop.permute.xlu0 %708
    %v710 = vsel %vm122, %v193, 0
    %v712 = vsel %vm122, %v709, 0
    %714 = vmatprep.subr.mxu0 0.0
    %715 = vmatpush1.xpose.msra.mxu0 %v712
    %716 = vmatprep.subr.mxu0 0.0
    %717 = vmatpush1.xpose.msra.mxu0 0.0
    %718 = vmatprep.subr.mxu0 0.0
    %719 = vmatpush1.xpose.msra.mxu0 0.0
    %720 = vmatprep.subr.mxu0 0.0
    %721 = vmatpush1.xpose.msra.mxu0 0.0
    %722 = vmatprep.subr.mxu0 0.0
    %723 = vmatpush1.xpose.msra.mxu0 0.0
    %724 = vmatprep.subr.mxu0 0.0
    %725 = vmatpush1.xpose.msra.mxu0 0.0
    %726 = vmatprep.subr.mxu0 0.0
    %727 = vmatpush1.xpose.msra.mxu0 0.0
    %728 = vmatprep.subr.mxu0 0.0
    %729 = vmatpush1.xpose.msra.mxu0 0.0
    %730 = vmatprep.subr.mxu0 0.0
    %731 = vmatpush1.xpose.msra.mxu0 0.0
    %732 = vmatprep.subr.mxu0 0.0
    %733 = vmatpush1.xpose.msra.mxu0 0.0
    %734 = vmatprep.subr.mxu0 0.0
    %735 = vmatpush1.xpose.msra.mxu0 0.0
    %736 = vmatprep.subr.mxu0 0.0
    %737 = vmatpush1.xpose.msra.mxu0 0.0
    %738 = vmatprep.subr.mxu0 0.0
    %739 = vmatpush1.xpose.msra.mxu0 0.0
    %740 = vmatprep.subr.mxu0 0.0
    %741 = vmatpush1.xpose.msra.mxu0 0.0
    %742 = vmatprep.subr.mxu0 0.0
    %743 = vmatpush1.xpose.msra.mxu0 0.0
    %744 = vmatprep.subr.mxu0 0.0
    %745 = vmatpush1.xpose.msra.mxu0 0.0
    %746 = vmatprep.subr.mxu0 0.0
    %747 = vmatpush1.xpose.msra.mxu0 0.0
    %748 = vmatprep.subr.mxu0 0.0
    %749 = vmatpush1.xpose.msra.mxu0 0.0
    %750 = vmatprep.subr.mxu0 0.0
    %751 = vmatpush1.xpose.msra.mxu0 0.0
    %752 = vmatprep.subr.mxu0 0.0
    %753 = vmatpush1.xpose.msra.mxu0 0.0
    %754 = vmatprep.subr.mxu0 0.0
    %755 = vmatpush1.xpose.msra.mxu0 0.0
    %756 = vmatprep.subr.mxu0 0.0
    %757 = vmatpush1.xpose.msra.mxu0 0.0
    %758 = vmatprep.subr.mxu0 0.0
    %759 = vmatpush1.xpose.msra.mxu0 0.0
    %760 = vmatprep.subr.mxu0 0.0
    %761 = vmatpush1.xpose.msra.mxu0 0.0
    %762 = vmatprep.subr.mxu0 0.0
    %763 = vmatpush1.xpose.msra.mxu0 0.0
    %764 = vmatprep.subr.mxu0 0.0
    %765 = vmatpush1.xpose.msra.mxu0 0.0
    %766 = vmatprep.subr.mxu0 0.0
    %767 = vmatpush1.xpose.msra.mxu0 0.0
    %768 = vmatprep.subr.mxu0 0.0
    %769 = vmatpush1.xpose.msra.mxu0 0.0
    %770 = vmatprep.subr.mxu0 0.0
    %771 = vmatpush1.xpose.msra.mxu0 0.0
    %772 = vmatprep.subr.mxu0 0.0
    %773 = vmatpush1.xpose.msra.mxu0 0.0
    %774 = vmatprep.subr.mxu0 0.0
    %775 = vmatpush1.xpose.msra.mxu0 0.0
    %776 = vmatprep.subr.mxu0 0.0
    %777 = vmatpush1.xpose.msra.mxu0 0.0
    %778 = vmatprep.mubr.f32.mxu0 0.0
    %779 = vmatmul.mubr.f32.gmra.mrb[0].mxu0 %v710
    %v780 = vpop.f32.mrb[0].mxu0
    %v781 = vadd.f32 0.0, %v780
    %v782 = vpop.f32.mrb[0].mxu0
    %783 = vdwg.mxu0
    %785 = vrot.lane.b32.xlu0 %v266, 120
    %v786 = vpop.permute.xlu0 %785
    %v787 = vsel %vm122, %v266, 0
    %v789 = vsel %vm122, %v786, 0
    %791 = vmatprep.subr.mxu0 0.0
    %792 = vmatpush1.xpose.msra.mxu0 %v789
    %793 = vmatprep.subr.mxu0 0.0
    %794 = vmatpush1.xpose.msra.mxu0 0.0
    %795 = vmatprep.subr.mxu0 0.0
    %796 = vmatpush1.xpose.msra.mxu0 0.0
    %797 = vmatprep.subr.mxu0 0.0
    %798 = vmatpush1.xpose.msra.mxu0 0.0
    %799 = vmatprep.subr.mxu0 0.0
    %800 = vmatpush1.xpose.msra.mxu0 0.0
    %801 = vmatprep.subr.mxu0 0.0
    %802 = vmatpush1.xpose.msra.mxu0 0.0
    %803 = vmatprep.subr.mxu0 0.0
    %804 = vmatpush1.xpose.msra.mxu0 0.0
    %805 = vmatprep.subr.mxu0 0.0
    %806 = vmatpush1.xpose.msra.mxu0 0.0
    %807 = vmatprep.subr.mxu0 0.0
    %808 = vmatpush1.xpose.msra.mxu0 0.0
    %809 = vmatprep.subr.mxu0 0.0
    %810 = vmatpush1.xpose.msra.mxu0 0.0
    %811 = vmatprep.subr.mxu0 0.0
    %812 = vmatpush1.xpose.msra.mxu0 0.0
    %813 = vmatprep.subr.mxu0 0.0
    %814 = vmatpush1.xpose.msra.mxu0 0.0
    %815 = vmatprep.subr.mxu0 0.0
    %816 = vmatpush1.xpose.msra.mxu0 0.0
    %817 = vmatprep.subr.mxu0 0.0
    %818 = vmatpush1.xpose.msra.mxu0 0.0
    %819 = vmatprep.subr.mxu0 0.0
    %820 = vmatpush1.xpose.msra.mxu0 0.0
    %821 = vmatprep.subr.mxu0 0.0
    %822 = vmatpush1.xpose.msra.mxu0 0.0
    %823 = vmatprep.subr.mxu0 0.0
    %824 = vmatpush1.xpose.msra.mxu0 0.0
    %825 = vmatprep.subr.mxu0 0.0
    %826 = vmatpush1.xpose.msra.mxu0 0.0
    %827 = vmatprep.subr.mxu0 0.0
    %828 = vmatpush1.xpose.msra.mxu0 0.0
    %829 = vmatprep.subr.mxu0 0.0
    %830 = vmatpush1.xpose.msra.mxu0 0.0
    %831 = vmatprep.subr.mxu0 0.0
    %832 = vmatpush1.xpose.msra.mxu0 0.0
    %833 = vmatprep.subr.mxu0 0.0
    %834 = vmatpush1.xpose.msra.mxu0 0.0
    %835 = vmatprep.subr.mxu0 0.0
    %836 = vmatpush1.xpose.msra.mxu0 0.0
    %837 = vmatprep.subr.mxu0 0.0
    %838 = vmatpush1.xpose.msra.mxu0 0.0
    %839 = vmatprep.subr.mxu0 0.0
    %840 = vmatpush1.xpose.msra.mxu0 0.0
    %841 = vmatprep.subr.mxu0 0.0
    %842 = vmatpush1.xpose.msra.mxu0 0.0
    %843 = vmatprep.subr.mxu0 0.0
    %844 = vmatpush1.xpose.msra.mxu0 0.0
    %845 = vmatprep.subr.mxu0 0.0
    %846 = vmatpush1.xpose.msra.mxu0 0.0
    %847 = vmatprep.subr.mxu0 0.0
    %848 = vmatpush1.xpose.msra.mxu0 0.0
    %849 = vmatprep.subr.mxu0 0.0
    %850 = vmatpush1.xpose.msra.mxu0 0.0
    %851 = vmatprep.subr.mxu0 0.0
    %852 = vmatpush1.xpose.msra.mxu0 0.0
    %853 = vmatprep.subr.mxu0 0.0
    %854 = vmatpush1.xpose.msra.mxu0 0.0
    %855 = vmatprep.mubr.f32.mxu0 0.0
    %856 = vmatmul.mubr.f32.gmra.mrb[0].mxu0 %v787
    %v857 = vpop.f32.mrb[0].mxu0
    %v858 = vadd.f32 0.0, %v857
    %v859 = vpop.f32.mrb[0].mxu0
    %860 = vdwg.mxu0
    %862 = vrot.lane.b32.xlu0 %v339, 120
    %v863 = vpop.permute.xlu0 %862
    %v864 = vsel %vm122, %v339, 0
    %v866 = vsel %vm122, %v863, 0
    %868 = vmatprep.subr.mxu0 0.0
    %869 = vmatpush1.xpose.msra.mxu0 %v866
    %870 = vmatprep.subr.mxu0 0.0
    %871 = vmatpush1.xpose.msra.mxu0 0.0
    %872 = vmatprep.subr.mxu0 0.0
    %873 = vmatpush1.xpose.msra.mxu0 0.0
    %874 = vmatprep.subr.mxu0 0.0
    %875 = vmatpush1.xpose.msra.mxu0 0.0
    %876 = vmatprep.subr.mxu0 0.0
    %877 = vmatpush1.xpose.msra.mxu0 0.0
    %878 = vmatprep.subr.mxu0 0.0
    %879 = vmatpush1.xpose.msra.mxu0 0.0
    %880 = vmatprep.subr.mxu0 0.0
    %881 = vmatpush1.xpose.msra.mxu0 0.0
    %882 = vmatprep.subr.mxu0 0.0
    %883 = vmatpush1.xpose.msra.mxu0 0.0
    %884 = vmatprep.subr.mxu0 0.0
    %885 = vmatpush1.xpose.msra.mxu0 0.0
    %886 = vmatprep.subr.mxu0 0.0
    %887 = vmatpush1.xpose.msra.mxu0 0.0
    %888 = vmatprep.subr.mxu0 0.0
    %889 = vmatpush1.xpose.msra.mxu0 0.0
    %890 = vmatprep.subr.mxu0 0.0
    %891 = vmatpush1.xpose.msra.mxu0 0.0
    %892 = vmatprep.subr.mxu0 0.0
    %893 = vmatpush1.xpose.msra.mxu0 0.0
    %894 = vmatprep.subr.mxu0 0.0
    %895 = vmatpush1.xpose.msra.mxu0 0.0
    %896 = vmatprep.subr.mxu0 0.0
    %897 = vmatpush1.xpose.msra.mxu0 0.0
    %898 = vmatprep.subr.mxu0 0.0
    %899 = vmatpush1.xpose.msra.mxu0 0.0
    %900 = vmatprep.subr.mxu0 0.0
    %901 = vmatpush1.xpose.msra.mxu0 0.0
    %902 = vmatprep.subr.mxu0 0.0
    %903 = vmatpush1.xpose.msra.mxu0 0.0
    %904 = vmatprep.subr.mxu0 0.0
    %905 = vmatpush1.xpose.msra.mxu0 0.0
    %906 = vmatprep.subr.mxu0 0.0
    %907 = vmatpush1.xpose.msra.mxu0 0.0
    %908 = vmatprep.subr.mxu0 0.0
    %909 = vmatpush1.xpose.msra.mxu0 0.0
    %910 = vmatprep.subr.mxu0 0.0
    %911 = vmatpush1.xpose.msra.mxu0 0.0
    %912 = vmatprep.subr.mxu0 0.0
    %913 = vmatpush1.xpose.msra.mxu0 0.0
    %914 = vmatprep.subr.mxu0 0.0
    %915 = vmatpush1.xpose.msra.mxu0 0.0
    %916 = vmatprep.subr.mxu0 0.0
    %917 = vmatpush1.xpose.msra.mxu0 0.0
    %918 = vmatprep.subr.mxu0 0.0
    %919 = vmatpush1.xpose.msra.mxu0 0.0
    %920 = vmatprep.subr.mxu0 0.0
    %921 = vmatpush1.xpose.msra.mxu0 0.0
    %922 = vmatprep.subr.mxu0 0.0
    %923 = vmatpush1.xpose.msra.mxu0 0.0
    %924 = vmatprep.subr.mxu0 0.0
    %925 = vmatpush1.xpose.msra.mxu0 0.0
    %926 = vmatprep.subr.mxu0 0.0
    %927 = vmatpush1.xpose.msra.mxu0 0.0
    %928 = vmatprep.subr.mxu0 0.0
    %929 = vmatpush1.xpose.msra.mxu0 0.0
    %930 = vmatprep.subr.mxu0 0.0
    %931 = vmatpush1.xpose.msra.mxu0 0.0
    %932 = vmatprep.mubr.f32.mxu0 0.0
    %933 = vmatmul.mubr.f32.gmra.mrb[0].mxu0 %v864
    %v934 = vpop.f32.mrb[0].mxu0
    %v935 = vadd.f32 0.0, %v934
    %v936 = vpop.f32.mrb[0].mxu0
    %937 = vdwg.mxu0
    %939 = vrot.lane.b32.xlu0 %v412, 120
    %v940 = vpop.permute.xlu0 %939
    %v941 = vsel %vm122, %v412, 0
    %v943 = vsel %vm122, %v940, 0
    %945 = vmatprep.subr.mxu0 0.0
    %946 = vmatpush1.xpose.msra.mxu0 %v943
    %947 = vmatprep.subr.mxu0 0.0
    %948 = vmatpush1.xpose.msra.mxu0 0.0
    %949 = vmatprep.subr.mxu0 0.0
    %950 = vmatpush1.xpose.msra.mxu0 0.0
    %951 = vmatprep.subr.mxu0 0.0
    %952 = vmatpush1.xpose.msra.mxu0 0.0
    %953 = vmatprep.subr.mxu0 0.0
    %954 = vmatpush1.xpose.msra.mxu0 0.0
    %955 = vmatprep.subr.mxu0 0.0
    %956 = vmatpush1.xpose.msra.mxu0 0.0
    %957 = vmatprep.subr.mxu0 0.0
    %958 = vmatpush1.xpose.msra.mxu0 0.0
    %959 = vmatprep.subr.mxu0 0.0
    %960 = vmatpush1.xpose.msra.mxu0 0.0
    %961 = vmatprep.subr.mxu0 0.0
    %962 = vmatpush1.xpose.msra.mxu0 0.0
    %963 = vmatprep.subr.mxu0 0.0
    %964 = vmatpush1.xpose.msra.mxu0 0.0
    %965 = vmatprep.subr.mxu0 0.0
    %966 = vmatpush1.xpose.msra.mxu0 0.0
    %967 = vmatprep.subr.mxu0 0.0
    %968 = vmatpush1.xpose.msra.mxu0 0.0
    %969 = vmatprep.subr.mxu0 0.0
    %970 = vmatpush1.xpose.msra.mxu0 0.0
    %971 = vmatprep.subr.mxu0 0.0
    %972 = vmatpush1.xpose.msra.mxu0 0.0
    %973 = vmatprep.subr.mxu0 0.0
    %974 = vmatpush1.xpose.msra.mxu0 0.0
    %975 = vmatprep.subr.mxu0 0.0
    %976 = vmatpush1.xpose.msra.mxu0 0.0
    %977 = vmatprep.subr.mxu0 0.0
    %978 = vmatpush1.xpose.msra.mxu0 0.0
    %979 = vmatprep.subr.mxu0 0.0
    %980 = vmatpush1.xpose.msra.mxu0 0.0
    %981 = vmatprep.subr.mxu0 0.0
    %982 = vmatpush1.xpose.msra.mxu0 0.0
    %983 = vmatprep.subr.mxu0 0.0
    %984 = vmatpush1.xpose.msra.mxu0 0.0
    %985 = vmatprep.subr.mxu0 0.0
    %986 = vmatpush1.xpose.msra.mxu0 0.0
    %987 = vmatprep.subr.mxu0 0.0
    %988 = vmatpush1.xpose.msra.mxu0 0.0
    %989 = vmatprep.subr.mxu0 0.0
    %990 = vmatpush1.xpose.msra.mxu0 0.0
    %991 = vmatprep.subr.mxu0 0.0
    %992 = vmatpush1.xpose.msra.mxu0 0.0
    %993 = vmatprep.subr.mxu0 0.0
    %994 = vmatpush1.xpose.msra.mxu0 0.0
    %995 = vmatprep.subr.mxu0 0.0
    %996 = vmatpush1.xpose.msra.mxu0 0.0
    %997 = vmatprep.subr.mxu0 0.0
    %998 = vmatpush1.xpose.msra.mxu0 0.0
    %999 = vmatprep.subr.mxu0 0.0
    %1000 = vmatpush1.xpose.msra.mxu0 0.0
    %1001 = vmatprep.subr.mxu0 0.0
    %1002 = vmatpush1.xpose.msra.mxu0 0.0
    %1003 = vmatprep.subr.mxu0 0.0
    %1004 = vmatpush1.xpose.msra.mxu0 0.0
    %1005 = vmatprep.subr.mxu0 0.0
    %1006 = vmatpush1.xpose.msra.mxu0 0.0
    %1007 = vmatprep.subr.mxu0 0.0
    %1008 = vmatpush1.xpose.msra.mxu0 0.0
    %1009 = vmatprep.mubr.f32.mxu0 0.0
    %1010 = vmatmul.mubr.f32.gmra.mrb[0].mxu0 %v941
    %v1011 = vpop.f32.mrb[0].mxu0
    %v1012 = vadd.f32 0.0, %v1011
    %v1013 = vpop.f32.mrb[0].mxu0
    %1014 = vdwg.mxu0
    %1016 = vrot.lane.b32.xlu0 %v485, 120
    %v1017 = vpop.permute.xlu0 %1016
    %v1018 = vsel %vm122, %v485, 0
    %v1020 = vsel %vm122, %v1017, 0
    %1022 = vmatprep.subr.mxu0 0.0
    %1023 = vmatpush1.xpose.msra.mxu0 %v1020
    %1024 = vmatprep.subr.mxu0 0.0
    %1025 = vmatpush1.xpose.msra.mxu0 0.0
    %1026 = vmatprep.subr.mxu0 0.0
    %1027 = vmatpush1.xpose.msra.mxu0 0.0
    %1028 = vmatprep.subr.mxu0 0.0
    %1029 = vmatpush1.xpose.msra.mxu0 0.0
    %1030 = vmatprep.subr.mxu0 0.0
    %1031 = vmatpush1.xpose.msra.mxu0 0.0
    %1032 = vmatprep.subr.mxu0 0.0
    %1033 = vmatpush1.xpose.msra.mxu0 0.0
    %1034 = vmatprep.subr.mxu0 0.0
    %1035 = vmatpush1.xpose.msra.mxu0 0.0
    %1036 = vmatprep.subr.mxu0 0.0
    %1037 = vmatpush1.xpose.msra.mxu0 0.0
    %1038 = vmatprep.subr.mxu0 0.0
    %1039 = vmatpush1.xpose.msra.mxu0 0.0
    %1040 = vmatprep.subr.mxu0 0.0
    %1041 = vmatpush1.xpose.msra.mxu0 0.0
    %1042 = vmatprep.subr.mxu0 0.0
    %1043 = vmatpush1.xpose.msra.mxu0 0.0
    %1044 = vmatprep.subr.mxu0 0.0
    %1045 = vmatpush1.xpose.msra.mxu0 0.0
    %1046 = vmatprep.subr.mxu0 0.0
    %1047 = vmatpush1.xpose.msra.mxu0 0.0
    %1048 = vmatprep.subr.mxu0 0.0
    %1049 = vmatpush1.xpose.msra.mxu0 0.0
    %1050 = vmatprep.subr.mxu0 0.0
    %1051 = vmatpush1.xpose.msra.mxu0 0.0
    %1052 = vmatprep.subr.mxu0 0.0
    %1053 = vmatpush1.xpose.msra.mxu0 0.0
    %1054 = vmatprep.subr.mxu0 0.0
    %1055 = vmatpush1.xpose.msra.mxu0 0.0
    %1056 = vmatprep.subr.mxu0 0.0
    %1057 = vmatpush1.xpose.msra.mxu0 0.0
    %1058 = vmatprep.subr.mxu0 0.0
    %1059 = vmatpush1.xpose.msra.mxu0 0.0
    %1060 = vmatprep.subr.mxu0 0.0
    %1061 = vmatpush1.xpose.msra.mxu0 0.0
    %1062 = vmatprep.subr.mxu0 0.0
    %1063 = vmatpush1.xpose.msra.mxu0 0.0
    %1064 = vmatprep.subr.mxu0 0.0
    %1065 = vmatpush1.xpose.msra.mxu0 0.0
    %1066 = vmatprep.subr.mxu0 0.0
    %1067 = vmatpush1.xpose.msra.mxu0 0.0
    %1068 = vmatprep.subr.mxu0 0.0
    %1069 = vmatpush1.xpose.msra.mxu0 0.0
    %1070 = vmatprep.subr.mxu0 0.0
    %1071 = vmatpush1.xpose.msra.mxu0 0.0
    %1072 = vmatprep.subr.mxu0 0.0
    %1073 = vmatpush1.xpose.msra.mxu0 0.0
    %1074 = vmatprep.subr.mxu0 0.0
    %1075 = vmatpush1.xpose.msra.mxu0 0.0
    %1076 = vmatprep.subr.mxu0 0.0
    %1077 = vmatpush1.xpose.msra.mxu0 0.0
    %1078 = vmatprep.subr.mxu0 0.0
    %1079 = vmatpush1.xpose.msra.mxu0 0.0
    %1080 = vmatprep.subr.mxu0 0.0
    %1081 = vmatpush1.xpose.msra.mxu0 0.0
    %1082 = vmatprep.subr.mxu0 0.0
    %1083 = vmatpush1.xpose.msra.mxu0 0.0
    %1084 = vmatprep.subr.mxu0 0.0
    %1085 = vmatpush1.xpose.msra.mxu0 0.0
    %1086 = vmatprep.mubr.f32.mxu0 0.0
    %1087 = vmatmul.mubr.f32.gmra.mrb[0].mxu0 %v1018
    %v1088 = vpop.f32.mrb[0].mxu0
    %v1089 = vadd.f32 0.0, %v1088
    %v1090 = vpop.f32.mrb[0].mxu0
    %1091 = vdwg.mxu0
    %1093 = vrot.lane.b32.xlu0 %v558, 120
    %v1094 = vpop.permute.xlu0 %1093
    %v1095 = vsel %vm122, %v558, 0
    %v1097 = vsel %vm122, %v1094, 0
    %1099 = vmatprep.subr.mxu0 0.0
    %1100 = vmatpush1.xpose.msra.mxu0 %v1097
    %1101 = vmatprep.subr.mxu0 0.0
    %1102 = vmatpush1.xpose.msra.mxu0 0.0
    %1103 = vmatprep.subr.mxu0 0.0
    %1104 = vmatpush1.xpose.msra.mxu0 0.0
    %1105 = vmatprep.subr.mxu0 0.0
    %1106 = vmatpush1.xpose.msra.mxu0 0.0
    %1107 = vmatprep.subr.mxu0 0.0
    %1108 = vmatpush1.xpose.msra.mxu0 0.0
    %1109 = vmatprep.subr.mxu0 0.0
    %1110 = vmatpush1.xpose.msra.mxu0 0.0
    %1111 = vmatprep.subr.mxu0 0.0
    %1112 = vmatpush1.xpose.msra.mxu0 0.0
    %1113 = vmatprep.subr.mxu0 0.0
    %1114 = vmatpush1.xpose.msra.mxu0 0.0
    %1115 = vmatprep.subr.mxu0 0.0
    %1116 = vmatpush1.xpose.msra.mxu0 0.0
    %1117 = vmatprep.subr.mxu0 0.0
    %1118 = vmatpush1.xpose.msra.mxu0 0.0
    %1119 = vmatprep.subr.mxu0 0.0
    %1120 = vmatpush1.xpose.msra.mxu0 0.0
    %1121 = vmatprep.subr.mxu0 0.0
    %1122 = vmatpush1.xpose.msra.mxu0 0.0
    %1123 = vmatprep.subr.mxu0 0.0
    %1124 = vmatpush1.xpose.msra.mxu0 0.0
    %1125 = vmatprep.subr.mxu0 0.0
    %1126 = vmatpush1.xpose.msra.mxu0 0.0
    %1127 = vmatprep.subr.mxu0 0.0
    %1128 = vmatpush1.xpose.msra.mxu0 0.0
    %1129 = vmatprep.subr.mxu0 0.0
    %1130 = vmatpush1.xpose.msra.mxu0 0.0
    %1131 = vmatprep.subr.mxu0 0.0
    %1132 = vmatpush1.xpose.msra.mxu0 0.0
    %1133 = vmatprep.subr.mxu0 0.0
    %1134 = vmatpush1.xpose.msra.mxu0 0.0
    %1135 = vmatprep.subr.mxu0 0.0
    %1136 = vmatpush1.xpose.msra.mxu0 0.0
    %1137 = vmatprep.subr.mxu0 0.0
    %1138 = vmatpush1.xpose.msra.mxu0 0.0
    %1139 = vmatprep.subr.mxu0 0.0
    %1140 = vmatpush1.xpose.msra.mxu0 0.0
    %1141 = vmatprep.subr.mxu0 0.0
    %1142 = vmatpush1.xpose.msra.mxu0 0.0
    %1143 = vmatprep.subr.mxu0 0.0
    %1144 = vmatpush1.xpose.msra.mxu0 0.0
    %1145 = vmatprep.subr.mxu0 0.0
    %1146 = vmatpush1.xpose.msra.mxu0 0.0
    %1147 = vmatprep.subr.mxu0 0.0
    %1148 = vmatpush1.xpose.msra.mxu0 0.0
    %1149 = vmatprep.subr.mxu0 0.0
    %1150 = vmatpush1.xpose.msra.mxu0 0.0
    %1151 = vmatprep.subr.mxu0 0.0
    %1152 = vmatpush1.xpose.msra.mxu0 0.0
    %1153 = vmatprep.subr.mxu0 0.0
    %1154 = vmatpush1.xpose.msra.mxu0 0.0
    %1155 = vmatprep.subr.mxu0 0.0
    %1156 = vmatpush1.xpose.msra.mxu0 0.0
    %1157 = vmatprep.subr.mxu0 0.0
    %1158 = vmatpush1.xpose.msra.mxu0 0.0
    %1159 = vmatprep.subr.mxu0 0.0
    %1160 = vmatpush1.xpose.msra.mxu0 0.0
    %1161 = vmatprep.subr.mxu0 0.0
    %1162 = vmatpush1.xpose.msra.mxu0 0.0
    %1163 = vmatprep.mubr.f32.mxu0 0.0
    %1164 = vmatmul.mubr.f32.gmra.mrb[0].mxu0 %v1095
    %v1165 = vpop.f32.mrb[0].mxu0
    %v1166 = vadd.f32 0.0, %v1165
    %v1167 = vpop.f32.mrb[0].mxu0
    %1168 = vdwg.mxu0
    %1170 = vrot.lane.b32.xlu0 %v631, 120
    %v1171 = vpop.permute.xlu0 %1170
    %v1172 = vsel %vm122, %v631, 0
    %v1174 = vsel %vm122, %v1171, 0
    %1176 = vmatprep.subr.mxu0 0.0
    %1177 = vmatpush1.xpose.msra.mxu0 %v1174
    %1178 = vmatprep.subr.mxu0 0.0
    %1179 = vmatpush1.xpose.msra.mxu0 0.0
    %1180 = vmatprep.subr.mxu0 0.0
    %1181 = vmatpush1.xpose.msra.mxu0 0.0
    %1182 = vmatprep.subr.mxu0 0.0
    %1183 = vmatpush1.xpose.msra.mxu0 0.0
    %1184 = vmatprep.subr.mxu0 0.0
    %1185 = vmatpush1.xpose.msra.mxu0 0.0
    %1186 = vmatprep.subr.mxu0 0.0
    %1187 = vmatpush1.xpose.msra.mxu0 0.0
    %1188 = vmatprep.subr.mxu0 0.0
    %1189 = vmatpush1.xpose.msra.mxu0 0.0
    %1190 = vmatprep.subr.mxu0 0.0
    %1191 = vmatpush1.xpose.msra.mxu0 0.0
    %1192 = vmatprep.subr.mxu0 0.0
    %1193 = vmatpush1.xpose.msra.mxu0 0.0
    %1194 = vmatprep.subr.mxu0 0.0
    %1195 = vmatpush1.xpose.msra.mxu0 0.0
    %1196 = vmatprep.subr.mxu0 0.0
    %1197 = vmatpush1.xpose.msra.mxu0 0.0
    %1198 = vmatprep.subr.mxu0 0.0
    %1199 = vmatpush1.xpose.msra.mxu0 0.0
    %1200 = vmatprep.subr.mxu0 0.0
    %1201 = vmatpush1.xpose.msra.mxu0 0.0
    %1202 = vmatprep.subr.mxu0 0.0
    %1203 = vmatpush1.xpose.msra.mxu0 0.0
    %1204 = vmatprep.subr.mxu0 0.0
    %1205 = vmatpush1.xpose.msra.mxu0 0.0
    %1206 = vmatprep.subr.mxu0 0.0
    %1207 = vmatpush1.xpose.msra.mxu0 0.0
    %1208 = vmatprep.subr.mxu0 0.0
    %1209 = vmatpush1.xpose.msra.mxu0 0.0
    %1210 = vmatprep.subr.mxu0 0.0
    %1211 = vmatpush1.xpose.msra.mxu0 0.0
    %1212 = vmatprep.subr.mxu0 0.0
    %1213 = vmatpush1.xpose.msra.mxu0 0.0
    %1214 = vmatprep.subr.mxu0 0.0
    %1215 = vmatpush1.xpose.msra.mxu0 0.0
    %1216 = vmatprep.subr.mxu0 0.0
    %1217 = vmatpush1.xpose.msra.mxu0 0.0
    %1218 = vmatprep.subr.mxu0 0.0
    %1219 = vmatpush1.xpose.msra.mxu0 0.0
    %1220 = vmatprep.subr.mxu0 0.0
    %1221 = vmatpush1.xpose.msra.mxu0 0.0
    %1222 = vmatprep.subr.mxu0 0.0
    %1223 = vmatpush1.xpose.msra.mxu0 0.0
    %1224 = vmatprep.subr.mxu0 0.0
    %1225 = vmatpush1.xpose.msra.mxu0 0.0
    %1226 = vmatprep.subr.mxu0 0.0
    %1227 = vmatpush1.xpose.msra.mxu0 0.0
    %1228 = vmatprep.subr.mxu0 0.0
    %1229 = vmatpush1.xpose.msra.mxu0 0.0
    %1230 = vmatprep.subr.mxu0 0.0
    %1231 = vmatpush1.xpose.msra.mxu0 0.0
    %1232 = vmatprep.subr.mxu0 0.0
    %1233 = vmatpush1.xpose.msra.mxu0 0.0
    %1234 = vmatprep.subr.mxu0 0.0
    %1235 = vmatpush1.xpose.msra.mxu0 0.0
    %1236 = vmatprep.subr.mxu0 0.0
    %1237 = vmatpush1.xpose.msra.mxu0 0.0
    %1238 = vmatprep.subr.mxu0 0.0
    %1239 = vmatpush1.xpose.msra.mxu0 0.0
    %1240 = vmatprep.mubr.f32.mxu0 0.0
    %1241 = vmatmul.mubr.f32.gmra.mrb[0].mxu0 %v1172
    %v1242 = vpop.f32.mrb[0].mxu0
    %v1243 = vadd.f32 0.0, %v1242
    %v1244 = vpop.f32.mrb[0].mxu0
    %1245 = vdwg.mxu0
    %1247 = vrot.lane.b32.xlu0 %v704, 120
    %v1248 = vpop.permute.xlu0 %1247
    %v1249 = vsel %vm122, %v704, 0
    %v1251 = vsel %vm122, %v1248, 0
    %1253 = vmatprep.subr.mxu0 0.0
    %1254 = vmatpush1.xpose.msra.mxu0 %v1251
    %1255 = vmatprep.subr.mxu0 0.0
    %1256 = vmatpush1.xpose.msra.mxu0 0.0
    %1257 = vmatprep.subr.mxu0 0.0
    %1258 = vmatpush1.xpose.msra.mxu0 0.0
    %1259 = vmatprep.subr.mxu0 0.0
    %1260 = vmatpush1.xpose.msra.mxu0 0.0
    %1261 = vmatprep.subr.mxu0 0.0
    %1262 = vmatpush1.xpose.msra.mxu0 0.0
    %1263 = vmatprep.subr.mxu0 0.0
    %1264 = vmatpush1.xpose.msra.mxu0 0.0
    %1265 = vmatprep.subr.mxu0 0.0
    %1266 = vmatpush1.xpose.msra.mxu0 0.0
    %1267 = vmatprep.subr.mxu0 0.0
    %1268 = vmatpush1.xpose.msra.mxu0 0.0
    %1269 = vmatprep.subr.mxu0 0.0
    %1270 = vmatpush1.xpose.msra.mxu0 0.0
    %1271 = vmatprep.subr.mxu0 0.0
    %1272 = vmatpush1.xpose.msra.mxu0 0.0
    %1273 = vmatprep.subr.mxu0 0.0
    %1274 = vmatpush1.xpose.msra.mxu0 0.0
    %1275 = vmatprep.subr.mxu0 0.0
    %1276 = vmatpush1.xpose.msra.mxu0 0.0
    %1277 = vmatprep.subr.mxu0 0.0
    %1278 = vmatpush1.xpose.msra.mxu0 0.0
    %1279 = vmatprep.subr.mxu0 0.0
    %1280 = vmatpush1.xpose.msra.mxu0 0.0
    %1281 = vmatprep.subr.mxu0 0.0
    %1282 = vmatpush1.xpose.msra.mxu0 0.0
    %1283 = vmatprep.subr.mxu0 0.0
    %1284 = vmatpush1.xpose.msra.mxu0 0.0
    %1285 = vmatprep.subr.mxu0 0.0
    %1286 = vmatpush1.xpose.msra.mxu0 0.0
    %1287 = vmatprep.subr.mxu0 0.0
    %1288 = vmatpush1.xpose.msra.mxu0 0.0
    %1289 = vmatprep.subr.mxu0 0.0
    %1290 = vmatpush1.xpose.msra.mxu0 0.0
    %1291 = vmatprep.subr.mxu0 0.0
    %1292 = vmatpush1.xpose.msra.mxu0 0.0
    %1293 = vmatprep.subr.mxu0 0.0
    %1294 = vmatpush1.xpose.msra.mxu0 0.0
    %1295 = vmatprep.subr.mxu0 0.0
    %1296 = vmatpush1.xpose.msra.mxu0 0.0
    %1297 = vmatprep.subr.mxu0 0.0
    %1298 = vmatpush1.xpose.msra.mxu0 0.0
    %1299 = vmatprep.subr.mxu0 0.0
    %1300 = vmatpush1.xpose.msra.mxu0 0.0
    %1301 = vmatprep.subr.mxu0 0.0
    %1302 = vmatpush1.xpose.msra.mxu0 0.0
    %1303 = vmatprep.subr.mxu0 0.0
    %1304 = vmatpush1.xpose.msra.mxu0 0.0
    %1305 = vmatprep.subr.mxu0 0.0
    %1306 = vmatpush1.xpose.msra.mxu0 0.0
    %1307 = vmatprep.subr.mxu0 0.0
    %1308 = vmatpush1.xpose.msra.mxu0 0.0
    %1309 = vmatprep.subr.mxu0 0.0
    %1310 = vmatpush1.xpose.msra.mxu0 0.0
    %1311 = vmatprep.subr.mxu0 0.0
    %1312 = vmatpush1.xpose.msra.mxu0 0.0
    %1313 = vmatprep.subr.mxu0 0.0
    %1314 = vmatpush1.xpose.msra.mxu0 0.0
    %1315 = vmatprep.subr.mxu0 0.0
    %1316 = vmatpush1.xpose.msra.mxu0 0.0
    %1317 = vmatprep.mubr.f32.mxu0 0.0
    %1318 = vmatmul.mubr.f32.gmra.mrb[0].mxu0 %v1249
    %v1319 = vpop.f32.mrb[0].mxu0
    %v1320 = vadd.f32 0.0, %v1319
    %v1321 = vpop.f32.mrb[0].mxu0
    %1322 = vdwg.mxu0
    %v1323 = vmul.f32 %v781, 0.35355338
    %v1324 = vmul.f32 %v858, 0.35355338
    %v1325 = vmul.f32 %v935, 0.35355338
    %v1326 = vmul.f32 %v1012, 0.35355338
    %v1327 = vmul.f32 %v1089, 0.35355338
    %v1328 = vmul.f32 %v1166, 0.35355338
    %v1329 = vmul.f32 %v1243, 0.35355338
    %v1330 = vmul.f32 %v1320, 0.35355338
    %v1331 = vsel %vm122, %v1323, -inf
    %1332 = vmax.xlane.f32.xlu0 %v1331
    %v1333 = vpop.xlane.xlu0 %1332
    %v1334 = vsel %vm122, %v1324, -inf
    %1335 = vmax.xlane.f32.xlu0 %v1334
    %v1336 = vpop.xlane.xlu0 %1335
    %v1337 = vsel %vm122, %v1325, -inf
    %1338 = vmax.xlane.f32.xlu0 %v1337
    %v1339 = vpop.xlane.xlu0 %1338
    %v1340 = vsel %vm122, %v1326, -inf
    %1341 = vmax.xlane.f32.xlu0 %v1340
    %v1342 = vpop.xlane.xlu0 %1341
    %v1343 = vsel %vm122, %v1327, -inf
    %1344 = vmax.xlane.f32.xlu0 %v1343
    %v1345 = vpop.xlane.xlu0 %1344
    %v1346 = vsel %vm122, %v1328, -inf
    %1347 = vmax.xlane.f32.xlu0 %v1346
    %v1348 = vpop.xlane.xlu0 %1347
    %v1349 = vsel %vm122, %v1329, -inf
    %1350 = vmax.xlane.f32.xlu0 %v1349
    %v1351 = vpop.xlane.xlu0 %1350
    %v1352 = vsel %vm122, %v1330, -inf
    %1353 = vmax.xlane.f32.xlu0 %v1352
    %v1354 = vpop.xlane.xlu0 %1353
    %v1355 = vsub.f32 %v1323, %v1333
    %v1356 = vsub.f32 %v1324, %v1336
    %v1357 = vsub.f32 %v1325, %v1339
    %v1358 = vsub.f32 %v1326, %v1342
    %v1359 = vsub.f32 %v1327, %v1345
    %v1360 = vsub.f32 %v1328, %v1348
    %v1361 = vsub.f32 %v1329, %v1351
    %v1362 = vsub.f32 %v1330, %v1354
    %v1363 = vmul.f32 %v1355, 1.442695
    %v1364 = vpow.pop %v1363
    %v1365 = vmul.f32 %v1356, 1.442695
    %v1366 = vpow.pop %v1365
    %v1367 = vmul.f32 %v1357, 1.442695
    %v1368 = vpow.pop %v1367
    %v1369 = vmul.f32 %v1358, 1.442695
    %v1370 = vpow.pop %v1369
    %v1371 = vmul.f32 %v1359, 1.442695
    %v1372 = vpow.pop %v1371
    %v1373 = vmul.f32 %v1360, 1.442695
    %v1374 = vpow.pop %v1373
    %v1375 = vmul.f32 %v1361, 1.442695
    %v1376 = vpow.pop %v1375
    %v1377 = vmul.f32 %v1362, 1.442695
    %v1378 = vpow.pop %v1377
    %v1379 = vsel %vm122, %v1364, 0.0
    %1380 = vadd.xlane.f32.xlu0 %v1379
    %v1381 = vpop.xlane.xlu0 %1380
    %v1382 = vsel %vm122, %v1366, 0.0
    %1383 = vadd.xlane.f32.xlu0 %v1382
    %v1384 = vpop.xlane.xlu0 %1383
    %v1385 = vsel %vm122, %v1368, 0.0
    %1386 = vadd.xlane.f32.xlu0 %v1385
    %v1387 = vpop.xlane.xlu0 %1386
    %v1388 = vsel %vm122, %v1370, 0.0
    %1389 = vadd.xlane.f32.xlu0 %v1388
    %v1390 = vpop.xlane.xlu0 %1389
    %v1391 = vsel %vm122, %v1372, 0.0
    %1392 = vadd.xlane.f32.xlu0 %v1391
    %v1393 = vpop.xlane.xlu0 %1392
    %v1394 = vsel %vm122, %v1374, 0.0
    %1395 = vadd.xlane.f32.xlu0 %v1394
    %v1396 = vpop.xlane.xlu0 %1395
    %v1397 = vsel %vm122, %v1376, 0.0
    %1398 = vadd.xlane.f32.xlu0 %v1397
    %v1399 = vpop.xlane.xlu0 %1398
    %v1400 = vsel %vm122, %v1378, 0.0
    %1401 = vadd.xlane.f32.xlu0 %v1400
    %v1402 = vpop.xlane.xlu0 %1401
    %v1403 = vrcp.pop %v1381
    %v1404 = vrcp.pop %v1384
    %v1405 = vrcp.pop %v1387
    %v1406 = vrcp.pop %v1390
    %v1407 = vrcp.pop %v1393
    %v1408 = vrcp.pop %v1396
    %v1409 = vrcp.pop %v1399
    %v1410 = vrcp.pop %v1402
    %v1411 = vmul.f32 %v1381, %v1403
    %v1412 = vmul.f32 %v1384, %v1404
    %v1413 = vmul.f32 %v1387, %v1405
    %v1414 = vmul.f32 %v1390, %v1406
    %v1415 = vmul.f32 %v1393, %v1407
    %v1416 = vmul.f32 %v1396, %v1408
    %v1417 = vmul.f32 %v1399, %v1409
    %v1418 = vmul.f32 %v1402, %v1410
    %v1419 = vsub.f32 2.0, %v1411
    %v1420 = vsub.f32 2.0, %v1412
    %v1421 = vsub.f32 2.0, %v1413
    %v1422 = vsub.f32 2.0, %v1414
    %v1423 = vsub.f32 2.0, %v1415
    %v1424 = vsub.f32 2.0, %v1416
    %v1425 = vsub.f32 2.0, %v1417
    %v1426 = vsub.f32 2.0, %v1418
    %v1427 = vmul.f32 %v1403, %v1419
    %v1428 = vmul.f32 %v1404, %v1420
    %v1429 = vmul.f32 %v1405, %v1421
    %v1430 = vmul.f32 %v1406, %v1422
    %v1431 = vmul.f32 %v1407, %v1423
    %v1432 = vmul.f32 %v1408, %v1424
    %v1433 = vmul.f32 %v1409, %v1425
    %v1434 = vmul.f32 %v1410, %v1426
    %v1435 = vmul.f32 %v1364, %v1427
    %v1436 = vmul.f32 %v1366, %v1428
    %v1437 = vmul.f32 %v1368, %v1429
    %v1438 = vmul.f32 %v1370, %v1430
    %v1439 = vmul.f32 %v1372, %v1431
    %v1440 = vmul.f32 %v1374, %v1432
    %v1441 = vmul.f32 %v1376, %v1433
    %v1442 = vmul.f32 %v1378, %v1434
    %1443 = vrot.lane.b32.xlu0 %v193, 112
    %v1444 = vpop.permute.xlu0 %1443
    %v1447 = vsel %vm122, %v1435, 0
    %1449 = vmatprep.subr.mxu0 0.0
    %1450 = vmatpush1.msra.mxu0 %v1444
    %1451 = vmatprep.subr.mxu0 0.0
    %1452 = vmatpush1.msra.mxu0 0.0
    %1453 = vmatprep.subr.mxu0 0.0
    %1454 = vmatpush1.msra.mxu0 0.0
    %1455 = vmatprep.subr.mxu0 0.0
    %1456 = vmatpush1.msra.mxu0 0.0
    %1457 = vmatprep.subr.mxu0 0.0
    %1458 = vmatpush1.msra.mxu0 0.0
    %1459 = vmatprep.subr.mxu0 0.0
    %1460 = vmatpush1.msra.mxu0 0.0
    %1461 = vmatprep.subr.mxu0 0.0
    %1462 = vmatpush1.msra.mxu0 0.0
    %1463 = vmatprep.subr.mxu0 0.0
    %1464 = vmatpush1.msra.mxu0 0.0
    %1465 = vmatprep.subr.mxu0 0.0
    %1466 = vmatpush1.msra.mxu0 0.0
    %1467 = vmatprep.subr.mxu0 0.0
    %1468 = vmatpush1.msra.mxu0 0.0
    %1469 = vmatprep.subr.mxu0 0.0
    %1470 = vmatpush1.msra.mxu0 0.0
    %1471 = vmatprep.subr.mxu0 0.0
    %1472 = vmatpush1.msra.mxu0 0.0
    %1473 = vmatprep.subr.mxu0 0.0
    %1474 = vmatpush1.msra.mxu0 0.0
    %1475 = vmatprep.subr.mxu0 0.0
    %1476 = vmatpush1.msra.mxu0 0.0
    %1477 = vmatprep.subr.mxu0 0.0
    %1478 = vmatpush1.msra.mxu0 0.0
    %1479 = vmatprep.subr.mxu0 0.0
    %1480 = vmatpush1.msra.mxu0 0.0
    %1481 = vmatprep.subr.mxu0 0.0
    %1482 = vmatpush1.msra.mxu0 0.0
    %1483 = vmatprep.subr.mxu0 0.0
    %1484 = vmatpush1.msra.mxu0 0.0
    %1485 = vmatprep.subr.mxu0 0.0
    %1486 = vmatpush1.msra.mxu0 0.0
    %1487 = vmatprep.subr.mxu0 0.0
    %1488 = vmatpush1.msra.mxu0 0.0
    %1489 = vmatprep.subr.mxu0 0.0
    %1490 = vmatpush1.msra.mxu0 0.0
    %1491 = vmatprep.subr.mxu0 0.0
    %1492 = vmatpush1.msra.mxu0 0.0
    %1493 = vmatprep.subr.mxu0 0.0
    %1494 = vmatpush1.msra.mxu0 0.0
    %1495 = vmatprep.subr.mxu0 0.0
    %1496 = vmatpush1.msra.mxu0 0.0
    %1497 = vmatprep.subr.mxu0 0.0
    %1498 = vmatpush1.msra.mxu0 0.0
    %1499 = vmatprep.subr.mxu0 0.0
    %1500 = vmatpush1.msra.mxu0 0.0
    %1501 = vmatprep.subr.mxu0 0.0
    %1502 = vmatpush1.msra.mxu0 0.0
    %1503 = vmatprep.subr.mxu0 0.0
    %1504 = vmatpush1.msra.mxu0 0.0
    %1505 = vmatprep.subr.mxu0 0.0
    %1506 = vmatpush1.msra.mxu0 0.0
    %1507 = vmatprep.subr.mxu0 0.0
    %1508 = vmatpush1.msra.mxu0 0.0
    %1509 = vmatprep.subr.mxu0 0.0
    %1510 = vmatpush1.msra.mxu0 0.0
    %1511 = vmatprep.subr.mxu0 0.0
    %1512 = vmatpush1.msra.mxu0 0.0
    %1513 = vmatprep.mubr.f32.mxu0 0.0
    %1514 = vmatmul.mubr.f32.gmra.mrb[0].mxu0 %v1447
    %v1515 = vpop.f32.mrb[0].mxu0
    %v1516 = vadd.f32 0.0, %v1515
    %v1517 = vpop.f32.mrb[0].mxu0
    %1518 = vdwg.mxu0
    %1519 = vrot.lane.b32.xlu0 %v266, 112
    %v1520 = vpop.permute.xlu0 %1519
    %v1523 = vsel %vm122, %v1436, 0
    %1525 = vmatprep.subr.mxu0 0.0
    %1526 = vmatpush1.msra.mxu0 %v1520
    %1527 = vmatprep.subr.mxu0 0.0
    %1528 = vmatpush1.msra.mxu0 0.0
    %1529 = vmatprep.subr.mxu0 0.0
    %1530 = vmatpush1.msra.mxu0 0.0
    %1531 = vmatprep.subr.mxu0 0.0
    %1532 = vmatpush1.msra.mxu0 0.0
    %1533 = vmatprep.subr.mxu0 0.0
    %1534 = vmatpush1.msra.mxu0 0.0
    %1535 = vmatprep.subr.mxu0 0.0
    %1536 = vmatpush1.msra.mxu0 0.0
    %1537 = vmatprep.subr.mxu0 0.0
    %1538 = vmatpush1.msra.mxu0 0.0
    %1539 = vmatprep.subr.mxu0 0.0
    %1540 = vmatpush1.msra.mxu0 0.0
    %1541 = vmatprep.subr.mxu0 0.0
    %1542 = vmatpush1.msra.mxu0 0.0
    %1543 = vmatprep.subr.mxu0 0.0
    %1544 = vmatpush1.msra.mxu0 0.0
    %1545 = vmatprep.subr.mxu0 0.0
    %1546 = vmatpush1.msra.mxu0 0.0
    %1547 = vmatprep.subr.mxu0 0.0
    %1548 = vmatpush1.msra.mxu0 0.0
    %1549 = vmatprep.subr.mxu0 0.0
    %1550 = vmatpush1.msra.mxu0 0.0
    %1551 = vmatprep.subr.mxu0 0.0
    %1552 = vmatpush1.msra.mxu0 0.0
    %1553 = vmatprep.subr.mxu0 0.0
    %1554 = vmatpush1.msra.mxu0 0.0
    %1555 = vmatprep.subr.mxu0 0.0
    %1556 = vmatpush1.msra.mxu0 0.0
    %1557 = vmatprep.subr.mxu0 0.0
    %1558 = vmatpush1.msra.mxu0 0.0
    %1559 = vmatprep.subr.mxu0 0.0
    %1560 = vmatpush1.msra.mxu0 0.0
    %1561 = vmatprep.subr.mxu0 0.0
    %1562 = vmatpush1.msra.mxu0 0.0
    %1563 = vmatprep.subr.mxu0 0.0
    %1564 = vmatpush1.msra.mxu0 0.0
    %1565 = vmatprep.subr.mxu0 0.0
    %1566 = vmatpush1.msra.mxu0 0.0
    %1567 = vmatprep.subr.mxu0 0.0
    %1568 = vmatpush1.msra.mxu0 0.0
    %1569 = vmatprep.subr.mxu0 0.0
    %1570 = vmatpush1.msra.mxu0 0.0
    %1571 = vmatprep.subr.mxu0 0.0
    %1572 = vmatpush1.msra.mxu0 0.0
    %1573 = vmatprep.subr.mxu0 0.0
    %1574 = vmatpush1.msra.mxu0 0.0
    %1575 = vmatprep.subr.mxu0 0.0
    %1576 = vmatpush1.msra.mxu0 0.0
    %1577 = vmatprep.subr.mxu0 0.0
    %1578 = vmatpush1.msra.mxu0 0.0
    %1579 = vmatprep.subr.mxu0 0.0
    %1580 = vmatpush1.msra.mxu0 0.0
    %1581 = vmatprep.subr.mxu0 0.0
    %1582 = vmatpush1.msra.mxu0 0.0
    %1583 = vmatprep.subr.mxu0 0.0
    %1584 = vmatpush1.msra.mxu0 0.0
    %1585 = vmatprep.subr.mxu0 0.0
    %1586 = vmatpush1.msra.mxu0 0.0
    %1587 = vmatprep.subr.mxu0 0.0
    %1588 = vmatpush1.msra.mxu0 0.0
    %1589 = vmatprep.mubr.f32.mxu0 0.0
    %1590 = vmatmul.mubr.f32.gmra.mrb[0].mxu0 %v1523
    %v1591 = vpop.f32.mrb[0].mxu0
    %v1592 = vadd.f32 0.0, %v1591
    %v1593 = vpop.f32.mrb[0].mxu0
    %1594 = vdwg.mxu0
    %1595 = vrot.lane.b32.xlu0 %v339, 112
    %v1596 = vpop.permute.xlu0 %1595
    %v1599 = vsel %vm122, %v1437, 0
    %1601 = vmatprep.subr.mxu0 0.0
    %1602 = vmatpush1.msra.mxu0 %v1596
    %1603 = vmatprep.subr.mxu0 0.0
    %1604 = vmatpush1.msra.mxu0 0.0
    %1605 = vmatprep.subr.mxu0 0.0
    %1606 = vmatpush1.msra.mxu0 0.0
    %1607 = vmatprep.subr.mxu0 0.0
    %1608 = vmatpush1.msra.mxu0 0.0
    %1609 = vmatprep.subr.mxu0 0.0
    %1610 = vmatpush1.msra.mxu0 0.0
    %1611 = vmatprep.subr.mxu0 0.0
    %1612 = vmatpush1.msra.mxu0 0.0
    %1613 = vmatprep.subr.mxu0 0.0
    %1614 = vmatpush1.msra.mxu0 0.0
    %1615 = vmatprep.subr.mxu0 0.0
    %1616 = vmatpush1.msra.mxu0 0.0
    %1617 = vmatprep.subr.mxu0 0.0
    %1618 = vmatpush1.msra.mxu0 0.0
    %1619 = vmatprep.subr.mxu0 0.0
    %1620 = vmatpush1.msra.mxu0 0.0
    %1621 = vmatprep.subr.mxu0 0.0
    %1622 = vmatpush1.msra.mxu0 0.0
    %1623 = vmatprep.subr.mxu0 0.0
    %1624 = vmatpush1.msra.mxu0 0.0
    %1625 = vmatprep.subr.mxu0 0.0
    %1626 = vmatpush1.msra.mxu0 0.0
    %1627 = vmatprep.subr.mxu0 0.0
    %1628 = vmatpush1.msra.mxu0 0.0
    %1629 = vmatprep.subr.mxu0 0.0
    %1630 = vmatpush1.msra.mxu0 0.0
    %1631 = vmatprep.subr.mxu0 0.0
    %1632 = vmatpush1.msra.mxu0 0.0
    %1633 = vmatprep.subr.mxu0 0.0
    %1634 = vmatpush1.msra.mxu0 0.0
    %1635 = vmatprep.subr.mxu0 0.0
    %1636 = vmatpush1.msra.mxu0 0.0
    %1637 = vmatprep.subr.mxu0 0.0
    %1638 = vmatpush1.msra.mxu0 0.0
    %1639 = vmatprep.subr.mxu0 0.0
    %1640 = vmatpush1.msra.mxu0 0.0
    %1641 = vmatprep.subr.mxu0 0.0
    %1642 = vmatpush1.msra.mxu0 0.0
    %1643 = vmatprep.subr.mxu0 0.0
    %1644 = vmatpush1.msra.mxu0 0.0
    %1645 = vmatprep.subr.mxu0 0.0
    %1646 = vmatpush1.msra.mxu0 0.0
    %1647 = vmatprep.subr.mxu0 0.0
    %1648 = vmatpush1.msra.mxu0 0.0
    %1649 = vmatprep.subr.mxu0 0.0
    %1650 = vmatpush1.msra.mxu0 0.0
    %1651 = vmatprep.subr.mxu0 0.0
    %1652 = vmatpush1.msra.mxu0 0.0
    %1653 = vmatprep.subr.mxu0 0.0
    %1654 = vmatpush1.msra.mxu0 0.0
    %1655 = vmatprep.subr.mxu0 0.0
    %1656 = vmatpush1.msra.mxu0 0.0
    %1657 = vmatprep.subr.mxu0 0.0
    %1658 = vmatpush1.msra.mxu0 0.0
    %1659 = vmatprep.subr.mxu0 0.0
    %1660 = vmatpush1.msra.mxu0 0.0
    %1661 = vmatprep.subr.mxu0 0.0
    %1662 = vmatpush1.msra.mxu0 0.0
    %1663 = vmatprep.subr.mxu0 0.0
    %1664 = vmatpush1.msra.mxu0 0.0
    %1665 = vmatprep.mubr.f32.mxu0 0.0
    %1666 = vmatmul.mubr.f32.gmra.mrb[0].mxu0 %v1599
    %v1667 = vpop.f32.mrb[0].mxu0
    %v1668 = vadd.f32 0.0, %v1667
    %v1669 = vpop.f32.mrb[0].mxu0
    %1670 = vdwg.mxu0
    %1671 = vrot.lane.b32.xlu0 %v412, 112
    %v1672 = vpop.permute.xlu0 %1671
    %v1675 = vsel %vm122, %v1438, 0
    %1677 = vmatprep.subr.mxu0 0.0
    %1678 = vmatpush1.msra.mxu0 %v1672
    %1679 = vmatprep.subr.mxu0 0.0
    %1680 = vmatpush1.msra.mxu0 0.0
    %1681 = vmatprep.subr.mxu0 0.0
    %1682 = vmatpush1.msra.mxu0 0.0
    %1683 = vmatprep.subr.mxu0 0.0
    %1684 = vmatpush1.msra.mxu0 0.0
    %1685 = vmatprep.subr.mxu0 0.0
    %1686 = vmatpush1.msra.mxu0 0.0
    %1687 = vmatprep.subr.mxu0 0.0
    %1688 = vmatpush1.msra.mxu0 0.0
    %1689 = vmatprep.subr.mxu0 0.0
    %1690 = vmatpush1.msra.mxu0 0.0
    %1691 = vmatprep.subr.mxu0 0.0
    %1692 = vmatpush1.msra.mxu0 0.0
    %1693 = vmatprep.subr.mxu0 0.0
    %1694 = vmatpush1.msra.mxu0 0.0
    %1695 = vmatprep.subr.mxu0 0.0
    %1696 = vmatpush1.msra.mxu0 0.0
    %1697 = vmatprep.subr.mxu0 0.0
    %1698 = vmatpush1.msra.mxu0 0.0
    %1699 = vmatprep.subr.mxu0 0.0
    %1700 = vmatpush1.msra.mxu0 0.0
    %1701 = vmatprep.subr.mxu0 0.0
    %1702 = vmatpush1.msra.mxu0 0.0
    %1703 = vmatprep.subr.mxu0 0.0
    %1704 = vmatpush1.msra.mxu0 0.0
    %1705 = vmatprep.subr.mxu0 0.0
    %1706 = vmatpush1.msra.mxu0 0.0
    %1707 = vmatprep.subr.mxu0 0.0
    %1708 = vmatpush1.msra.mxu0 0.0
    %1709 = vmatprep.subr.mxu0 0.0
    %1710 = vmatpush1.msra.mxu0 0.0
    %1711 = vmatprep.subr.mxu0 0.0
    %1712 = vmatpush1.msra.mxu0 0.0
    %1713 = vmatprep.subr.mxu0 0.0
    %1714 = vmatpush1.msra.mxu0 0.0
    %1715 = vmatprep.subr.mxu0 0.0
    %1716 = vmatpush1.msra.mxu0 0.0
    %1717 = vmatprep.subr.mxu0 0.0
    %1718 = vmatpush1.msra.mxu0 0.0
    %1719 = vmatprep.subr.mxu0 0.0
    %1720 = vmatpush1.msra.mxu0 0.0
    %1721 = vmatprep.subr.mxu0 0.0
    %1722 = vmatpush1.msra.mxu0 0.0
    %1723 = vmatprep.subr.mxu0 0.0
    %1724 = vmatpush1.msra.mxu0 0.0
    %1725 = vmatprep.subr.mxu0 0.0
    %1726 = vmatpush1.msra.mxu0 0.0
    %1727 = vmatprep.subr.mxu0 0.0
    %1728 = vmatpush1.msra.mxu0 0.0
    %1729 = vmatprep.subr.mxu0 0.0
    %1730 = vmatpush1.msra.mxu0 0.0
    %1731 = vmatprep.subr.mxu0 0.0
    %1732 = vmatpush1.msra.mxu0 0.0
    %1733 = vmatprep.subr.mxu0 0.0
    %1734 = vmatpush1.msra.mxu0 0.0
    %1735 = vmatprep.subr.mxu0 0.0
    %1736 = vmatpush1.msra.mxu0 0.0
    %1737 = vmatprep.subr.mxu0 0.0
    %1738 = vmatpush1.msra.mxu0 0.0
    %1739 = vmatprep.subr.mxu0 0.0
    %1740 = vmatpush1.msra.mxu0 0.0
    %1741 = vmatprep.mubr.f32.mxu0 0.0
    %1742 = vmatmul.mubr.f32.gmra.mrb[0].mxu0 %v1675
    %v1743 = vpop.f32.mrb[0].mxu0
    %v1744 = vadd.f32 0.0, %v1743
    %v1745 = vpop.f32.mrb[0].mxu0
    %1746 = vdwg.mxu0
    %1747 = vrot.lane.b32.xlu0 %v485, 112
    %v1748 = vpop.permute.xlu0 %1747
    %v1751 = vsel %vm122, %v1439, 0
    %1753 = vmatprep.subr.mxu0 0.0
    %1754 = vmatpush1.msra.mxu0 %v1748
    %1755 = vmatprep.subr.mxu0 0.0
    %1756 = vmatpush1.msra.mxu0 0.0
    %1757 = vmatprep.subr.mxu0 0.0
    %1758 = vmatpush1.msra.mxu0 0.0
    %1759 = vmatprep.subr.mxu0 0.0
    %1760 = vmatpush1.msra.mxu0 0.0
    %1761 = vmatprep.subr.mxu0 0.0
    %1762 = vmatpush1.msra.mxu0 0.0
    %1763 = vmatprep.subr.mxu0 0.0
    %1764 = vmatpush1.msra.mxu0 0.0
    %1765 = vmatprep.subr.mxu0 0.0
    %1766 = vmatpush1.msra.mxu0 0.0
    %1767 = vmatprep.subr.mxu0 0.0
    %1768 = vmatpush1.msra.mxu0 0.0
    %1769 = vmatprep.subr.mxu0 0.0
    %1770 = vmatpush1.msra.mxu0 0.0
    %1771 = vmatprep.subr.mxu0 0.0
    %1772 = vmatpush1.msra.mxu0 0.0
    %1773 = vmatprep.subr.mxu0 0.0
    %1774 = vmatpush1.msra.mxu0 0.0
    %1775 = vmatprep.subr.mxu0 0.0
    %1776 = vmatpush1.msra.mxu0 0.0
    %1777 = vmatprep.subr.mxu0 0.0
    %1778 = vmatpush1.msra.mxu0 0.0
    %1779 = vmatprep.subr.mxu0 0.0
    %1780 = vmatpush1.msra.mxu0 0.0
    %1781 = vmatprep.subr.mxu0 0.0
    %1782 = vmatpush1.msra.mxu0 0.0
    %1783 = vmatprep.subr.mxu0 0.0
    %1784 = vmatpush1.msra.mxu0 0.0
    %1785 = vmatprep.subr.mxu0 0.0
    %1786 = vmatpush1.msra.mxu0 0.0
    %1787 = vmatprep.subr.mxu0 0.0
    %1788 = vmatpush1.msra.mxu0 0.0
    %1789 = vmatprep.subr.mxu0 0.0
    %1790 = vmatpush1.msra.mxu0 0.0
    %1791 = vmatprep.subr.mxu0 0.0
    %1792 = vmatpush1.msra.mxu0 0.0
    %1793 = vmatprep.subr.mxu0 0.0
    %1794 = vmatpush1.msra.mxu0 0.0
    %1795 = vmatprep.subr.mxu0 0.0
    %1796 = vmatpush1.msra.mxu0 0.0
    %1797 = vmatprep.subr.mxu0 0.0
    %1798 = vmatpush1.msra.mxu0 0.0
    %1799 = vmatprep.subr.mxu0 0.0
    %1800 = vmatpush1.msra.mxu0 0.0
    %1801 = vmatprep.subr.mxu0 0.0
    %1802 = vmatpush1.msra.mxu0 0.0
    %1803 = vmatprep.subr.mxu0 0.0
    %1804 = vmatpush1.msra.mxu0 0.0
    %1805 = vmatprep.subr.mxu0 0.0
    %1806 = vmatpush1.msra.mxu0 0.0
    %1807 = vmatprep.subr.mxu0 0.0
    %1808 = vmatpush1.msra.mxu0 0.0
    %1809 = vmatprep.subr.mxu0 0.0
    %1810 = vmatpush1.msra.mxu0 0.0
    %1811 = vmatprep.subr.mxu0 0.0
    %1812 = vmatpush1.msra.mxu0 0.0
    %1813 = vmatprep.subr.mxu0 0.0
    %1814 = vmatpush1.msra.mxu0 0.0
    %1815 = vmatprep.subr.mxu0 0.0
    %1816 = vmatpush1.msra.mxu0 0.0
    %1817 = vmatprep.mubr.f32.mxu0 0.0
    %1818 = vmatmul.mubr.f32.gmra.mrb[0].mxu0 %v1751
    %v1819 = vpop.f32.mrb[0].mxu0
    %v1820 = vadd.f32 0.0, %v1819
    %v1821 = vpop.f32.mrb[0].mxu0
    %1822 = vdwg.mxu0
    %1823 = vrot.lane.b32.xlu0 %v558, 112
    %v1824 = vpop.permute.xlu0 %1823
    %v1827 = vsel %vm122, %v1440, 0
    %1829 = vmatprep.subr.mxu0 0.0
    %1830 = vmatpush1.msra.mxu0 %v1824
    %1831 = vmatprep.subr.mxu0 0.0
    %1832 = vmatpush1.msra.mxu0 0.0
    %1833 = vmatprep.subr.mxu0 0.0
    %1834 = vmatpush1.msra.mxu0 0.0
    %1835 = vmatprep.subr.mxu0 0.0
    %1836 = vmatpush1.msra.mxu0 0.0
    %1837 = vmatprep.subr.mxu0 0.0
    %1838 = vmatpush1.msra.mxu0 0.0
    %1839 = vmatprep.subr.mxu0 0.0
    %1840 = vmatpush1.msra.mxu0 0.0
    %1841 = vmatprep.subr.mxu0 0.0
    %1842 = vmatpush1.msra.mxu0 0.0
    %1843 = vmatprep.subr.mxu0 0.0
    %1844 = vmatpush1.msra.mxu0 0.0
    %1845 = vmatprep.subr.mxu0 0.0
    %1846 = vmatpush1.msra.mxu0 0.0
    %1847 = vmatprep.subr.mxu0 0.0
    %1848 = vmatpush1.msra.mxu0 0.0
    %1849 = vmatprep.subr.mxu0 0.0
    %1850 = vmatpush1.msra.mxu0 0.0
    %1851 = vmatprep.subr.mxu0 0.0
    %1852 = vmatpush1.msra.mxu0 0.0
    %1853 = vmatprep.subr.mxu0 0.0
    %1854 = vmatpush1.msra.mxu0 0.0
    %1855 = vmatprep.subr.mxu0 0.0
    %1856 = vmatpush1.msra.mxu0 0.0
    %1857 = vmatprep.subr.mxu0 0.0
    %1858 = vmatpush1.msra.mxu0 0.0
    %1859 = vmatprep.subr.mxu0 0.0
    %1860 = vmatpush1.msra.mxu0 0.0
    %1861 = vmatprep.subr.mxu0 0.0
    %1862 = vmatpush1.msra.mxu0 0.0
    %1863 = vmatprep.subr.mxu0 0.0
    %1864 = vmatpush1.msra.mxu0 0.0
    %1865 = vmatprep.subr.mxu0 0.0
    %1866 = vmatpush1.msra.mxu0 0.0
    %1867 = vmatprep.subr.mxu0 0.0
    %1868 = vmatpush1.msra.mxu0 0.0
    %1869 = vmatprep.subr.mxu0 0.0
    %1870 = vmatpush1.msra.mxu0 0.0
    %1871 = vmatprep.subr.mxu0 0.0
    %1872 = vmatpush1.msra.mxu0 0.0
    %1873 = vmatprep.subr.mxu0 0.0
    %1874 = vmatpush1.msra.mxu0 0.0
    %1875 = vmatprep.subr.mxu0 0.0
    %1876 = vmatpush1.msra.mxu0 0.0
    %1877 = vmatprep.subr.mxu0 0.0
    %1878 = vmatpush1.msra.mxu0 0.0
    %1879 = vmatprep.subr.mxu0 0.0
    %1880 = vmatpush1.msra.mxu0 0.0
    %1881 = vmatprep.subr.mxu0 0.0
    %1882 = vmatpush1.msra.mxu0 0.0
    %1883 = vmatprep.subr.mxu0 0.0
    %1884 = vmatpush1.msra.mxu0 0.0
    %1885 = vmatprep.subr.mxu0 0.0
    %1886 = vmatpush1.msra.mxu0 0.0
    %1887 = vmatprep.subr.mxu0 0.0
    %1888 = vmatpush1.msra.mxu0 0.0
    %1889 = vmatprep.subr.mxu0 0.0
    %1890 = vmatpush1.msra.mxu0 0.0
    %1891 = vmatprep.subr.mxu0 0.0
    %1892 = vmatpush1.msra.mxu0 0.0
    %1893 = vmatprep.mubr.f32.mxu0 0.0
    %1894 = vmatmul.mubr.f32.gmra.mrb[0].mxu0 %v1827
    %v1895 = vpop.f32.mrb[0].mxu0
    %v1896 = vadd.f32 0.0, %v1895
    %v1897 = vpop.f32.mrb[0].mxu0
    %1898 = vdwg.mxu0
    %1899 = vrot.lane.b32.xlu0 %v631, 112
    %v1900 = vpop.permute.xlu0 %1899
    %v1903 = vsel %vm122, %v1441, 0
    %1905 = vmatprep.subr.mxu0 0.0
    %1906 = vmatpush1.msra.mxu0 %v1900
    %1907 = vmatprep.subr.mxu0 0.0
    %1908 = vmatpush1.msra.mxu0 0.0
    %1909 = vmatprep.subr.mxu0 0.0
    %1910 = vmatpush1.msra.mxu0 0.0
    %1911 = vmatprep.subr.mxu0 0.0
    %1912 = vmatpush1.msra.mxu0 0.0
    %1913 = vmatprep.subr.mxu0 0.0
    %1914 = vmatpush1.msra.mxu0 0.0
    %1915 = vmatprep.subr.mxu0 0.0
    %1916 = vmatpush1.msra.mxu0 0.0
    %1917 = vmatprep.subr.mxu0 0.0
    %1918 = vmatpush1.msra.mxu0 0.0
    %1919 = vmatprep.subr.mxu0 0.0
    %1920 = vmatpush1.msra.mxu0 0.0
    %1921 = vmatprep.subr.mxu0 0.0
    %1922 = vmatpush1.msra.mxu0 0.0
    %1923 = vmatprep.subr.mxu0 0.0
    %1924 = vmatpush1.msra.mxu0 0.0
    %1925 = vmatprep.subr.mxu0 0.0
    %1926 = vmatpush1.msra.mxu0 0.0
    %1927 = vmatprep.subr.mxu0 0.0
    %1928 = vmatpush1.msra.mxu0 0.0
    %1929 = vmatprep.subr.mxu0 0.0
    %1930 = vmatpush1.msra.mxu0 0.0
    %1931 = vmatprep.subr.mxu0 0.0
    %1932 = vmatpush1.msra.mxu0 0.0
    %1933 = vmatprep.subr.mxu0 0.0
    %1934 = vmatpush1.msra.mxu0 0.0
    %1935 = vmatprep.subr.mxu0 0.0
    %1936 = vmatpush1.msra.mxu0 0.0
    %1937 = vmatprep.subr.mxu0 0.0
    %1938 = vmatpush1.msra.mxu0 0.0
    %1939 = vmatprep.subr.mxu0 0.0
    %1940 = vmatpush1.msra.mxu0 0.0
    %1941 = vmatprep.subr.mxu0 0.0
    %1942 = vmatpush1.msra.mxu0 0.0
    %1943 = vmatprep.subr.mxu0 0.0
    %1944 = vmatpush1.msra.mxu0 0.0
    %1945 = vmatprep.subr.mxu0 0.0
    %1946 = vmatpush1.msra.mxu0 0.0
    %1947 = vmatprep.subr.mxu0 0.0
    %1948 = vmatpush1.msra.mxu0 0.0
    %1949 = vmatprep.subr.mxu0 0.0
    %1950 = vmatpush1.msra.mxu0 0.0
    %1951 = vmatprep.subr.mxu0 0.0
    %1952 = vmatpush1.msra.mxu0 0.0
    %1953 = vmatprep.subr.mxu0 0.0
    %1954 = vmatpush1.msra.mxu0 0.0
    %1955 = vmatprep.subr.mxu0 0.0
    %1956 = vmatpush1.msra.mxu0 0.0
    %1957 = vmatprep.subr.mxu0 0.0
    %1958 = vmatpush1.msra.mxu0 0.0
    %1959 = vmatprep.subr.mxu0 0.0
    %1960 = vmatpush1.msra.mxu0 0.0
    %1961 = vmatprep.subr.mxu0 0.0
    %1962 = vmatpush1.msra.mxu0 0.0
    %1963 = vmatprep.subr.mxu0 0.0
    %1964 = vmatpush1.msra.mxu0 0.0
    %1965 = vmatprep.subr.mxu0 0.0
    %1966 = vmatpush1.msra.mxu0 0.0
    %1967 = vmatprep.subr.mxu0 0.0
    %1968 = vmatpush1.msra.mxu0 0.0
    %1969 = vmatprep.mubr.f32.mxu0 0.0
    %1970 = vmatmul.mubr.f32.gmra.mrb[0].mxu0 %v1903
    %v1971 = vpop.f32.mrb[0].mxu0
    %v1972 = vadd.f32 0.0, %v1971
    %v1973 = vpop.f32.mrb[0].mxu0
    %1974 = vdwg.mxu0
    %1975 = vrot.lane.b32.xlu0 %v704, 112
    %v1976 = vpop.permute.xlu0 %1975
    %v1979 = vsel %vm122, %v1442, 0
    %1981 = vmatprep.subr.mxu0 0.0
    %1982 = vmatpush1.msra.mxu0 %v1976
    %1983 = vmatprep.subr.mxu0 0.0
    %1984 = vmatpush1.msra.mxu0 0.0
    %1985 = vmatprep.subr.mxu0 0.0
    %1986 = vmatpush1.msra.mxu0 0.0
    %1987 = vmatprep.subr.mxu0 0.0
    %1988 = vmatpush1.msra.mxu0 0.0
    %1989 = vmatprep.subr.mxu0 0.0
    %1990 = vmatpush1.msra.mxu0 0.0
    %1991 = vmatprep.subr.mxu0 0.0
    %1992 = vmatpush1.msra.mxu0 0.0
    %1993 = vmatprep.subr.mxu0 0.0
    %1994 = vmatpush1.msra.mxu0 0.0
    %1995 = vmatprep.subr.mxu0 0.0
    %1996 = vmatpush1.msra.mxu0 0.0
    %1997 = vmatprep.subr.mxu0 0.0
    %1998 = vmatpush1.msra.mxu0 0.0
    %1999 = vmatprep.subr.mxu0 0.0
    %2000 = vmatpush1.msra.mxu0 0.0
    %2001 = vmatprep.subr.mxu0 0.0
    %2002 = vmatpush1.msra.mxu0 0.0
    %2003 = vmatprep.subr.mxu0 0.0
    %2004 = vmatpush1.msra.mxu0 0.0
    %2005 = vmatprep.subr.mxu0 0.0
    %2006 = vmatpush1.msra.mxu0 0.0
    %2007 = vmatprep.subr.mxu0 0.0
    %2008 = vmatpush1.msra.mxu0 0.0
    %2009 = vmatprep.subr.mxu0 0.0
    %2010 = vmatpush1.msra.mxu0 0.0
    %2011 = vmatprep.subr.mxu0 0.0
    %2012 = vmatpush1.msra.mxu0 0.0
    %2013 = vmatprep.subr.mxu0 0.0
    %2014 = vmatpush1.msra.mxu0 0.0
    %2015 = vmatprep.subr.mxu0 0.0
    %2016 = vmatpush1.msra.mxu0 0.0
    %2017 = vmatprep.subr.mxu0 0.0
    %2018 = vmatpush1.msra.mxu0 0.0
    %2019 = vmatprep.subr.mxu0 0.0
    %2020 = vmatpush1.msra.mxu0 0.0
    %2021 = vmatprep.subr.mxu0 0.0
    %2022 = vmatpush1.msra.mxu0 0.0
    %2023 = vmatprep.subr.mxu0 0.0
    %2024 = vmatpush1.msra.mxu0 0.0
    %2025 = vmatprep.subr.mxu0 0.0
    %2026 = vmatpush1.msra.mxu0 0.0
    %2027 = vmatprep.subr.mxu0 0.0
    %2028 = vmatpush1.msra.mxu0 0.0
    %2029 = vmatprep.subr.mxu0 0.0
    %2030 = vmatpush1.msra.mxu0 0.0
    %2031 = vmatprep.subr.mxu0 0.0
    %2032 = vmatpush1.msra.mxu0 0.0
    %2033 = vmatprep.subr.mxu0 0.0
    %2034 = vmatpush1.msra.mxu0 0.0
    %2035 = vmatprep.subr.mxu0 0.0
    %2036 = vmatpush1.msra.mxu0 0.0
    %2037 = vmatprep.subr.mxu0 0.0
    %2038 = vmatpush1.msra.mxu0 0.0
    %2039 = vmatprep.subr.mxu0 0.0
    %2040 = vmatpush1.msra.mxu0 0.0
    %2041 = vmatprep.subr.mxu0 0.0
    %2042 = vmatpush1.msra.mxu0 0.0
    %2043 = vmatprep.subr.mxu0 0.0
    %2044 = vmatpush1.msra.mxu0 0.0
    %2045 = vmatprep.mubr.f32.mxu0 0.0
    %2046 = vmatmul.mubr.f32.gmra.mrb[0].mxu0 %v1979
    %v2047 = vpop.f32.mrb[0].mxu0
    %v2048 = vadd.f32 0.0, %v2047
    %v2049 = vpop.f32.mrb[0].mxu0
    %2050 = vdwg.mxu0
    %v2051 = vld [vmem:[%s4] sm:$0xff]
    %v2052 = vld [vmem:[%s4 + $0x8] sm:$0xff]
    %v2053 = vld [vmem:[%s4 + $0x10] sm:$0xff]
    %v2054 = vld [vmem:[%s4 + $0x18] sm:$0xff]
    %v2055 = vld [vmem:[%s4 + $0x20] sm:$0xff]
    %v2056 = vld [vmem:[%s4 + $0x28] sm:$0xff]
    %v2057 = vld [vmem:[%s4 + $0x30] sm:$0xff]
    %v2058 = vld [vmem:[%s4 + $0x38] sm:$0xff]
    %v2060 = vsel %vm122, %v1516, 0
    %2062 = vmatprep.subr.mxu0 0.0
    %2063 = vmatpush1.msra.mxu0 %v2051
    %2064 = vmatprep.subr.mxu0 0.0
    %2065 = vmatpush1.msra.mxu0 0.0
    %2066 = vmatprep.subr.mxu0 0.0
    %2067 = vmatpush1.msra.mxu0 0.0
    %2068 = vmatprep.subr.mxu0 0.0
    %2069 = vmatpush1.msra.mxu0 0.0
    %2070 = vmatprep.subr.mxu0 0.0
    %2071 = vmatpush1.msra.mxu0 0.0
    %2072 = vmatprep.subr.mxu0 0.0
    %2073 = vmatpush1.msra.mxu0 0.0
    %2074 = vmatprep.subr.mxu0 0.0
    %2075 = vmatpush1.msra.mxu0 0.0
    %2076 = vmatprep.subr.mxu0 0.0
    %2077 = vmatpush1.msra.mxu0 0.0
    %2078 = vmatprep.subr.mxu0 0.0
    %2079 = vmatpush1.msra.mxu0 0.0
    %2080 = vmatprep.subr.mxu0 0.0
    %2081 = vmatpush1.msra.mxu0 0.0
    %2082 = vmatprep.subr.mxu0 0.0
    %2083 = vmatpush1.msra.mxu0 0.0
    %2084 = vmatprep.subr.mxu0 0.0
    %2085 = vmatpush1.msra.mxu0 0.0
    %2086 = vmatprep.subr.mxu0 0.0
    %2087 = vmatpush1.msra.mxu0 0.0
    %2088 = vmatprep.subr.mxu0 0.0
    %2089 = vmatpush1.msra.mxu0 0.0
    %2090 = vmatprep.subr.mxu0 0.0
    %2091 = vmatpush1.msra.mxu0 0.0
    %2092 = vmatprep.subr.mxu0 0.0
    %2093 = vmatpush1.msra.mxu0 0.0
    %2094 = vmatprep.subr.mxu0 0.0
    %2095 = vmatpush1.msra.mxu0 0.0
    %2096 = vmatprep.subr.mxu0 0.0
    %2097 = vmatpush1.msra.mxu0 0.0
    %2098 = vmatprep.subr.mxu0 0.0
    %2099 = vmatpush1.msra.mxu0 0.0
    %2100 = vmatprep.subr.mxu0 0.0
    %2101 = vmatpush1.msra.mxu0 0.0
    %2102 = vmatprep.subr.mxu0 0.0
    %2103 = vmatpush1.msra.mxu0 0.0
    %2104 = vmatprep.subr.mxu0 0.0
    %2105 = vmatpush1.msra.mxu0 0.0
    %2106 = vmatprep.subr.mxu0 0.0
    %2107 = vmatpush1.msra.mxu0 0.0
    %2108 = vmatprep.subr.mxu0 0.0
    %2109 = vmatpush1.msra.mxu0 0.0
    %2110 = vmatprep.subr.mxu0 0.0
    %2111 = vmatpush1.msra.mxu0 0.0
    %2112 = vmatprep.subr.mxu0 0.0
    %2113 = vmatpush1.msra.mxu0 0.0
    %2114 = vmatprep.subr.mxu0 0.0
    %2115 = vmatpush1.msra.mxu0 0.0
    %2116 = vmatprep.subr.mxu0 0.0
    %2117 = vmatpush1.msra.mxu0 0.0
    %2118 = vmatprep.subr.mxu0 0.0
    %2119 = vmatpush1.msra.mxu0 0.0
    %2120 = vmatprep.subr.mxu0 0.0
    %2121 = vmatpush1.msra.mxu0 0.0
    %2122 = vmatprep.subr.mxu0 0.0
    %2123 = vmatpush1.msra.mxu0 0.0
    %2124 = vmatprep.subr.mxu0 0.0
    %2125 = vmatpush1.msra.mxu0 0.0
    %2126 = vmatprep.mubr.f32.mxu0 0.0
    %2127 = vmatmul.mubr.f32.gmra.mrb[0].mxu0 %v2060
    %v2128 = vpop.f32.mrb[0].mxu0
    %v2129 = vadd.f32 0.0, %v2128
    %v2130 = vpop.f32.mrb[0].mxu0
    %2131 = vdwg.mxu0
    %v2133 = vsel %vm122, %v1592, 0
    %2135 = vmatprep.subr.mxu0 0.0
    %2136 = vmatpush1.msra.mxu0 %v2052
    %2137 = vmatprep.subr.mxu0 0.0
    %2138 = vmatpush1.msra.mxu0 0.0
    %2139 = vmatprep.subr.mxu0 0.0
    %2140 = vmatpush1.msra.mxu0 0.0
    %2141 = vmatprep.subr.mxu0 0.0
    %2142 = vmatpush1.msra.mxu0 0.0
    %2143 = vmatprep.subr.mxu0 0.0
    %2144 = vmatpush1.msra.mxu0 0.0
    %2145 = vmatprep.subr.mxu0 0.0
    %2146 = vmatpush1.msra.mxu0 0.0
    %2147 = vmatprep.subr.mxu0 0.0
    %2148 = vmatpush1.msra.mxu0 0.0
    %2149 = vmatprep.subr.mxu0 0.0
    %2150 = vmatpush1.msra.mxu0 0.0
    %2151 = vmatprep.subr.mxu0 0.0
    %2152 = vmatpush1.msra.mxu0 0.0
    %2153 = vmatprep.subr.mxu0 0.0
    %2154 = vmatpush1.msra.mxu0 0.0
    %2155 = vmatprep.subr.mxu0 0.0
    %2156 = vmatpush1.msra.mxu0 0.0
    %2157 = vmatprep.subr.mxu0 0.0
    %2158 = vmatpush1.msra.mxu0 0.0
    %2159 = vmatprep.subr.mxu0 0.0
    %2160 = vmatpush1.msra.mxu0 0.0
    %2161 = vmatprep.subr.mxu0 0.0
    %2162 = vmatpush1.msra.mxu0 0.0
    %2163 = vmatprep.subr.mxu0 0.0
    %2164 = vmatpush1.msra.mxu0 0.0
    %2165 = vmatprep.subr.mxu0 0.0
    %2166 = vmatpush1.msra.mxu0 0.0
    %2167 = vmatprep.subr.mxu0 0.0
    %2168 = vmatpush1.msra.mxu0 0.0
    %2169 = vmatprep.subr.mxu0 0.0
    %2170 = vmatpush1.msra.mxu0 0.0
    %2171 = vmatprep.subr.mxu0 0.0
    %2172 = vmatpush1.msra.mxu0 0.0
    %2173 = vmatprep.subr.mxu0 0.0
    %2174 = vmatpush1.msra.mxu0 0.0
    %2175 = vmatprep.subr.mxu0 0.0
    %2176 = vmatpush1.msra.mxu0 0.0
    %2177 = vmatprep.subr.mxu0 0.0
    %2178 = vmatpush1.msra.mxu0 0.0
    %2179 = vmatprep.subr.mxu0 0.0
    %2180 = vmatpush1.msra.mxu0 0.0
    %2181 = vmatprep.subr.mxu0 0.0
    %2182 = vmatpush1.msra.mxu0 0.0
    %2183 = vmatprep.subr.mxu0 0.0
    %2184 = vmatpush1.msra.mxu0 0.0
    %2185 = vmatprep.subr.mxu0 0.0
    %2186 = vmatpush1.msra.mxu0 0.0
    %2187 = vmatprep.subr.mxu0 0.0
    %2188 = vmatpush1.msra.mxu0 0.0
    %2189 = vmatprep.subr.mxu0 0.0
    %2190 = vmatpush1.msra.mxu0 0.0
    %2191 = vmatprep.subr.mxu0 0.0
    %2192 = vmatpush1.msra.mxu0 0.0
    %2193 = vmatprep.subr.mxu0 0.0
    %2194 = vmatpush1.msra.mxu0 0.0
    %2195 = vmatprep.subr.mxu0 0.0
    %2196 = vmatpush1.msra.mxu0 0.0
    %2197 = vmatprep.subr.mxu0 0.0
    %2198 = vmatpush1.msra.mxu0 0.0
    %2199 = vmatprep.mubr.f32.mxu0 0.0
    %2200 = vmatmul.mubr.f32.gmra.mrb[0].mxu0 %v2133
    %v2201 = vpop.f32.mrb[0].mxu0
    %v2202 = vadd.f32 0.0, %v2201
    %v2203 = vpop.f32.mrb[0].mxu0
    %2204 = vdwg.mxu0
    %v2206 = vsel %vm122, %v1668, 0
    %2208 = vmatprep.subr.mxu0 0.0
    %2209 = vmatpush1.msra.mxu0 %v2053
    %2210 = vmatprep.subr.mxu0 0.0
    %2211 = vmatpush1.msra.mxu0 0.0
    %2212 = vmatprep.subr.mxu0 0.0
    %2213 = vmatpush1.msra.mxu0 0.0
    %2214 = vmatprep.subr.mxu0 0.0
    %2215 = vmatpush1.msra.mxu0 0.0
    %2216 = vmatprep.subr.mxu0 0.0
    %2217 = vmatpush1.msra.mxu0 0.0
    %2218 = vmatprep.subr.mxu0 0.0
    %2219 = vmatpush1.msra.mxu0 0.0
    %2220 = vmatprep.subr.mxu0 0.0
    %2221 = vmatpush1.msra.mxu0 0.0
    %2222 = vmatprep.subr.mxu0 0.0
    %2223 = vmatpush1.msra.mxu0 0.0
    %2224 = vmatprep.subr.mxu0 0.0
    %2225 = vmatpush1.msra.mxu0 0.0
    %2226 = vmatprep.subr.mxu0 0.0
    %2227 = vmatpush1.msra.mxu0 0.0
    %2228 = vmatprep.subr.mxu0 0.0
    %2229 = vmatpush1.msra.mxu0 0.0
    %2230 = vmatprep.subr.mxu0 0.0
    %2231 = vmatpush1.msra.mxu0 0.0
    %2232 = vmatprep.subr.mxu0 0.0
    %2233 = vmatpush1.msra.mxu0 0.0
    %2234 = vmatprep.subr.mxu0 0.0
    %2235 = vmatpush1.msra.mxu0 0.0
    %2236 = vmatprep.subr.mxu0 0.0
    %2237 = vmatpush1.msra.mxu0 0.0
    %2238 = vmatprep.subr.mxu0 0.0
    %2239 = vmatpush1.msra.mxu0 0.0
    %2240 = vmatprep.subr.mxu0 0.0
    %2241 = vmatpush1.msra.mxu0 0.0
    %2242 = vmatprep.subr.mxu0 0.0
    %2243 = vmatpush1.msra.mxu0 0.0
    %2244 = vmatprep.subr.mxu0 0.0
    %2245 = vmatpush1.msra.mxu0 0.0
    %2246 = vmatprep.subr.mxu0 0.0
    %2247 = vmatpush1.msra.mxu0 0.0
    %2248 = vmatprep.subr.mxu0 0.0
    %2249 = vmatpush1.msra.mxu0 0.0
    %2250 = vmatprep.subr.mxu0 0.0
    %2251 = vmatpush1.msra.mxu0 0.0
    %2252 = vmatprep.subr.mxu0 0.0
    %2253 = vmatpush1.msra.mxu0 0.0
    %2254 = vmatprep.subr.mxu0 0.0
    %2255 = vmatpush1.msra.mxu0 0.0
    %2256 = vmatprep.subr.mxu0 0.0
    %2257 = vmatpush1.msra.mxu0 0.0
    %2258 = vmatprep.subr.mxu0 0.0
    %2259 = vmatpush1.msra.mxu0 0.0
    %2260 = vmatprep.subr.mxu0 0.0
    %2261 = vmatpush1.msra.mxu0 0.0
    %2262 = vmatprep.subr.mxu0 0.0
    %2263 = vmatpush1.msra.mxu0 0.0
    %2264 = vmatprep.subr.mxu0 0.0
    %2265 = vmatpush1.msra.mxu0 0.0
    %2266 = vmatprep.subr.mxu0 0.0
    %2267 = vmatpush1.msra.mxu0 0.0
    %2268 = vmatprep.subr.mxu0 0.0
    %2269 = vmatpush1.msra.mxu0 0.0
    %2270 = vmatprep.subr.mxu0 0.0
    %2271 = vmatpush1.msra.mxu0 0.0
    %2272 = vmatprep.mubr.f32.mxu0 0.0
    %2273 = vmatmul.mubr.f32.gmra.mrb[0].mxu0 %v2206
    %v2274 = vpop.f32.mrb[0].mxu0
    %v2275 = vadd.f32 0.0, %v2274
    %v2276 = vpop.f32.mrb[0].mxu0
    %2277 = vdwg.mxu0
    %v2279 = vsel %vm122, %v1744, 0
    %2281 = vmatprep.subr.mxu0 0.0
    %2282 = vmatpush1.msra.mxu0 %v2054
    %2283 = vmatprep.subr.mxu0 0.0
    %2284 = vmatpush1.msra.mxu0 0.0
    %2285 = vmatprep.subr.mxu0 0.0
    %2286 = vmatpush1.msra.mxu0 0.0
    %2287 = vmatprep.subr.mxu0 0.0
    %2288 = vmatpush1.msra.mxu0 0.0
    %2289 = vmatprep.subr.mxu0 0.0
    %2290 = vmatpush1.msra.mxu0 0.0
    %2291 = vmatprep.subr.mxu0 0.0
    %2292 = vmatpush1.msra.mxu0 0.0
    %2293 = vmatprep.subr.mxu0 0.0
    %2294 = vmatpush1.msra.mxu0 0.0
    %2295 = vmatprep.subr.mxu0 0.0
    %2296 = vmatpush1.msra.mxu0 0.0
    %2297 = vmatprep.subr.mxu0 0.0
    %2298 = vmatpush1.msra.mxu0 0.0
    %2299 = vmatprep.subr.mxu0 0.0
    %2300 = vmatpush1.msra.mxu0 0.0
    %2301 = vmatprep.subr.mxu0 0.0
    %2302 = vmatpush1.msra.mxu0 0.0
    %2303 = vmatprep.subr.mxu0 0.0
    %2304 = vmatpush1.msra.mxu0 0.0
    %2305 = vmatprep.subr.mxu0 0.0
    %2306 = vmatpush1.msra.mxu0 0.0
    %2307 = vmatprep.subr.mxu0 0.0
    %2308 = vmatpush1.msra.mxu0 0.0
    %2309 = vmatprep.subr.mxu0 0.0
    %2310 = vmatpush1.msra.mxu0 0.0
    %2311 = vmatprep.subr.mxu0 0.0
    %2312 = vmatpush1.msra.mxu0 0.0
    %2313 = vmatprep.subr.mxu0 0.0
    %2314 = vmatpush1.msra.mxu0 0.0
    %2315 = vmatprep.subr.mxu0 0.0
    %2316 = vmatpush1.msra.mxu0 0.0
    %2317 = vmatprep.subr.mxu0 0.0
    %2318 = vmatpush1.msra.mxu0 0.0
    %2319 = vmatprep.subr.mxu0 0.0
    %2320 = vmatpush1.msra.mxu0 0.0
    %2321 = vmatprep.subr.mxu0 0.0
    %2322 = vmatpush1.msra.mxu0 0.0
    %2323 = vmatprep.subr.mxu0 0.0
    %2324 = vmatpush1.msra.mxu0 0.0
    %2325 = vmatprep.subr.mxu0 0.0
    %2326 = vmatpush1.msra.mxu0 0.0
    %2327 = vmatprep.subr.mxu0 0.0
    %2328 = vmatpush1.msra.mxu0 0.0
    %2329 = vmatprep.subr.mxu0 0.0
    %2330 = vmatpush1.msra.mxu0 0.0
    %2331 = vmatprep.subr.mxu0 0.0
    %2332 = vmatpush1.msra.mxu0 0.0
    %2333 = vmatprep.subr.mxu0 0.0
    %2334 = vmatpush1.msra.mxu0 0.0
    %2335 = vmatprep.subr.mxu0 0.0
    %2336 = vmatpush1.msra.mxu0 0.0
    %2337 = vmatprep.subr.mxu0 0.0
    %2338 = vmatpush1.msra.mxu0 0.0
    %2339 = vmatprep.subr.mxu0 0.0
    %2340 = vmatpush1.msra.mxu0 0.0
    %2341 = vmatprep.subr.mxu0 0.0
    %2342 = vmatpush1.msra.mxu0 0.0
    %2343 = vmatprep.subr.mxu0 0.0
    %2344 = vmatpush1.msra.mxu0 0.0
    %2345 = vmatprep.mubr.f32.mxu0 0.0
    %2346 = vmatmul.mubr.f32.gmra.mrb[0].mxu0 %v2279
    %v2347 = vpop.f32.mrb[0].mxu0
    %v2348 = vadd.f32 0.0, %v2347
    %v2349 = vpop.f32.mrb[0].mxu0
    %2350 = vdwg.mxu0
    %v2352 = vsel %vm122, %v1820, 0
    %2354 = vmatprep.subr.mxu0 0.0
    %2355 = vmatpush1.msra.mxu0 %v2055
    %2356 = vmatprep.subr.mxu0 0.0
    %2357 = vmatpush1.msra.mxu0 0.0
    %2358 = vmatprep.subr.mxu0 0.0
    %2359 = vmatpush1.msra.mxu0 0.0
    %2360 = vmatprep.subr.mxu0 0.0
    %2361 = vmatpush1.msra.mxu0 0.0
    %2362 = vmatprep.subr.mxu0 0.0
    %2363 = vmatpush1.msra.mxu0 0.0
    %2364 = vmatprep.subr.mxu0 0.0
    %2365 = vmatpush1.msra.mxu0 0.0
    %2366 = vmatprep.subr.mxu0 0.0
    %2367 = vmatpush1.msra.mxu0 0.0
    %2368 = vmatprep.subr.mxu0 0.0
    %2369 = vmatpush1.msra.mxu0 0.0
    %2370 = vmatprep.subr.mxu0 0.0
    %2371 = vmatpush1.msra.mxu0 0.0
    %2372 = vmatprep.subr.mxu0 0.0
    %2373 = vmatpush1.msra.mxu0 0.0
    %2374 = vmatprep.subr.mxu0 0.0
    %2375 = vmatpush1.msra.mxu0 0.0
    %2376 = vmatprep.subr.mxu0 0.0
    %2377 = vmatpush1.msra.mxu0 0.0
    %2378 = vmatprep.subr.mxu0 0.0
    %2379 = vmatpush1.msra.mxu0 0.0
    %2380 = vmatprep.subr.mxu0 0.0
    %2381 = vmatpush1.msra.mxu0 0.0
    %2382 = vmatprep.subr.mxu0 0.0
    %2383 = vmatpush1.msra.mxu0 0.0
    %2384 = vmatprep.subr.mxu0 0.0
    %2385 = vmatpush1.msra.mxu0 0.0
    %2386 = vmatprep.subr.mxu0 0.0
    %2387 = vmatpush1.msra.mxu0 0.0
    %2388 = vmatprep.subr.mxu0 0.0
    %2389 = vmatpush1.msra.mxu0 0.0
    %2390 = vmatprep.subr.mxu0 0.0
    %2391 = vmatpush1.msra.mxu0 0.0
    %2392 = vmatprep.subr.mxu0 0.0
    %2393 = vmatpush1.msra.mxu0 0.0
    %2394 = vmatprep.subr.mxu0 0.0
    %2395 = vmatpush1.msra.mxu0 0.0
    %2396 = vmatprep.subr.mxu0 0.0
    %2397 = vmatpush1.msra.mxu0 0.0
    %2398 = vmatprep.subr.mxu0 0.0
    %2399 = vmatpush1.msra.mxu0 0.0
    %2400 = vmatprep.subr.mxu0 0.0
    %2401 = vmatpush1.msra.mxu0 0.0
    %2402 = vmatprep.subr.mxu0 0.0
    %2403 = vmatpush1.msra.mxu0 0.0
    %2404 = vmatprep.subr.mxu0 0.0
    %2405 = vmatpush1.msra.mxu0 0.0
    %2406 = vmatprep.subr.mxu0 0.0
    %2407 = vmatpush1.msra.mxu0 0.0
    %2408 = vmatprep.subr.mxu0 0.0
    %2409 = vmatpush1.msra.mxu0 0.0
    %2410 = vmatprep.subr.mxu0 0.0
    %2411 = vmatpush1.msra.mxu0 0.0
    %2412 = vmatprep.subr.mxu0 0.0
    %2413 = vmatpush1.msra.mxu0 0.0
    %2414 = vmatprep.subr.mxu0 0.0
    %2415 = vmatpush1.msra.mxu0 0.0
    %2416 = vmatprep.subr.mxu0 0.0
    %2417 = vmatpush1.msra.mxu0 0.0
    %2418 = vmatprep.mubr.f32.mxu0 0.0
    %2419 = vmatmul.mubr.f32.gmra.mrb[0].mxu0 %v2352
    %v2420 = vpop.f32.mrb[0].mxu0
    %v2421 = vadd.f32 0.0, %v2420
    %v2422 = vpop.f32.mrb[0].mxu0
    %2423 = vdwg.mxu0
    %v2425 = vsel %vm122, %v1896, 0
    %2427 = vmatprep.subr.mxu0 0.0
    %2428 = vmatpush1.msra.mxu0 %v2056
    %2429 = vmatprep.subr.mxu0 0.0
    %2430 = vmatpush1.msra.mxu0 0.0
    %2431 = vmatprep.subr.mxu0 0.0
    %2432 = vmatpush1.msra.mxu0 0.0
    %2433 = vmatprep.subr.mxu0 0.0
    %2434 = vmatpush1.msra.mxu0 0.0
    %2435 = vmatprep.subr.mxu0 0.0
    %2436 = vmatpush1.msra.mxu0 0.0
    %2437 = vmatprep.subr.mxu0 0.0
    %2438 = vmatpush1.msra.mxu0 0.0
    %2439 = vmatprep.subr.mxu0 0.0
    %2440 = vmatpush1.msra.mxu0 0.0
    %2441 = vmatprep.subr.mxu0 0.0
    %2442 = vmatpush1.msra.mxu0 0.0
    %2443 = vmatprep.subr.mxu0 0.0
    %2444 = vmatpush1.msra.mxu0 0.0
    %2445 = vmatprep.subr.mxu0 0.0
    %2446 = vmatpush1.msra.mxu0 0.0
    %2447 = vmatprep.subr.mxu0 0.0
    %2448 = vmatpush1.msra.mxu0 0.0
    %2449 = vmatprep.subr.mxu0 0.0
    %2450 = vmatpush1.msra.mxu0 0.0
    %2451 = vmatprep.subr.mxu0 0.0
    %2452 = vmatpush1.msra.mxu0 0.0
    %2453 = vmatprep.subr.mxu0 0.0
    %2454 = vmatpush1.msra.mxu0 0.0
    %2455 = vmatprep.subr.mxu0 0.0
    %2456 = vmatpush1.msra.mxu0 0.0
    %2457 = vmatprep.subr.mxu0 0.0
    %2458 = vmatpush1.msra.mxu0 0.0
    %2459 = vmatprep.subr.mxu0 0.0
    %2460 = vmatpush1.msra.mxu0 0.0
    %2461 = vmatprep.subr.mxu0 0.0
    %2462 = vmatpush1.msra.mxu0 0.0
    %2463 = vmatprep.subr.mxu0 0.0
    %2464 = vmatpush1.msra.mxu0 0.0
    %2465 = vmatprep.subr.mxu0 0.0
    %2466 = vmatpush1.msra.mxu0 0.0
    %2467 = vmatprep.subr.mxu0 0.0
    %2468 = vmatpush1.msra.mxu0 0.0
    %2469 = vmatprep.subr.mxu0 0.0
    %2470 = vmatpush1.msra.mxu0 0.0
    %2471 = vmatprep.subr.mxu0 0.0
    %2472 = vmatpush1.msra.mxu0 0.0
    %2473 = vmatprep.subr.mxu0 0.0
    %2474 = vmatpush1.msra.mxu0 0.0
    %2475 = vmatprep.subr.mxu0 0.0
    %2476 = vmatpush1.msra.mxu0 0.0
    %2477 = vmatprep.subr.mxu0 0.0
    %2478 = vmatpush1.msra.mxu0 0.0
    %2479 = vmatprep.subr.mxu0 0.0
    %2480 = vmatpush1.msra.mxu0 0.0
    %2481 = vmatprep.subr.mxu0 0.0
    %2482 = vmatpush1.msra.mxu0 0.0
    %2483 = vmatprep.subr.mxu0 0.0
    %2484 = vmatpush1.msra.mxu0 0.0
    %2485 = vmatprep.subr.mxu0 0.0
    %2486 = vmatpush1.msra.mxu0 0.0
    %2487 = vmatprep.subr.mxu0 0.0
    %2488 = vmatpush1.msra.mxu0 0.0
    %2489 = vmatprep.subr.mxu0 0.0
    %2490 = vmatpush1.msra.mxu0 0.0
    %2491 = vmatprep.mubr.f32.mxu0 0.0
    %2492 = vmatmul.mubr.f32.gmra.mrb[0].mxu0 %v2425
    %v2493 = vpop.f32.mrb[0].mxu0
    %v2494 = vadd.f32 0.0, %v2493
    %v2495 = vpop.f32.mrb[0].mxu0
    %2496 = vdwg.mxu0
    %v2498 = vsel %vm122, %v1972, 0
    %2500 = vmatprep.subr.mxu0 0.0
    %2501 = vmatpush1.msra.mxu0 %v2057
    %2502 = vmatprep.subr.mxu0 0.0
    %2503 = vmatpush1.msra.mxu0 0.0
    %2504 = vmatprep.subr.mxu0 0.0
    %2505 = vmatpush1.msra.mxu0 0.0
    %2506 = vmatprep.subr.mxu0 0.0
    %2507 = vmatpush1.msra.mxu0 0.0
    %2508 = vmatprep.subr.mxu0 0.0
    %2509 = vmatpush1.msra.mxu0 0.0
    %2510 = vmatprep.subr.mxu0 0.0
    %2511 = vmatpush1.msra.mxu0 0.0
    %2512 = vmatprep.subr.mxu0 0.0
    %2513 = vmatpush1.msra.mxu0 0.0
    %2514 = vmatprep.subr.mxu0 0.0
    %2515 = vmatpush1.msra.mxu0 0.0
    %2516 = vmatprep.subr.mxu0 0.0
    %2517 = vmatpush1.msra.mxu0 0.0
    %2518 = vmatprep.subr.mxu0 0.0
    %2519 = vmatpush1.msra.mxu0 0.0
    %2520 = vmatprep.subr.mxu0 0.0
    %2521 = vmatpush1.msra.mxu0 0.0
    %2522 = vmatprep.subr.mxu0 0.0
    %2523 = vmatpush1.msra.mxu0 0.0
    %2524 = vmatprep.subr.mxu0 0.0
    %2525 = vmatpush1.msra.mxu0 0.0
    %2526 = vmatprep.subr.mxu0 0.0
    %2527 = vmatpush1.msra.mxu0 0.0
    %2528 = vmatprep.subr.mxu0 0.0
    %2529 = vmatpush1.msra.mxu0 0.0
    %2530 = vmatprep.subr.mxu0 0.0
    %2531 = vmatpush1.msra.mxu0 0.0
    %2532 = vmatprep.subr.mxu0 0.0
    %2533 = vmatpush1.msra.mxu0 0.0
    %2534 = vmatprep.subr.mxu0 0.0
    %2535 = vmatpush1.msra.mxu0 0.0
    %2536 = vmatprep.subr.mxu0 0.0
    %2537 = vmatpush1.msra.mxu0 0.0
    %2538 = vmatprep.subr.mxu0 0.0
    %2539 = vmatpush1.msra.mxu0 0.0
    %2540 = vmatprep.subr.mxu0 0.0
    %2541 = vmatpush1.msra.mxu0 0.0
    %2542 = vmatprep.subr.mxu0 0.0
    %2543 = vmatpush1.msra.mxu0 0.0
    %2544 = vmatprep.subr.mxu0 0.0
    %2545 = vmatpush1.msra.mxu0 0.0
    %2546 = vmatprep.subr.mxu0 0.0
    %2547 = vmatpush1.msra.mxu0 0.0
    %2548 = vmatprep.subr.mxu0 0.0
    %2549 = vmatpush1.msra.mxu0 0.0
    %2550 = vmatprep.subr.mxu0 0.0
    %2551 = vmatpush1.msra.mxu0 0.0
    %2552 = vmatprep.subr.mxu0 0.0
    %2553 = vmatpush1.msra.mxu0 0.0
    %2554 = vmatprep.subr.mxu0 0.0
    %2555 = vmatpush1.msra.mxu0 0.0
    %2556 = vmatprep.subr.mxu0 0.0
    %2557 = vmatpush1.msra.mxu0 0.0
    %2558 = vmatprep.subr.mxu0 0.0
    %2559 = vmatpush1.msra.mxu0 0.0
    %2560 = vmatprep.subr.mxu0 0.0
    %2561 = vmatpush1.msra.mxu0 0.0
    %2562 = vmatprep.subr.mxu0 0.0
    %2563 = vmatpush1.msra.mxu0 0.0
    %2564 = vmatprep.mubr.f32.mxu0 0.0
    %2565 = vmatmul.mubr.f32.gmra.mrb[0].mxu0 %v2498
    %v2566 = vpop.f32.mrb[0].mxu0
    %v2567 = vadd.f32 0.0, %v2566
    %v2568 = vpop.f32.mrb[0].mxu0
    %2569 = vdwg.mxu0
    %v2571 = vsel %vm122, %v2048, 0
    %2573 = vmatprep.subr.mxu0 0.0
    %2574 = vmatpush1.msra.mxu0 %v2058
    %2575 = vmatprep.subr.mxu0 0.0
    %2576 = vmatpush1.msra.mxu0 0.0
    %2577 = vmatprep.subr.mxu0 0.0
    %2578 = vmatpush1.msra.mxu0 0.0
    %2579 = vmatprep.subr.mxu0 0.0
    %2580 = vmatpush1.msra.mxu0 0.0
    %2581 = vmatprep.subr.mxu0 0.0
    %2582 = vmatpush1.msra.mxu0 0.0
    %2583 = vmatprep.subr.mxu0 0.0
    %2584 = vmatpush1.msra.mxu0 0.0
    %2585 = vmatprep.subr.mxu0 0.0
    %2586 = vmatpush1.msra.mxu0 0.0
    %2587 = vmatprep.subr.mxu0 0.0
    %2588 = vmatpush1.msra.mxu0 0.0
    %2589 = vmatprep.subr.mxu0 0.0
    %2590 = vmatpush1.msra.mxu0 0.0
    %2591 = vmatprep.subr.mxu0 0.0
    %2592 = vmatpush1.msra.mxu0 0.0
    %2593 = vmatprep.subr.mxu0 0.0
    %2594 = vmatpush1.msra.mxu0 0.0
    %2595 = vmatprep.subr.mxu0 0.0
    %2596 = vmatpush1.msra.mxu0 0.0
    %2597 = vmatprep.subr.mxu0 0.0
    %2598 = vmatpush1.msra.mxu0 0.0
    %2599 = vmatprep.subr.mxu0 0.0
    %2600 = vmatpush1.msra.mxu0 0.0
    %2601 = vmatprep.subr.mxu0 0.0
    %2602 = vmatpush1.msra.mxu0 0.0
    %2603 = vmatprep.subr.mxu0 0.0
    %2604 = vmatpush1.msra.mxu0 0.0
    %2605 = vmatprep.subr.mxu0 0.0
    %2606 = vmatpush1.msra.mxu0 0.0
    %2607 = vmatprep.subr.mxu0 0.0
    %2608 = vmatpush1.msra.mxu0 0.0
    %2609 = vmatprep.subr.mxu0 0.0
    %2610 = vmatpush1.msra.mxu0 0.0
    %2611 = vmatprep.subr.mxu0 0.0
    %2612 = vmatpush1.msra.mxu0 0.0
    %2613 = vmatprep.subr.mxu0 0.0
    %2614 = vmatpush1.msra.mxu0 0.0
    %2615 = vmatprep.subr.mxu0 0.0
    %2616 = vmatpush1.msra.mxu0 0.0
    %2617 = vmatprep.subr.mxu0 0.0
    %2618 = vmatpush1.msra.mxu0 0.0
    %2619 = vmatprep.subr.mxu0 0.0
    %2620 = vmatpush1.msra.mxu0 0.0
    %2621 = vmatprep.subr.mxu0 0.0
    %2622 = vmatpush1.msra.mxu0 0.0
    %2623 = vmatprep.subr.mxu0 0.0
    %2624 = vmatpush1.msra.mxu0 0.0
    %2625 = vmatprep.subr.mxu0 0.0
    %2626 = vmatpush1.msra.mxu0 0.0
    %2627 = vmatprep.subr.mxu0 0.0
    %2628 = vmatpush1.msra.mxu0 0.0
    %2629 = vmatprep.subr.mxu0 0.0
    %2630 = vmatpush1.msra.mxu0 0.0
    %2631 = vmatprep.subr.mxu0 0.0
    %2632 = vmatpush1.msra.mxu0 0.0
    %2633 = vmatprep.subr.mxu0 0.0
    %2634 = vmatpush1.msra.mxu0 0.0
    %2635 = vmatprep.subr.mxu0 0.0
    %2636 = vmatpush1.msra.mxu0 0.0
    %2637 = vmatprep.mubr.f32.mxu0 0.0
    %2638 = vmatmul.mubr.f32.gmra.mrb[0].mxu0 %v2571
    %v2639 = vpop.f32.mrb[0].mxu0
    %v2640 = vadd.f32 0.0, %v2639
    %v2641 = vpop.f32.mrb[0].mxu0
    %2642 = vdwg.mxu0
    %v2643 = vadd.f32 %v2129, %v2202
    %v2644 = vadd.f32 %v2643, %v2275
    %v2645 = vadd.f32 %v2644, %v2348
    %v2646 = vadd.f32 %v2421, %v2494
    %v2647 = vadd.f32 %v2646, %v2567
    %v2648 = vadd.f32 %v2647, %v2640
    %v2649 = vld [vmem:[%s5] sm:$0x1]
    %v2651 = vlaneseq
    %v2652 = vshrl.u32 %v2651, 7
    %v2653 = vsub.s32 0, %v2652
    %v2654 = vrot.slane %v2649, %v2653
    %v2656 = vadd.f32 %v2645, %v2654
    %v2657 = vadd.f32 %v2648, %v2654
    %v2658 = vadd.f32 %v2656, %v56
    %v2659 = vadd.f32 %v2657, %v57
    %vm2660 = vcmask 261120
    %v2661 = vsel %vm2660, %v2658, 0.0
    %2662 = vadd.xlane.f32.xlu0 %v2661
    %v2663 = vpop.xlane.xlu0 %2662
    %v2664 = vsel %vm2660, %v2659, 0.0
    %2665 = vadd.xlane.f32.xlu0 %v2664
    %v2666 = vpop.xlane.xlu0 %2665
    %v2667 = vrcp.pop 32.0
    %v2668 = vmul.f32 %v2663, %v2667
    %v2669 = vmul.f32 %v2666, %v2667
    %v2670 = vsub.f32 %v2658, %v2668
    %v2671 = vsub.f32 %v2659, %v2669
    %v2672 = vmul.f32 %v2670, %v2670
    %v2673 = vmul.f32 %v2671, %v2671
    %v2674 = vsel %vm2660, %v2672, 0.0
    %2675 = vadd.xlane.f32.xlu0 %v2674
    %v2676 = vpop.xlane.xlu0 %2675
    %v2677 = vsel %vm2660, %v2673, 0.0
    %2678 = vadd.xlane.f32.xlu0 %v2677
    %v2679 = vpop.xlane.xlu0 %2678
    %v2680 = vmul.f32 %v2676, %v2667
    %v2681 = vmul.f32 %v2679, %v2667
    %v2682 = vadd.f32 %v2680, 1e-05
    %v2683 = vadd.f32 %v2681, 1e-05
    %v2684 = vrsqrt.pop %v2682
    %v2685 = vrsqrt.pop %v2683
    %v2686 = vmul.f32 %v2682, 0.5
    %v2687 = vmul.f32 %v2683, 0.5
    %v2688 = vmul.f32 %v2686, %v2684
    %v2689 = vmul.f32 %v2687, %v2685
    %v2690 = vmul.f32 %v2688, %v2684
    %v2691 = vmul.f32 %v2689, %v2685
    %v2692 = vsub.f32 1.5, %v2690
    %v2693 = vsub.f32 1.5, %v2691
    %v2694 = vmul.f32 %v2684, %v2692
    %v2695 = vmul.f32 %v2685, %v2693
    %v2696 = vld [vmem:[%s6] sm:$0x1]
    %v2697 = vmul.f32 %v2670, %v2694
    %v2698 = vmul.f32 %v2671, %v2695
    %v2700 = vlaneseq
    %v2701 = vshrl.u32 %v2700, 7
    %v2702 = vsub.s32 0, %v2701
    %v2703 = vrot.slane %v2696, %v2702
    %v2705 = vmul.f32 %v2703, %v2697
    %v2706 = vmul.f32 %v2703, %v2698
    %v2707 = vld [vmem:[%s7] sm:$0x1]
    %v2709 = vlaneseq
    %v2710 = vshrl.u32 %v2709, 7
    %v2711 = vsub.s32 0, %v2710
    %v2712 = vrot.slane %v2707, %v2711
    %v2714 = vadd.f32 %v2705, %v2712
    %v2715 = vadd.f32 %v2706, %v2712
    %v2716 = vld [vmem:[%s8] sm:$0xff]
    %v2717 = vld [vmem:[%s8 + $0x8] sm:$0xff]
    %v2718 = vld [vmem:[%s8 + $0x10] sm:$0xff]
    %v2719 = vld [vmem:[%s8 + $0x18] sm:$0xff]
    %v2720 = vld [vmem:[%s9] sm:$0x1]
    %v2722 = vlaneseq
    %v2723 = vshrl.u32 %v2722, 7
    %v2724 = vsub.s32 0, %v2723
    %v2725 = vrot.slane %v2720, %v2724
    %v2728 = vsel %vm2660, %v2714, 0
    %v2731 = vsel %vm2660, %v2715, 0
    %2733 = vmatprep.subr.mxu0 0.0
    %2734 = vmatpush1.msra.mxu0 %v2716
    %2735 = vmatprep.subr.mxu0 0.0
    %2736 = vmatpush1.msra.mxu0 %v2717
    %2737 = vmatprep.subr.mxu0 0.0
    %2738 = vmatpush1.msra.mxu0 %v2718
    %2739 = vmatprep.subr.mxu0 0.0
    %2740 = vmatpush1.msra.mxu0 %v2719
    %2741 = vmatprep.subr.mxu0 0.0
    %2742 = vmatpush1.msra.mxu0 0.0
    %2743 = vmatprep.subr.mxu0 0.0
    %2744 = vmatpush1.msra.mxu0 0.0
    %2745 = vmatprep.subr.mxu0 0.0
    %2746 = vmatpush1.msra.mxu0 0.0
    %2747 = vmatprep.subr.mxu0 0.0
    %2748 = vmatpush1.msra.mxu0 0.0
    %2749 = vmatprep.subr.mxu0 0.0
    %2750 = vmatpush1.msra.mxu0 0.0
    %2751 = vmatprep.subr.mxu0 0.0
    %2752 = vmatpush1.msra.mxu0 0.0
    %2753 = vmatprep.subr.mxu0 0.0
    %2754 = vmatpush1.msra.mxu0 0.0
    %2755 = vmatprep.subr.mxu0 0.0
    %2756 = vmatpush1.msra.mxu0 0.0
    %2757 = vmatprep.subr.mxu0 0.0
    %2758 = vmatpush1.msra.mxu0 0.0
    %2759 = vmatprep.subr.mxu0 0.0
    %2760 = vmatpush1.msra.mxu0 0.0
    %2761 = vmatprep.subr.mxu0 0.0
    %2762 = vmatpush1.msra.mxu0 0.0
    %2763 = vmatprep.subr.mxu0 0.0
    %2764 = vmatpush1.msra.mxu0 0.0
    %2765 = vmatprep.subr.mxu0 0.0
    %2766 = vmatpush1.msra.mxu0 0.0
    %2767 = vmatprep.subr.mxu0 0.0
    %2768 = vmatpush1.msra.mxu0 0.0
    %2769 = vmatprep.subr.mxu0 0.0
    %2770 = vmatpush1.msra.mxu0 0.0
    %2771 = vmatprep.subr.mxu0 0.0
    %2772 = vmatpush1.msra.mxu0 0.0
    %2773 = vmatprep.subr.mxu0 0.0
    %2774 = vmatpush1.msra.mxu0 0.0
    %2775 = vmatprep.subr.mxu0 0.0
    %2776 = vmatpush1.msra.mxu0 0.0
    %2777 = vmatprep.subr.mxu0 0.0
    %2778 = vmatpush1.msra.mxu0 0.0
    %2779 = vmatprep.subr.mxu0 0.0
    %2780 = vmatpush1.msra.mxu0 0.0
    %2781 = vmatprep.subr.mxu0 0.0
    %2782 = vmatpush1.msra.mxu0 0.0
    %2783 = vmatprep.subr.mxu0 0.0
    %2784 = vmatpush1.msra.mxu0 0.0
    %2785 = vmatprep.subr.mxu0 0.0
    %2786 = vmatpush1.msra.mxu0 0.0
    %2787 = vmatprep.subr.mxu0 0.0
    %2788 = vmatpush1.msra.mxu0 0.0
    %2789 = vmatprep.subr.mxu0 0.0
    %2790 = vmatpush1.msra.mxu0 0.0
    %2791 = vmatprep.subr.mxu0 0.0
    %2792 = vmatpush1.msra.mxu0 0.0
    %2793 = vmatprep.subr.mxu0 0.0
    %2794 = vmatpush1.msra.mxu0 0.0
    %2795 = vmatprep.subr.mxu0 0.0
    %2796 = vmatpush1.msra.mxu0 0.0
    %2797 = vmatprep.mubr.f32.mxu0 0.0
    %2798 = vmatmul.mubr.f32.gmra.mrb[0].mxu0 %v2728
    %v2799 = vpop.f32.mrb[0].mxu0
    %v2800 = vadd.f32 %v2725, %v2799
    %v2801 = vpop.f32.mrb[0].mxu0
    %2802 = vmatprep.mubr.f32.mxu0 0.0
    %2803 = vmatmul.mubr.f32.gmra.mrb[0].mxu0 %v2731
    %v2804 = vpop.f32.mrb[0].mxu0
    %v2805 = vadd.f32 %v2725, %v2804
    %v2806 = vpop.f32.mrb[0].mxu0
    %2807 = vdwg.mxu0
    %v2808 = vmax.f32 %v2800, 0.0
    %v2809 = vmax.f32 %v2805, 0.0
    %v2810 = vld [vmem:[%s10] sm:$0xff]
    %v2811 = vld [vmem:[%s10 + $0x8] sm:$0xff]
    %v2812 = vld [vmem:[%s10 + $0x10] sm:$0xff]
    %v2813 = vld [vmem:[%s10 + $0x18] sm:$0xff]
    %v2814 = vld [vmem:[%s10 + $0x20] sm:$0xff]
    %v2815 = vld [vmem:[%s10 + $0x28] sm:$0xff]
    %v2816 = vld [vmem:[%s10 + $0x30] sm:$0xff]
    %v2817 = vld [vmem:[%s10 + $0x38] sm:$0xff]
    %v2818 = vld [vmem:[%s11] sm:$0x1]
    %v2820 = vlaneseq
    %v2821 = vshrl.u32 %v2820, 7
    %v2822 = vsub.s32 0, %v2821
    %v2823 = vrot.slane %v2818, %v2822
    %vm2825 = vcmask 523264
    %v2827 = vsel %vm2825, %v2808, 0
    %v2830 = vsel %vm2825, %v2809, 0
    %2832 = vmatprep.subr.mxu0 0.0
    %2833 = vmatpush1.msra.mxu0 %v2810
    %2834 = vmatprep.subr.mxu0 0.0
    %2835 = vmatpush1.msra.mxu0 %v2811
    %2836 = vmatprep.subr.mxu0 0.0
    %2837 = vmatpush1.msra.mxu0 %v2812
    %2838 = vmatprep.subr.mxu0 0.0
    %2839 = vmatpush1.msra.mxu0 %v2813
    %2840 = vmatprep.subr.mxu0 0.0
    %2841 = vmatpush1.msra.mxu0 %v2814
    %2842 = vmatprep.subr.mxu0 0.0
    %2843 = vmatpush1.msra.mxu0 %v2815
    %2844 = vmatprep.subr.mxu0 0.0
    %2845 = vmatpush1.msra.mxu0 %v2816
    %2846 = vmatprep.subr.mxu0 0.0
    %2847 = vmatpush1.msra.mxu0 %v2817
    %2848 = vmatprep.subr.mxu0 0.0
    %2849 = vmatpush1.msra.mxu0 0.0
    %2850 = vmatprep.subr.mxu0 0.0
    %2851 = vmatpush1.msra.mxu0 0.0
    %2852 = vmatprep.subr.mxu0 0.0
    %2853 = vmatpush1.msra.mxu0 0.0
    %2854 = vmatprep.subr.mxu0 0.0
    %2855 = vmatpush1.msra.mxu0 0.0
    %2856 = vmatprep.subr.mxu0 0.0
    %2857 = vmatpush1.msra.mxu0 0.0
    %2858 = vmatprep.subr.mxu0 0.0
    %2859 = vmatpush1.msra.mxu0 0.0
    %2860 = vmatprep.subr.mxu0 0.0
    %2861 = vmatpush1.msra.mxu0 0.0
    %2862 = vmatprep.subr.mxu0 0.0
    %2863 = vmatpush1.msra.mxu0 0.0
    %2864 = vmatprep.subr.mxu0 0.0
    %2865 = vmatpush1.msra.mxu0 0.0
    %2866 = vmatprep.subr.mxu0 0.0
    %2867 = vmatpush1.msra.mxu0 0.0
    %2868 = vmatprep.subr.mxu0 0.0
    %2869 = vmatpush1.msra.mxu0 0.0
    %2870 = vmatprep.subr.mxu0 0.0
    %2871 = vmatpush1.msra.mxu0 0.0
    %2872 = vmatprep.subr.mxu0 0.0
    %2873 = vmatpush1.msra.mxu0 0.0
    %2874 = vmatprep.subr.mxu0 0.0
    %2875 = vmatpush1.msra.mxu0 0.0
    %2876 = vmatprep.subr.mxu0 0.0
    %2877 = vmatpush1.msra.mxu0 0.0
    %2878 = vmatprep.subr.mxu0 0.0
    %2879 = vmatpush1.msra.mxu0 0.0
    %2880 = vmatprep.subr.mxu0 0.0
    %2881 = vmatpush1.msra.mxu0 0.0
    %2882 = vmatprep.subr.mxu0 0.0
    %2883 = vmatpush1.msra.mxu0 0.0
    %2884 = vmatprep.subr.mxu0 0.0
    %2885 = vmatpush1.msra.mxu0 0.0
    %2886 = vmatprep.subr.mxu0 0.0
    %2887 = vmatpush1.msra.mxu0 0.0
    %2888 = vmatprep.subr.mxu0 0.0
    %2889 = vmatpush1.msra.mxu0 0.0
    %2890 = vmatprep.subr.mxu0 0.0
    %2891 = vmatpush1.msra.mxu0 0.0
    %2892 = vmatprep.subr.mxu0 0.0
    %2893 = vmatpush1.msra.mxu0 0.0
    %2894 = vmatprep.subr.mxu0 0.0
    %2895 = vmatpush1.msra.mxu0 0.0
    %2896 = vmatprep.mubr.f32.mxu0 0.0
    %2897 = vmatmul.mubr.f32.gmra.mrb[0].mxu0 %v2827
    %v2898 = vpop.f32.mrb[0].mxu0
    %v2899 = vadd.f32 %v2823, %v2898
    %v2900 = vpop.f32.mrb[0].mxu0
    %2901 = vmatprep.mubr.f32.mxu0 0.0
    %2902 = vmatmul.mubr.f32.gmra.mrb[0].mxu0 %v2830
    %v2903 = vpop.f32.mrb[0].mxu0
    %v2904 = vadd.f32 %v2823, %v2903
    %v2905 = vpop.f32.mrb[0].mxu0
    %2906 = vdwg.mxu0
    %v2907 = vadd.f32 %v2899, %v2714
    %v2908 = vadd.f32 %v2904, %v2715
    %v2909 = vsel %vm2660, %v2907, 0.0
    %2910 = vadd.xlane.f32.xlu0 %v2909
    %v2911 = vpop.xlane.xlu0 %2910
    %v2912 = vsel %vm2660, %v2908, 0.0
    %2913 = vadd.xlane.f32.xlu0 %v2912
    %v2914 = vpop.xlane.xlu0 %2913
    %v2915 = vmul.f32 %v2911, %v2667
    %v2916 = vmul.f32 %v2914, %v2667
    %v2917 = vsub.f32 %v2907, %v2915
    %v2918 = vsub.f32 %v2908, %v2916
    %v2919 = vmul.f32 %v2917, %v2917
    %v2920 = vmul.f32 %v2918, %v2918
    %v2921 = vsel %vm2660, %v2919, 0.0
    %2922 = vadd.xlane.f32.xlu0 %v2921
    %v2923 = vpop.xlane.xlu0 %2922
    %v2924 = vsel %vm2660, %v2920, 0.0
    %2925 = vadd.xlane.f32.xlu0 %v2924
    %v2926 = vpop.xlane.xlu0 %2925
    %v2927 = vmul.f32 %v2923, %v2667
    %v2928 = vmul.f32 %v2926, %v2667
    %v2929 = vadd.f32 %v2927, 1e-05
    %v2930 = vadd.f32 %v2928, 1e-05
    %v2931 = vrsqrt.pop %v2929
    %v2932 = vrsqrt.pop %v2930
    %v2933 = vmul.f32 %v2929, 0.5
    %v2934 = vmul.f32 %v2930, 0.5
    %v2935 = vmul.f32 %v2933, %v2931
    %v2936 = vmul.f32 %v2934, %v2932
    %v2937 = vmul.f32 %v2935, %v2931
    %v2938 = vmul.f32 %v2936, %v2932
    %v2939 = vsub.f32 1.5, %v2937
    %v2940 = vsub.f32 1.5, %v2938
    %v2941 = vmul.f32 %v2931, %v2939
    %v2942 = vmul.f32 %v2932, %v2940
    %v2943 = vld [vmem:[%s12] sm:$0x1]
    %v2944 = vmul.f32 %v2917, %v2941
    %v2945 = vmul.f32 %v2918, %v2942
    %v2947 = vlaneseq
    %v2948 = vshrl.u32 %v2947, 7
    %v2949 = vsub.s32 0, %v2948
    %v2950 = vrot.slane %v2943, %v2949
    %v2952 = vmul.f32 %v2950, %v2944
    %v2953 = vmul.f32 %v2950, %v2945
    %v2954 = vld [vmem:[%s13] sm:$0x1]
    %v2956 = vlaneseq
    %v2957 = vshrl.u32 %v2956, 7
    %v2958 = vsub.s32 0, %v2957
    %v2959 = vrot.slane %v2954, %v2958
    %v2961 = vadd.f32 %v2952, %v2959
    %v2962 = vadd.f32 %v2953, %v2959
    %2963 = vst.msk [vmem:[#allocation2] sm:$0xff] %vm2660, %v2961
    %2964 = vst.msk [vmem:[#allocation2 + $0x8] sm:$0xff] %vm2660, %v2962
    // Predicated region
    $region58: #{encoder_layer.1} parent=1 // pred_check
      _
    $region59: #{encoder_layer.1} parent=1 // pred_check_branch
      %2966 = sbr.rel (0) target = $region61
    $region60: #{encoder_layer.1} parent=1 // pred_region
      %s2968 = ssub.s32 256, 256
      %2969 = vsyncadd [#allocation3], %s2968
      %s2970 = sshll.u32 [#allocation2], 4
      %s2971 = int_to_ptr.vmem [resolvable:$true] %s2970
      %2976 = dma.vmem_to_hbm [thread:$0]  %s2971, 256, %s14, [#allocation3], 128, 128, 8
    $region61: #{encoder_layer.1} parent=1 // pred_fallthru
      _
    // Predicated region
    $region62: #{encoder_layer.1} parent=1 // pred_check
      _
    $region63: #{encoder_layer.1} parent=1 // pred_check_branch
      %2978 = sbr.rel (0) target = $region65
    $region64: #{encoder_layer.1} parent=1 // pred_region
      %2979 = dma.done [#allocation3], 256
    $region65: #{encoder_layer.1} parent=1 // pred_fallthru
      _
    %2980 = vsyncpa [#allocation3], 1

</llo_original>
